<compile_context>
chip_gen: v6e
topology: v6e:2x2x1
jax: 0.10.0
libtpu: 0.0.40
codegen_flags: <defaults>
</compile_context>

<pallas_src>
import jax
import jax.numpy as jnp
from jax import lax
from jax.experimental import pallas as pl
from jax.experimental.pallas import tpu as pltpu


# ----------------------------------------------------------------------------
# helpers
# ----------------------------------------------------------------------------
def _round_up(x, m):
    return (x + m - 1) // m * m


def _pad_axis(a, axis, new_size):
    pad = [(0, 0)] * a.ndim
    axis = axis % a.ndim
    pad[axis] = (0, new_size - a.shape[axis])
    return jnp.pad(a, pad)


def _pad_gate_cols(w, H, Hp):
    """Zero-pad each of the 4 gate blocks (i,f,g,o) from width H to Hp."""
    parts = [_pad_axis(w[..., g * H:(g + 1) * H], -1, Hp) for g in range(4)]
    return jnp.concatenate(parts, axis=-1)


def _pick_block_batch(B):
    """Largest small batch tile that still leaves >=2 grid steps (megacore)."""
    for tb in (8, 4, 2):
        if B % tb == 0 and B // tb >= 2:
            return tb
    return 1


# ----------------------------------------------------------------------------
# fused kernel: conv+relu+pool -> L x LSTM -> masked select -> fc -> sigmoid
# ----------------------------------------------------------------------------
def _make_fused_kernel(L, TB, Sc, T, E3, Fp, Hp, unroll):
    def kernel(x_ref, m_ref, wc_ref, bc_ref, *rest):
        lstm_refs = rest[:3 * L]
        wfc_ref, bfc_ref, out_ref, xw_ref, hseq_ref = rest[3 * L:]

        # ---- Conv1d(k=3, 'same') as one im2col matmul + ReLU + MaxPool1d(2)
        xk = x_ref[...].reshape(TB * Sc, E3)                      # bf16
        y = jnp.dot(xk, wc_ref[...], preferred_element_type=jnp.float32)
        y = jnp.maximum(y + bc_ref[...], 0.0)                     # (TB*Sc, Fp)
        y = y.reshape(TB, T, 2, Fp)
        seq = jnp.maximum(y[:, :, 0, :], y[:, :, 1, :])           # (TB, T, Fp)

        # ---- stacked LSTM layers (PyTorch gate order i, f, g, o) ----------
        for l in range(L):
            wih_ref, whh_ref, b_ref = lstm_refs[3 * l:3 * l + 3]
            if l == 0:
                xin = seq.reshape(TB * T, Fp)
            else:
                xin = hseq_ref[...].reshape(TB * T, Hp)
            # input projection for all timesteps at once (big MXU matmul)
            xw = jnp.dot(xin.astype(jnp.bfloat16), wih_ref[...],
                         preferred_element_type=jnp.float32) + b_ref[...]
            xw_ref[...] = xw.reshape(TB, T, 4 * Hp)

            def step(t, carry, _whh_ref=whh_ref):
                h, c = carry
                g = xw_ref[:, pl.ds(t, 1), :].reshape(TB, 4 * Hp) + jnp.dot(
                    h.astype(jnp.bfloat16), _whh_ref[...],
                    preferred_element_type=jnp.float32)
                i = jax.nn.sigmoid(g[:, 0:Hp])
                f = jax.nn.sigmoid(g[:, Hp:2 * Hp])
                gg = jnp.tanh(g[:, 2 * Hp:3 * Hp])
                o = jax.nn.sigmoid(g[:, 3 * Hp:4 * Hp])
                c_new = f * c + i * gg
                h_new = o * jnp.tanh(c_new)
                hseq_ref[:, pl.ds(t, 1), :] = h_new[:, None, :]   # lane-dense
                return (h_new, c_new)

            h0 = jnp.zeros((TB, Hp), jnp.float32)
            c0 = jnp.zeros((TB, Hp), jnp.float32)
            lax.fori_loop(0, T, step, (h0, c0), unroll=unroll)

        # ---- head: pooled mask, last-valid-timestep select, Linear, Sigmoid
        m = m_ref[...].reshape(TB, T)                              # pooled mask
        seq_len = jnp.sum(m, axis=1, keepdims=True)                # (TB, 1)
        idx = seq_len.astype(jnp.int32) - 1
        tio = lax.broadcasted_iota(jnp.int32, (TB, T), 1)
        sel = (tio == idx).astype(jnp.float32) * m                 # one-hot*mask
        last = jnp.sum(hseq_ref[...] * sel[:, :, None], axis=1)    # (TB, Hp)
        logits = jnp.dot(last.astype(jnp.bfloat16), wfc_ref[...],
                         preferred_element_type=jnp.float32) + bfc_ref[...]
        out_ref[...] = jax.nn.sigmoid(logits)[:, None, :]          # (TB, 1, 2)

    return kernel


# ----------------------------------------------------------------------------
# wrapper
# ----------------------------------------------------------------------------
def sentiment_cnn_lstm_forward(x, mask, params):
    """x: (B, S, E) float32, mask: (B, S) float32 -> (B, 2) float32."""
    B, S, E = x.shape
    assert S >= 2
    T = S // 2                     # MaxPool1d(2) floors odd S (matches torch)
    Sc = 2 * T
    F = params["w_conv"].shape[2]
    H = params["lstm"][0][1].shape[0]
    L = len(params["lstm"])
    Fp = _round_up(F, 128)
    Hp = _round_up(H, 128)
    E3 = 3 * E

    # --- im2col slab for the width-3 'same' conv (pure layout glue) --------
    xpad = jnp.pad(x, ((0, 0), (1, 1), (0, 0)))                    # (B, S+2, E)
    x_im2col = jnp.concatenate(
        [xpad[:, 0:Sc, :], xpad[:, 1:Sc + 1, :], xpad[:, 2:Sc + 2, :]],
        axis=-1).astype(jnp.bfloat16)                              # (B, Sc, 3E)

    # --- MaxPool1d(2) on the mask (layout glue) -----------------------------
    m_pool = jnp.maximum(mask[:, 0:Sc:2], mask[:, 1:Sc:2])         # (B, T)
    m_pool = m_pool[:, None, :].astype(jnp.float32)                # (B, 1, T)

    # --- pad weights to lane-dense (128) layouts, cast matmul weights bf16 --
    wc = _pad_axis(params["w_conv"], -1, Fp).reshape(E3, Fp).astype(jnp.bfloat16)
    bc = _pad_axis(params["b_conv"], -1, Fp).astype(jnp.float32)

    lstm_flat = []
    for l, (wih, whh, b) in enumerate(params["lstm"]):
        cin_p = Fp if l == 0 else Hp
        wih_p = _pad_gate_cols(_pad_axis(wih, 0, cin_p), H, Hp).astype(jnp.bfloat16)
        whh_p = _pad_gate_cols(_pad_axis(whh, 0, Hp), H, Hp).astype(jnp.bfloat16)
        b_p = _pad_gate_cols(b, H, Hp).astype(jnp.float32)
        lstm_flat += [wih_p, whh_p, b_p]

    wfc = _pad_axis(params["w_fc"], 0, Hp).astype(jnp.bfloat16)
    bfc = params["b_fc"].astype(jnp.float32)

    # --- grid over batch (parallel -> megacore on v7x) ----------------------
    TB = _pick_block_batch(B)
    grid = (B // TB,)
    unroll = T if T <= 8 else 8

    kernel = _make_fused_kernel(L, TB, Sc, T, E3, Fp, Hp, unroll)

    w_args = [wc, bc] + lstm_flat + [wfc, bfc]
    w_specs = [pl.BlockSpec(w.shape, lambda b: (0, 0)) for w in w_args]

    out = pl.pallas_call(
        kernel,
        out_shape=jax.ShapeDtypeStruct((B, 1, 2), jnp.float32),
        grid=grid,
        in_specs=[pl.BlockSpec((TB, Sc, E3), lambda b: (b, 0, 0)),
                  pl.BlockSpec((TB, 1, T), lambda b: (b, 0, 0))] + w_specs,
        out_specs=pl.BlockSpec((TB, 1, 2), lambda b: (b, 0, 0)),
        scratch_shapes=[pltpu.VMEM((TB, T, 4 * Hp), jnp.float32),   # xw
                        pltpu.VMEM((TB, T, Hp), jnp.float32)],      # h sequence
        compiler_params=pltpu.CompilerParams(
            dimension_semantics=("parallel",),
            vmem_limit_bytes=32 * 1024 * 1024),
    )(x_im2col, m_pool, *w_args)

    return out[:, 0, :]


def init_params(key, word_embedding_size, num_filters, hidden_size, num_layer):
    keys = jax.random.split(key, 4 + 3 * num_layer)
    scale = 0.1
    params = {
        # conv weight stored pre-transposed as (kernel, in, out); matches
        # torch Conv1d weight (out, in, kernel) permuted to (kernel, in, out).
        "w_conv": scale * jax.random.normal(
            keys[0], (3, word_embedding_size, num_filters), jnp.float32),
        "b_conv": scale * jax.random.normal(keys[1], (1, num_filters), jnp.float32),
        "w_fc": scale * jax.random.normal(keys[2], (hidden_size, 2), jnp.float32),
        "b_fc": scale * jax.random.normal(keys[3], (1, 2), jnp.float32),
        "lstm": [],
    }
    for layer in range(num_layer):
        in_size = num_filters if layer == 0 else hidden_size
        k0, k1, k2 = keys[4 + 3 * layer: 7 + 3 * layer]
        wih_t = scale * jax.random.normal(k0, (in_size, 4 * hidden_size), jnp.float32)
        whh_t = scale * jax.random.normal(k1, (hidden_size, 4 * hidden_size), jnp.float32)
        # combined bias (b_ih + b_hh), gate order (i, f, g, o)
        b = scale * jax.random.normal(k2, (1, 4 * hidden_size), jnp.float32)
        params["lstm"].append((wih_t, whh_t, b))
    return params


if __name__ == "__main__":
    B, S, E = 2, 8, 16          # batch, seq_len, word_embedding_size
    F, H, L = 32, 32, 2         # num_filters, hidden_size, num_layer

    key = jax.random.PRNGKey(0)
    k_param, k_x = jax.random.split(key)
    params = init_params(k_param, E, F, H, L)

    x = jax.random.normal(k_x, (B, S, E), jnp.float32)
    lengths = jnp.array([5, 8], jnp.int32)
    mask = (jnp.arange(S)[None, :] < lengths[:, None]).astype(jnp.float32)

    fwd = jax.jit(sentiment_cnn_lstm_forward)
    out = jax.block_until_ready(fwd(x, mask, params))

    assert out.shape == (B, 2)
    assert bool(jnp.all(jnp.isfinite(out)))
    assert bool(jnp.all((out >= 0.0) & (out <= 1.0)))  # sigmoid range
    print("KERNEL_OK")
</pallas_src>

<mosaic_0001>
module attributes {stable_mosaic.version = 11 : i64} {
  func.func @kernel(%arg0: i32, %arg1: memref<1x8x48xbf16, #tpu.memory_space<vmem>>, %arg2: memref<1x1x4xf32, #tpu.memory_space<vmem>>, %arg3: memref<48x128xbf16, #tpu.memory_space<vmem>>, %arg4: memref<1x128xf32, #tpu.memory_space<vmem>>, %arg5: memref<128x512xbf16, #tpu.memory_space<vmem>>, %arg6: memref<128x512xbf16, #tpu.memory_space<vmem>>, %arg7: memref<1x512xf32, #tpu.memory_space<vmem>>, %arg8: memref<128x512xbf16, #tpu.memory_space<vmem>>, %arg9: memref<128x512xbf16, #tpu.memory_space<vmem>>, %arg10: memref<1x512xf32, #tpu.memory_space<vmem>>, %arg11: memref<128x2xbf16, #tpu.memory_space<vmem>>, %arg12: memref<1x2xf32, #tpu.memory_space<vmem>>, %arg13: memref<1x1x2xf32, #tpu.memory_space<vmem>>, %arg14: memref<1x4x512xf32, #tpu.memory_space<vmem>>, %arg15: memref<1x4x128xf32, #tpu.memory_space<vmem>>) attributes {dimension_semantics = [#tpu.dimension_semantics<parallel>], iteration_bounds = array<i64: 2>, scalar_prefetch = 0 : i64, scratch_operands = 2 : i64, tpu.core_type = #tpu.core_type<tc>, window_params = [{transform_indices = @transform_0, window_bounds = array<i64: 1, 8, 48>}, {transform_indices = @transform_1, window_bounds = array<i64: 1, 1, 4>}, {pipeline_mode = #tpu.pipeline_mode<synchronous>, transform_indices = @transform_2, window_bounds = array<i64: 48, 128>}, {pipeline_mode = #tpu.pipeline_mode<synchronous>, transform_indices = @transform_3, window_bounds = array<i64: 1, 128>}, {pipeline_mode = #tpu.pipeline_mode<synchronous>, transform_indices = @transform_4, window_bounds = array<i64: 128, 512>}, {pipeline_mode = #tpu.pipeline_mode<synchronous>, transform_indices = @transform_5, window_bounds = array<i64: 128, 512>}, {pipeline_mode = #tpu.pipeline_mode<synchronous>, transform_indices = @transform_6, window_bounds = array<i64: 1, 512>}, {pipeline_mode = #tpu.pipeline_mode<synchronous>, transform_indices = @transform_7, window_bounds = array<i64: 128, 512>}, {pipeline_mode = #tpu.pipeline_mode<synchronous>, transform_indices = @transform_8, window_bounds = array<i64: 128, 512>}, {pipeline_mode = #tpu.pipeline_mode<synchronous>, transform_indices = @transform_9, window_bounds = array<i64: 1, 512>}, {pipeline_mode = #tpu.pipeline_mode<synchronous>, transform_indices = @transform_10, window_bounds = array<i64: 128, 2>}, {pipeline_mode = #tpu.pipeline_mode<synchronous>, transform_indices = @transform_11, window_bounds = array<i64: 1, 2>}, {transform_indices = @transform_12, window_bounds = array<i64: 1, 1, 2>}]} {
    %c0 = arith.constant 0 : index
    %c0_0 = arith.constant 0 : index
    %c0_1 = arith.constant 0 : index
    %0 = vector.load %arg1[%c0, %c0_0, %c0_1] : memref<1x8x48xbf16, #tpu.memory_space<vmem>>, vector<1x8x48xbf16>
    %1 = vector.shape_cast %0 : vector<1x8x48xbf16> to vector<8x48xbf16>
    %c0_2 = arith.constant 0 : index
    %c0_3 = arith.constant 0 : index
    %2 = vector.load %arg3[%c0_2, %c0_3] : memref<48x128xbf16, #tpu.memory_space<vmem>>, vector<48x128xbf16>
    %cst = arith.constant dense<0.000000e+00> : vector<8x128xf32>
    %3 = tpu.matmul %1, %2, %cst {dimension_numbers = #tpu.dot_dimension_numbers<[1], [0], [0], [1], [0, 0, 1, 1], [], []>} : vector<8x48xbf16>, vector<48x128xbf16>, vector<8x128xf32> -> vector<8x128xf32>
    %c0_4 = arith.constant 0 : index
    %c0_5 = arith.constant 0 : index
    %4 = vector.load %arg4[%c0_4, %c0_5] : memref<1x128xf32, #tpu.memory_space<vmem>>, vector<1x128xf32>
    %5 = vector.broadcast %4 : vector<1x128xf32> to vector<8x128xf32>
    %6 = arith.addf %3, %5 : vector<8x128xf32>
    %cst_6 = arith.constant 0.000000e+00 : f32
    %7 = vector.broadcast %cst_6 : f32 to vector<8x128xf32>
    %8 = arith.maximumf %6, %7 : vector<8x128xf32>
    %9 = vector.shape_cast %8 : vector<8x128xf32> to vector<1x4x2x128xf32>
    %10 = vector.extract_strided_slice %9 {offsets = [0, 0, 0, 0], sizes = [1, 4, 1, 128], strides = [1, 1, 1, 1]} : vector<1x4x2x128xf32> to vector<1x4x1x128xf32>
    %11 = vector.shape_cast %10 : vector<1x4x1x128xf32> to vector<1x4x128xf32>
    %12 = vector.extract_strided_slice %9 {offsets = [0, 0, 1, 0], sizes = [1, 4, 1, 128], strides = [1, 1, 1, 1]} : vector<1x4x2x128xf32> to vector<1x4x1x128xf32>
    %13 = vector.shape_cast %12 : vector<1x4x1x128xf32> to vector<1x4x128xf32>
    %14 = arith.maximumf %11, %13 : vector<1x4x128xf32>
    %15 = vector.shape_cast %14 : vector<1x4x128xf32> to vector<4x128xf32>
    %16 = arith.truncf %15 : vector<4x128xf32> to vector<4x128xbf16>
    %c0_7 = arith.constant 0 : index
    %c0_8 = arith.constant 0 : index
    %17 = vector.load %arg5[%c0_7, %c0_8] : memref<128x512xbf16, #tpu.memory_space<vmem>>, vector<128x512xbf16>
    %cst_9 = arith.constant dense<0.000000e+00> : vector<4x512xf32>
    %18 = tpu.matmul %16, %17, %cst_9 {dimension_numbers = #tpu.dot_dimension_numbers<[1], [0], [0], [1], [0, 0, 1, 1], [], []>} : vector<4x128xbf16>, vector<128x512xbf16>, vector<4x512xf32> -> vector<4x512xf32>
    %c0_10 = arith.constant 0 : index
    %c0_11 = arith.constant 0 : index
    %19 = vector.load %arg7[%c0_10, %c0_11] : memref<1x512xf32, #tpu.memory_space<vmem>>, vector<1x512xf32>
    %20 = vector.broadcast %19 : vector<1x512xf32> to vector<4x512xf32>
    %21 = arith.addf %18, %20 : vector<4x512xf32>
    %22 = vector.shape_cast %21 : vector<4x512xf32> to vector<1x4x512xf32>
    %c0_12 = arith.constant 0 : index
    %c0_13 = arith.constant 0 : index
    %c0_14 = arith.constant 0 : index
    %23 = vector.load %arg14[%c0_12, %c0_13, %c0_14] : memref<1x4x512xf32, #tpu.memory_space<vmem>>, vector<1x4x512xf32>
    tpu.vector_store %arg14[%c0_12, %c0_13, %c0_14], %22 {strides = array<i32>} : memref<1x4x512xf32, #tpu.memory_space<vmem>>, vector<1x4x512xf32>,
    %cst_15 = arith.constant 0.000000e+00 : f32
    %24 = vector.broadcast %cst_15 : f32 to vector<1x128xf32>
    %cst_16 = arith.constant 0.000000e+00 : f32
    %25 = vector.broadcast %cst_16 : f32 to vector<1x128xf32>
    %c0_i32 = arith.constant 0 : i32
    %c0_17 = arith.constant 0 : index
    %26 = arith.index_cast %c0_i32 : i32 to index
    %c0_18 = arith.constant 0 : index
    %27 = vector.load %arg14[%c0_17, %26, %c0_18] : memref<1x4x512xf32, #tpu.memory_space<vmem>>, vector<1x1x512xf32>
    %28 = vector.shape_cast %27 : vector<1x1x512xf32> to vector<1x512xf32>
    %29 = arith.truncf %24 : vector<1x128xf32> to vector<1x128xbf16>
    %c0_19 = arith.constant 0 : index
    %c0_20 = arith.constant 0 : index
    %30 = vector.load %arg6[%c0_19, %c0_20] : memref<128x512xbf16, #tpu.memory_space<vmem>>, vector<128x512xbf16>
    %cst_21 = arith.constant dense<0.000000e+00> : vector<1x512xf32>
    %31 = tpu.matmul %29, %30, %cst_21 {dimension_numbers = #tpu.dot_dimension_numbers<[1], [0], [0], [1], [0, 0, 1, 1], [], []>} : vector<1x128xbf16>, vector<128x512xbf16>, vector<1x512xf32> -> vector<1x512xf32>
    %32 = arith.addf %28, %31 : vector<1x512xf32>
    %33 = vector.extract_strided_slice %32 {offsets = [0, 0], sizes = [1, 128], strides = [1, 1]} : vector<1x512xf32> to vector<1x128xf32>
    %34 = arith.negf %33 : vector<1x128xf32>
    %35 = math.exp %34 : vector<1x128xf32>
    %cst_22 = arith.constant 1.000000e+00 : f32
    %36 = vector.broadcast %cst_22 : f32 to vector<1x128xf32>
    %37 = arith.addf %36, %35 : vector<1x128xf32>
    %38 = arith.divf %36, %37 : vector<1x128xf32>
    %39 = vector.extract_strided_slice %32 {offsets = [0, 128], sizes = [1, 128], strides = [1, 1]} : vector<1x512xf32> to vector<1x128xf32>
    %40 = arith.negf %39 : vector<1x128xf32>
    %41 = math.exp %40 : vector<1x128xf32>
    %cst_23 = arith.constant 1.000000e+00 : f32
    %42 = vector.broadcast %cst_23 : f32 to vector<1x128xf32>
    %43 = arith.addf %42, %41 : vector<1x128xf32>
    %44 = arith.divf %42, %43 : vector<1x128xf32>
    %45 = vector.extract_strided_slice %32 {offsets = [0, 256], sizes = [1, 128], strides = [1, 1]} : vector<1x512xf32> to vector<1x128xf32>
    %46 = math.tanh %45 : vector<1x128xf32>
    %47 = vector.extract_strided_slice %32 {offsets = [0, 384], sizes = [1, 128], strides = [1, 1]} : vector<1x512xf32> to vector<1x128xf32>
    %48 = arith.negf %47 : vector<1x128xf32>
    %49 = math.exp %48 : vector<1x128xf32>
    %cst_24 = arith.constant 1.000000e+00 : f32
    %50 = vector.broadcast %cst_24 : f32 to vector<1x128xf32>
    %51 = arith.addf %50, %49 : vector<1x128xf32>
    %52 = arith.divf %50, %51 : vector<1x128xf32>
    %53 = arith.mulf %44, %25 : vector<1x128xf32>
    %54 = arith.mulf %38, %46 : vector<1x128xf32>
    %55 = arith.addf %53, %54 : vector<1x128xf32>
    %56 = math.tanh %55 : vector<1x128xf32>
    %57 = arith.mulf %52, %56 : vector<1x128xf32>
    %58 = vector.shape_cast %57 : vector<1x128xf32> to vector<1x1x128xf32>
    %c0_25 = arith.constant 0 : index
    %59 = arith.index_cast %c0_i32 : i32 to index
    %c0_26 = arith.constant 0 : index
    %60 = vector.load %arg15[%c0_25, %59, %c0_26] : memref<1x4x128xf32, #tpu.memory_space<vmem>>, vector<1x1x128xf32>
    tpu.vector_store %arg15[%c0_25, %59, %c0_26], %58 {strides = array<i32>} : memref<1x4x128xf32, #tpu.memory_space<vmem>>, vector<1x1x128xf32>,
    %c1_i32 = arith.constant 1 : i32
    %c0_27 = arith.constant 0 : index
    %61 = arith.index_cast %c1_i32 : i32 to index
    %c0_28 = arith.constant 0 : index
    %62 = vector.load %arg14[%c0_27, %61, %c0_28] : memref<1x4x512xf32, #tpu.memory_space<vmem>>, vector<1x1x512xf32>
    %63 = vector.shape_cast %62 : vector<1x1x512xf32> to vector<1x512xf32>
    %64 = arith.truncf %57 : vector<1x128xf32> to vector<1x128xbf16>
    %c0_29 = arith.constant 0 : index
    %c0_30 = arith.constant 0 : index
    %65 = vector.load %arg6[%c0_29, %c0_30] : memref<128x512xbf16, #tpu.memory_space<vmem>>, vector<128x512xbf16>
    %cst_31 = arith.constant dense<0.000000e+00> : vector<1x512xf32>
    %66 = tpu.matmul %64, %65, %cst_31 {dimension_numbers = #tpu.dot_dimension_numbers<[1], [0], [0], [1], [0, 0, 1, 1], [], []>} : vector<1x128xbf16>, vector<128x512xbf16>, vector<1x512xf32> -> vector<1x512xf32>
    %67 = arith.addf %63, %66 : vector<1x512xf32>
    %68 = vector.extract_strided_slice %67 {offsets = [0, 0], sizes = [1, 128], strides = [1, 1]} : vector<1x512xf32> to vector<1x128xf32>
    %69 = arith.negf %68 : vector<1x128xf32>
    %70 = math.exp %69 : vector<1x128xf32>
    %cst_32 = arith.constant 1.000000e+00 : f32
    %71 = vector.broadcast %cst_32 : f32 to vector<1x128xf32>
    %72 = arith.addf %71, %70 : vector<1x128xf32>
    %73 = arith.divf %71, %72 : vector<1x128xf32>
    %74 = vector.extract_strided_slice %67 {offsets = [0, 128], sizes = [1, 128], strides = [1, 1]} : vector<1x512xf32> to vector<1x128xf32>
    %75 = arith.negf %74 : vector<1x128xf32>
    %76 = math.exp %75 : vector<1x128xf32>
    %cst_33 = arith.constant 1.000000e+00 : f32
    %77 = vector.broadcast %cst_33 : f32 to vector<1x128xf32>
    %78 = arith.addf %77, %76 : vector<1x128xf32>
    %79 = arith.divf %77, %78 : vector<1x128xf32>
    %80 = vector.extract_strided_slice %67 {offsets = [0, 256], sizes = [1, 128], strides = [1, 1]} : vector<1x512xf32> to vector<1x128xf32>
    %81 = math.tanh %80 : vector<1x128xf32>
    %82 = vector.extract_strided_slice %67 {offsets = [0, 384], sizes = [1, 128], strides = [1, 1]} : vector<1x512xf32> to vector<1x128xf32>
    %83 = arith.negf %82 : vector<1x128xf32>
    %84 = math.exp %83 : vector<1x128xf32>
    %cst_34 = arith.constant 1.000000e+00 : f32
    %85 = vector.broadcast %cst_34 : f32 to vector<1x128xf32>
    %86 = arith.addf %85, %84 : vector<1x128xf32>
    %87 = arith.divf %85, %86 : vector<1x128xf32>
    %88 = arith.mulf %79, %55 : vector<1x128xf32>
    %89 = arith.mulf %73, %81 : vector<1x128xf32>
    %90 = arith.addf %88, %89 : vector<1x128xf32>
    %91 = math.tanh %90 : vector<1x128xf32>
    %92 = arith.mulf %87, %91 : vector<1x128xf32>
    %93 = vector.shape_cast %92 : vector<1x128xf32> to vector<1x1x128xf32>
    %c0_35 = arith.constant 0 : index
    %94 = arith.index_cast %c1_i32 : i32 to index
    %c0_36 = arith.constant 0 : index
    %95 = vector.load %arg15[%c0_35, %94, %c0_36] : memref<1x4x128xf32, #tpu.memory_space<vmem>>, vector<1x1x128xf32>
    tpu.vector_store %arg15[%c0_35, %94, %c0_36], %93 {strides = array<i32>} : memref<1x4x128xf32, #tpu.memory_space<vmem>>, vector<1x1x128xf32>,
    %c2_i32 = arith.constant 2 : i32
    %c0_37 = arith.constant 0 : index
    %96 = arith.index_cast %c2_i32 : i32 to index
    %c0_38 = arith.constant 0 : index
    %97 = vector.load %arg14[%c0_37, %96, %c0_38] : memref<1x4x512xf32, #tpu.memory_space<vmem>>, vector<1x1x512xf32>
    %98 = vector.shape_cast %97 : vector<1x1x512xf32> to vector<1x512xf32>
    %99 = arith.truncf %92 : vector<1x128xf32> to vector<1x128xbf16>
    %c0_39 = arith.constant 0 : index
    %c0_40 = arith.constant 0 : index
    %100 = vector.load %arg6[%c0_39, %c0_40] : memref<128x512xbf16, #tpu.memory_space<vmem>>, vector<128x512xbf16>
    %cst_41 = arith.constant dense<0.000000e+00> : vector<1x512xf32>
    %101 = tpu.matmul %99, %100, %cst_41 {dimension_numbers = #tpu.dot_dimension_numbers<[1], [0], [0], [1], [0, 0, 1, 1], [], []>} : vector<1x128xbf16>, vector<128x512xbf16>, vector<1x512xf32> -> vector<1x512xf32>
    %102 = arith.addf %98, %101 : vector<1x512xf32>
    %103 = vector.extract_strided_slice %102 {offsets = [0, 0], sizes = [1, 128], strides = [1, 1]} : vector<1x512xf32> to vector<1x128xf32>
    %104 = arith.negf %103 : vector<1x128xf32>
    %105 = math.exp %104 : vector<1x128xf32>
    %cst_42 = arith.constant 1.000000e+00 : f32
    %106 = vector.broadcast %cst_42 : f32 to vector<1x128xf32>
    %107 = arith.addf %106, %105 : vector<1x128xf32>
    %108 = arith.divf %106, %107 : vector<1x128xf32>
    %109 = vector.extract_strided_slice %102 {offsets = [0, 128], sizes = [1, 128], strides = [1, 1]} : vector<1x512xf32> to vector<1x128xf32>
    %110 = arith.negf %109 : vector<1x128xf32>
    %111 = math.exp %110 : vector<1x128xf32>
    %cst_43 = arith.constant 1.000000e+00 : f32
    %112 = vector.broadcast %cst_43 : f32 to vector<1x128xf32>
    %113 = arith.addf %112, %111 : vector<1x128xf32>
    %114 = arith.divf %112, %113 : vector<1x128xf32>
    %115 = vector.extract_strided_slice %102 {offsets = [0, 256], sizes = [1, 128], strides = [1, 1]} : vector<1x512xf32> to vector<1x128xf32>
    %116 = math.tanh %115 : vector<1x128xf32>
    %117 = vector.extract_strided_slice %102 {offsets = [0, 384], sizes = [1, 128], strides = [1, 1]} : vector<1x512xf32> to vector<1x128xf32>
    %118 = arith.negf %117 : vector<1x128xf32>
    %119 = math.exp %118 : vector<1x128xf32>
    %cst_44 = arith.constant 1.000000e+00 : f32
    %120 = vector.broadcast %cst_44 : f32 to vector<1x128xf32>
    %121 = arith.addf %120, %119 : vector<1x128xf32>
    %122 = arith.divf %120, %121 : vector<1x128xf32>
    %123 = arith.mulf %114, %90 : vector<1x128xf32>
    %124 = arith.mulf %108, %116 : vector<1x128xf32>
    %125 = arith.addf %123, %124 : vector<1x128xf32>
    %126 = math.tanh %125 : vector<1x128xf32>
    %127 = arith.mulf %122, %126 : vector<1x128xf32>
    %128 = vector.shape_cast %127 : vector<1x128xf32> to vector<1x1x128xf32>
    %c0_45 = arith.constant 0 : index
    %129 = arith.index_cast %c2_i32 : i32 to index
    %c0_46 = arith.constant 0 : index
    %130 = vector.load %arg15[%c0_45, %129, %c0_46] : memref<1x4x128xf32, #tpu.memory_space<vmem>>, vector<1x1x128xf32>
    tpu.vector_store %arg15[%c0_45, %129, %c0_46], %128 {strides = array<i32>} : memref<1x4x128xf32, #tpu.memory_space<vmem>>, vector<1x1x128xf32>,
    %c3_i32 = arith.constant 3 : i32
    %c0_47 = arith.constant 0 : index
    %131 = arith.index_cast %c3_i32 : i32 to index
    %c0_48 = arith.constant 0 : index
    %132 = vector.load %arg14[%c0_47, %131, %c0_48] : memref<1x4x512xf32, #tpu.memory_space<vmem>>, vector<1x1x512xf32>
    %133 = vector.shape_cast %132 : vector<1x1x512xf32> to vector<1x512xf32>
    %134 = arith.truncf %127 : vector<1x128xf32> to vector<1x128xbf16>
    %c0_49 = arith.constant 0 : index
    %c0_50 = arith.constant 0 : index
    %135 = vector.load %arg6[%c0_49, %c0_50] : memref<128x512xbf16, #tpu.memory_space<vmem>>, vector<128x512xbf16>
    %cst_51 = arith.constant dense<0.000000e+00> : vector<1x512xf32>
    %136 = tpu.matmul %134, %135, %cst_51 {dimension_numbers = #tpu.dot_dimension_numbers<[1], [0], [0], [1], [0, 0, 1, 1], [], []>} : vector<1x128xbf16>, vector<128x512xbf16>, vector<1x512xf32> -> vector<1x512xf32>
    %137 = arith.addf %133, %136 : vector<1x512xf32>
    %138 = vector.extract_strided_slice %137 {offsets = [0, 0], sizes = [1, 128], strides = [1, 1]} : vector<1x512xf32> to vector<1x128xf32>
    %139 = arith.negf %138 : vector<1x128xf32>
    %140 = math.exp %139 : vector<1x128xf32>
    %cst_52 = arith.constant 1.000000e+00 : f32
    %141 = vector.broadcast %cst_52 : f32 to vector<1x128xf32>
    %142 = arith.addf %141, %140 : vector<1x128xf32>
    %143 = arith.divf %141, %142 : vector<1x128xf32>
    %144 = vector.extract_strided_slice %137 {offsets = [0, 128], sizes = [1, 128], strides = [1, 1]} : vector<1x512xf32> to vector<1x128xf32>
    %145 = arith.negf %144 : vector<1x128xf32>
    %146 = math.exp %145 : vector<1x128xf32>
    %cst_53 = arith.constant 1.000000e+00 : f32
    %147 = vector.broadcast %cst_53 : f32 to vector<1x128xf32>
    %148 = arith.addf %147, %146 : vector<1x128xf32>
    %149 = arith.divf %147, %148 : vector<1x128xf32>
    %150 = vector.extract_strided_slice %137 {offsets = [0, 256], sizes = [1, 128], strides = [1, 1]} : vector<1x512xf32> to vector<1x128xf32>
    %151 = math.tanh %150 : vector<1x128xf32>
    %152 = vector.extract_strided_slice %137 {offsets = [0, 384], sizes = [1, 128], strides = [1, 1]} : vector<1x512xf32> to vector<1x128xf32>
    %153 = arith.negf %152 : vector<1x128xf32>
    %154 = math.exp %153 : vector<1x128xf32>
    %cst_54 = arith.constant 1.000000e+00 : f32
    %155 = vector.broadcast %cst_54 : f32 to vector<1x128xf32>
    %156 = arith.addf %155, %154 : vector<1x128xf32>
    %157 = arith.divf %155, %156 : vector<1x128xf32>
    %158 = arith.mulf %149, %125 : vector<1x128xf32>
    %159 = arith.mulf %143, %151 : vector<1x128xf32>
    %160 = arith.addf %158, %159 : vector<1x128xf32>
    %161 = math.tanh %160 : vector<1x128xf32>
    %162 = arith.mulf %157, %161 : vector<1x128xf32>
    %163 = vector.shape_cast %162 : vector<1x128xf32> to vector<1x1x128xf32>
    %c0_55 = arith.constant 0 : index
    %164 = arith.index_cast %c3_i32 : i32 to index
    %c0_56 = arith.constant 0 : index
    %165 = vector.load %arg15[%c0_55, %164, %c0_56] : memref<1x4x128xf32, #tpu.memory_space<vmem>>, vector<1x1x128xf32>
    tpu.vector_store %arg15[%c0_55, %164, %c0_56], %163 {strides = array<i32>} : memref<1x4x128xf32, #tpu.memory_space<vmem>>, vector<1x1x128xf32>,
    %c4_i32 = arith.constant 4 : i32
    %c0_57 = arith.constant 0 : index
    %c0_58 = arith.constant 0 : index
    %c0_59 = arith.constant 0 : index
    %166 = vector.load %arg15[%c0_57, %c0_58, %c0_59] : memref<1x4x128xf32, #tpu.memory_space<vmem>>, vector<1x4x128xf32>
    %167 = vector.shape_cast %166 : vector<1x4x128xf32> to vector<4x128xf32>
    %168 = arith.truncf %167 : vector<4x128xf32> to vector<4x128xbf16>
    %c0_60 = arith.constant 0 : index
    %c0_61 = arith.constant 0 : index
    %169 = vector.load %arg8[%c0_60, %c0_61] : memref<128x512xbf16, #tpu.memory_space<vmem>>, vector<128x512xbf16>
    %cst_62 = arith.constant dense<0.000000e+00> : vector<4x512xf32>
    %170 = tpu.matmul %168, %169, %cst_62 {dimension_numbers = #tpu.dot_dimension_numbers<[1], [0], [0], [1], [0, 0, 1, 1], [], []>} : vector<4x128xbf16>, vector<128x512xbf16>, vector<4x512xf32> -> vector<4x512xf32>
    %c0_63 = arith.constant 0 : index
    %c0_64 = arith.constant 0 : index
    %171 = vector.load %arg10[%c0_63, %c0_64] : memref<1x512xf32, #tpu.memory_space<vmem>>, vector<1x512xf32>
    %172 = vector.broadcast %171 : vector<1x512xf32> to vector<4x512xf32>
    %173 = arith.addf %170, %172 : vector<4x512xf32>
    %174 = vector.shape_cast %173 : vector<4x512xf32> to vector<1x4x512xf32>
    %c0_65 = arith.constant 0 : index
    %c0_66 = arith.constant 0 : index
    %c0_67 = arith.constant 0 : index
    %175 = vector.load %arg14[%c0_65, %c0_66, %c0_67] : memref<1x4x512xf32, #tpu.memory_space<vmem>>, vector<1x4x512xf32>
    tpu.vector_store %arg14[%c0_65, %c0_66, %c0_67], %174 {strides = array<i32>} : memref<1x4x512xf32, #tpu.memory_space<vmem>>, vector<1x4x512xf32>,
    %cst_68 = arith.constant 0.000000e+00 : f32
    %176 = vector.broadcast %cst_68 : f32 to vector<1x128xf32>
    %cst_69 = arith.constant 0.000000e+00 : f32
    %177 = vector.broadcast %cst_69 : f32 to vector<1x128xf32>
    %c0_i32_70 = arith.constant 0 : i32
    %c0_71 = arith.constant 0 : index
    %178 = arith.index_cast %c0_i32_70 : i32 to index
    %c0_72 = arith.constant 0 : index
    %179 = vector.load %arg14[%c0_71, %178, %c0_72] : memref<1x4x512xf32, #tpu.memory_space<vmem>>, vector<1x1x512xf32>
    %180 = vector.shape_cast %179 : vector<1x1x512xf32> to vector<1x512xf32>
    %181 = arith.truncf %176 : vector<1x128xf32> to vector<1x128xbf16>
    %c0_73 = arith.constant 0 : index
    %c0_74 = arith.constant 0 : index
    %182 = vector.load %arg9[%c0_73, %c0_74] : memref<128x512xbf16, #tpu.memory_space<vmem>>, vector<128x512xbf16>
    %cst_75 = arith.constant dense<0.000000e+00> : vector<1x512xf32>
    %183 = tpu.matmul %181, %182, %cst_75 {dimension_numbers = #tpu.dot_dimension_numbers<[1], [0], [0], [1], [0, 0, 1, 1], [], []>} : vector<1x128xbf16>, vector<128x512xbf16>, vector<1x512xf32> -> vector<1x512xf32>
    %184 = arith.addf %180, %183 : vector<1x512xf32>
    %185 = vector.extract_strided_slice %184 {offsets = [0, 0], sizes = [1, 128], strides = [1, 1]} : vector<1x512xf32> to vector<1x128xf32>
    %186 = arith.negf %185 : vector<1x128xf32>
    %187 = math.exp %186 : vector<1x128xf32>
    %cst_76 = arith.constant 1.000000e+00 : f32
    %188 = vector.broadcast %cst_76 : f32 to vector<1x128xf32>
    %189 = arith.addf %188, %187 : vector<1x128xf32>
    %190 = arith.divf %188, %189 : vector<1x128xf32>
    %191 = vector.extract_strided_slice %184 {offsets = [0, 128], sizes = [1, 128], strides = [1, 1]} : vector<1x512xf32> to vector<1x128xf32>
    %192 = arith.negf %191 : vector<1x128xf32>
    %193 = math.exp %192 : vector<1x128xf32>
    %cst_77 = arith.constant 1.000000e+00 : f32
    %194 = vector.broadcast %cst_77 : f32 to vector<1x128xf32>
    %195 = arith.addf %194, %193 : vector<1x128xf32>
    %196 = arith.divf %194, %195 : vector<1x128xf32>
    %197 = vector.extract_strided_slice %184 {offsets = [0, 256], sizes = [1, 128], strides = [1, 1]} : vector<1x512xf32> to vector<1x128xf32>
    %198 = math.tanh %197 : vector<1x128xf32>
    %199 = vector.extract_strided_slice %184 {offsets = [0, 384], sizes = [1, 128], strides = [1, 1]} : vector<1x512xf32> to vector<1x128xf32>
    %200 = arith.negf %199 : vector<1x128xf32>
    %201 = math.exp %200 : vector<1x128xf32>
    %cst_78 = arith.constant 1.000000e+00 : f32
    %202 = vector.broadcast %cst_78 : f32 to vector<1x128xf32>
    %203 = arith.addf %202, %201 : vector<1x128xf32>
    %204 = arith.divf %202, %203 : vector<1x128xf32>
    %205 = arith.mulf %196, %177 : vector<1x128xf32>
    %206 = arith.mulf %190, %198 : vector<1x128xf32>
    %207 = arith.addf %205, %206 : vector<1x128xf32>
    %208 = math.tanh %207 : vector<1x128xf32>
    %209 = arith.mulf %204, %208 : vector<1x128xf32>
    %210 = vector.shape_cast %209 : vector<1x128xf32> to vector<1x1x128xf32>
    %c0_79 = arith.constant 0 : index
    %211 = arith.index_cast %c0_i32_70 : i32 to index
    %c0_80 = arith.constant 0 : index
    %212 = vector.load %arg15[%c0_79, %211, %c0_80] : memref<1x4x128xf32, #tpu.memory_space<vmem>>, vector<1x1x128xf32>
    tpu.vector_store %arg15[%c0_79, %211, %c0_80], %210 {strides = array<i32>} : memref<1x4x128xf32, #tpu.memory_space<vmem>>, vector<1x1x128xf32>,
    %c1_i32_81 = arith.constant 1 : i32
    %c0_82 = arith.constant 0 : index
    %213 = arith.index_cast %c1_i32_81 : i32 to index
    %c0_83 = arith.constant 0 : index
    %214 = vector.load %arg14[%c0_82, %213, %c0_83] : memref<1x4x512xf32, #tpu.memory_space<vmem>>, vector<1x1x512xf32>
    %215 = vector.shape_cast %214 : vector<1x1x512xf32> to vector<1x512xf32>
    %216 = arith.truncf %209 : vector<1x128xf32> to vector<1x128xbf16>
    %c0_84 = arith.constant 0 : index
    %c0_85 = arith.constant 0 : index
    %217 = vector.load %arg9[%c0_84, %c0_85] : memref<128x512xbf16, #tpu.memory_space<vmem>>, vector<128x512xbf16>
    %cst_86 = arith.constant dense<0.000000e+00> : vector<1x512xf32>
    %218 = tpu.matmul %216, %217, %cst_86 {dimension_numbers = #tpu.dot_dimension_numbers<[1], [0], [0], [1], [0, 0, 1, 1], [], []>} : vector<1x128xbf16>, vector<128x512xbf16>, vector<1x512xf32> -> vector<1x512xf32>
    %219 = arith.addf %215, %218 : vector<1x512xf32>
    %220 = vector.extract_strided_slice %219 {offsets = [0, 0], sizes = [1, 128], strides = [1, 1]} : vector<1x512xf32> to vector<1x128xf32>
    %221 = arith.negf %220 : vector<1x128xf32>
    %222 = math.exp %221 : vector<1x128xf32>
    %cst_87 = arith.constant 1.000000e+00 : f32
    %223 = vector.broadcast %cst_87 : f32 to vector<1x128xf32>
    %224 = arith.addf %223, %222 : vector<1x128xf32>
    %225 = arith.divf %223, %224 : vector<1x128xf32>
    %226 = vector.extract_strided_slice %219 {offsets = [0, 128], sizes = [1, 128], strides = [1, 1]} : vector<1x512xf32> to vector<1x128xf32>
    %227 = arith.negf %226 : vector<1x128xf32>
    %228 = math.exp %227 : vector<1x128xf32>
    %cst_88 = arith.constant 1.000000e+00 : f32
    %229 = vector.broadcast %cst_88 : f32 to vector<1x128xf32>
    %230 = arith.addf %229, %228 : vector<1x128xf32>
    %231 = arith.divf %229, %230 : vector<1x128xf32>
    %232 = vector.extract_strided_slice %219 {offsets = [0, 256], sizes = [1, 128], strides = [1, 1]} : vector<1x512xf32> to vector<1x128xf32>
    %233 = math.tanh %232 : vector<1x128xf32>
    %234 = vector.extract_strided_slice %219 {offsets = [0, 384], sizes = [1, 128], strides = [1, 1]} : vector<1x512xf32> to vector<1x128xf32>
    %235 = arith.negf %234 : vector<1x128xf32>
    %236 = math.exp %235 : vector<1x128xf32>
    %cst_89 = arith.constant 1.000000e+00 : f32
    %237 = vector.broadcast %cst_89 : f32 to vector<1x128xf32>
    %238 = arith.addf %237, %236 : vector<1x128xf32>
    %239 = arith.divf %237, %238 : vector<1x128xf32>
    %240 = arith.mulf %231, %207 : vector<1x128xf32>
    %241 = arith.mulf %225, %233 : vector<1x128xf32>
    %242 = arith.addf %240, %241 : vector<1x128xf32>
    %243 = math.tanh %242 : vector<1x128xf32>
    %244 = arith.mulf %239, %243 : vector<1x128xf32>
    %245 = vector.shape_cast %244 : vector<1x128xf32> to vector<1x1x128xf32>
    %c0_90 = arith.constant 0 : index
    %246 = arith.index_cast %c1_i32_81 : i32 to index
    %c0_91 = arith.constant 0 : index
    %247 = vector.load %arg15[%c0_90, %246, %c0_91] : memref<1x4x128xf32, #tpu.memory_space<vmem>>, vector<1x1x128xf32>
    tpu.vector_store %arg15[%c0_90, %246, %c0_91], %245 {strides = array<i32>} : memref<1x4x128xf32, #tpu.memory_space<vmem>>, vector<1x1x128xf32>,
    %c2_i32_92 = arith.constant 2 : i32
    %c0_93 = arith.constant 0 : index
    %248 = arith.index_cast %c2_i32_92 : i32 to index
    %c0_94 = arith.constant 0 : index
    %249 = vector.load %arg14[%c0_93, %248, %c0_94] : memref<1x4x512xf32, #tpu.memory_space<vmem>>, vector<1x1x512xf32>
    %250 = vector.shape_cast %249 : vector<1x1x512xf32> to vector<1x512xf32>
    %251 = arith.truncf %244 : vector<1x128xf32> to vector<1x128xbf16>
    %c0_95 = arith.constant 0 : index
    %c0_96 = arith.constant 0 : index
    %252 = vector.load %arg9[%c0_95, %c0_96] : memref<128x512xbf16, #tpu.memory_space<vmem>>, vector<128x512xbf16>
    %cst_97 = arith.constant dense<0.000000e+00> : vector<1x512xf32>
    %253 = tpu.matmul %251, %252, %cst_97 {dimension_numbers = #tpu.dot_dimension_numbers<[1], [0], [0], [1], [0, 0, 1, 1], [], []>} : vector<1x128xbf16>, vector<128x512xbf16>, vector<1x512xf32> -> vector<1x512xf32>
    %254 = arith.addf %250, %253 : vector<1x512xf32>
    %255 = vector.extract_strided_slice %254 {offsets = [0, 0], sizes = [1, 128], strides = [1, 1]} : vector<1x512xf32> to vector<1x128xf32>
    %256 = arith.negf %255 : vector<1x128xf32>
    %257 = math.exp %256 : vector<1x128xf32>
    %cst_98 = arith.constant 1.000000e+00 : f32
    %258 = vector.broadcast %cst_98 : f32 to vector<1x128xf32>
    %259 = arith.addf %258, %257 : vector<1x128xf32>
    %260 = arith.divf %258, %259 : vector<1x128xf32>
    %261 = vector.extract_strided_slice %254 {offsets = [0, 128], sizes = [1, 128], strides = [1, 1]} : vector<1x512xf32> to vector<1x128xf32>
    %262 = arith.negf %261 : vector<1x128xf32>
    %263 = math.exp %262 : vector<1x128xf32>
    %cst_99 = arith.constant 1.000000e+00 : f32
    %264 = vector.broadcast %cst_99 : f32 to vector<1x128xf32>
    %265 = arith.addf %264, %263 : vector<1x128xf32>
    %266 = arith.divf %264, %265 : vector<1x128xf32>
    %267 = vector.extract_strided_slice %254 {offsets = [0, 256], sizes = [1, 128], strides = [1, 1]} : vector<1x512xf32> to vector<1x128xf32>
    %268 = math.tanh %267 : vector<1x128xf32>
    %269 = vector.extract_strided_slice %254 {offsets = [0, 384], sizes = [1, 128], strides = [1, 1]} : vector<1x512xf32> to vector<1x128xf32>
    %270 = arith.negf %269 : vector<1x128xf32>
    %271 = math.exp %270 : vector<1x128xf32>
    %cst_100 = arith.constant 1.000000e+00 : f32
    %272 = vector.broadcast %cst_100 : f32 to vector<1x128xf32>
    %273 = arith.addf %272, %271 : vector<1x128xf32>
    %274 = arith.divf %272, %273 : vector<1x128xf32>
    %275 = arith.mulf %266, %242 : vector<1x128xf32>
    %276 = arith.mulf %260, %268 : vector<1x128xf32>
    %277 = arith.addf %275, %276 : vector<1x128xf32>
    %278 = math.tanh %277 : vector<1x128xf32>
    %279 = arith.mulf %274, %278 : vector<1x128xf32>
    %280 = vector.shape_cast %279 : vector<1x128xf32> to vector<1x1x128xf32>
    %c0_101 = arith.constant 0 : index
    %281 = arith.index_cast %c2_i32_92 : i32 to index
    %c0_102 = arith.constant 0 : index
    %282 = vector.load %arg15[%c0_101, %281, %c0_102] : memref<1x4x128xf32, #tpu.memory_space<vmem>>, vector<1x1x128xf32>
    tpu.vector_store %arg15[%c0_101, %281, %c0_102], %280 {strides = array<i32>} : memref<1x4x128xf32, #tpu.memory_space<vmem>>, vector<1x1x128xf32>,
    %c3_i32_103 = arith.constant 3 : i32
    %c0_104 = arith.constant 0 : index
    %283 = arith.index_cast %c3_i32_103 : i32 to index
    %c0_105 = arith.constant 0 : index
    %284 = vector.load %arg14[%c0_104, %283, %c0_105] : memref<1x4x512xf32, #tpu.memory_space<vmem>>, vector<1x1x512xf32>
    %285 = vector.shape_cast %284 : vector<1x1x512xf32> to vector<1x512xf32>
    %286 = arith.truncf %279 : vector<1x128xf32> to vector<1x128xbf16>
    %c0_106 = arith.constant 0 : index
    %c0_107 = arith.constant 0 : index
    %287 = vector.load %arg9[%c0_106, %c0_107] : memref<128x512xbf16, #tpu.memory_space<vmem>>, vector<128x512xbf16>
    %cst_108 = arith.constant dense<0.000000e+00> : vector<1x512xf32>
    %288 = tpu.matmul %286, %287, %cst_108 {dimension_numbers = #tpu.dot_dimension_numbers<[1], [0], [0], [1], [0, 0, 1, 1], [], []>} : vector<1x128xbf16>, vector<128x512xbf16>, vector<1x512xf32> -> vector<1x512xf32>
    %289 = arith.addf %285, %288 : vector<1x512xf32>
    %290 = vector.extract_strided_slice %289 {offsets = [0, 0], sizes = [1, 128], strides = [1, 1]} : vector<1x512xf32> to vector<1x128xf32>
    %291 = arith.negf %290 : vector<1x128xf32>
    %292 = math.exp %291 : vector<1x128xf32>
    %cst_109 = arith.constant 1.000000e+00 : f32
    %293 = vector.broadcast %cst_109 : f32 to vector<1x128xf32>
    %294 = arith.addf %293, %292 : vector<1x128xf32>
    %295 = arith.divf %293, %294 : vector<1x128xf32>
    %296 = vector.extract_strided_slice %289 {offsets = [0, 128], sizes = [1, 128], strides = [1, 1]} : vector<1x512xf32> to vector<1x128xf32>
    %297 = arith.negf %296 : vector<1x128xf32>
    %298 = math.exp %297 : vector<1x128xf32>
    %cst_110 = arith.constant 1.000000e+00 : f32
    %299 = vector.broadcast %cst_110 : f32 to vector<1x128xf32>
    %300 = arith.addf %299, %298 : vector<1x128xf32>
    %301 = arith.divf %299, %300 : vector<1x128xf32>
    %302 = vector.extract_strided_slice %289 {offsets = [0, 256], sizes = [1, 128], strides = [1, 1]} : vector<1x512xf32> to vector<1x128xf32>
    %303 = math.tanh %302 : vector<1x128xf32>
    %304 = vector.extract_strided_slice %289 {offsets = [0, 384], sizes = [1, 128], strides = [1, 1]} : vector<1x512xf32> to vector<1x128xf32>
    %305 = arith.negf %304 : vector<1x128xf32>
    %306 = math.exp %305 : vector<1x128xf32>
    %cst_111 = arith.constant 1.000000e+00 : f32
    %307 = vector.broadcast %cst_111 : f32 to vector<1x128xf32>
    %308 = arith.addf %307, %306 : vector<1x128xf32>
    %309 = arith.divf %307, %308 : vector<1x128xf32>
    %310 = arith.mulf %301, %277 : vector<1x128xf32>
    %311 = arith.mulf %295, %303 : vector<1x128xf32>
    %312 = arith.addf %310, %311 : vector<1x128xf32>
    %313 = math.tanh %312 : vector<1x128xf32>
    %314 = arith.mulf %309, %313 : vector<1x128xf32>
    %315 = vector.shape_cast %314 : vector<1x128xf32> to vector<1x1x128xf32>
    %c0_112 = arith.constant 0 : index
    %316 = arith.index_cast %c3_i32_103 : i32 to index
    %c0_113 = arith.constant 0 : index
    %317 = vector.load %arg15[%c0_112, %316, %c0_113] : memref<1x4x128xf32, #tpu.memory_space<vmem>>, vector<1x1x128xf32>
    tpu.vector_store %arg15[%c0_112, %316, %c0_113], %315 {strides = array<i32>} : memref<1x4x128xf32, #tpu.memory_space<vmem>>, vector<1x1x128xf32>,
    %c4_i32_114 = arith.constant 4 : i32
    %c0_115 = arith.constant 0 : index
    %c0_116 = arith.constant 0 : index
    %c0_117 = arith.constant 0 : index
    %318 = vector.load %arg2[%c0_115, %c0_116, %c0_117] : memref<1x1x4xf32, #tpu.memory_space<vmem>>, vector<1x1x4xf32>
    %319 = vector.shape_cast %318 : vector<1x1x4xf32> to vector<1x4xf32>
    %cst_118 = arith.constant dense<0.000000e+00> : vector<1xf32>
    %320 = vector.multi_reduction <add>, %319, %cst_118 [1] : vector<1x4xf32> to vector<1xf32>
    %321 = vector.shape_cast %320 : vector<1xf32> to vector<1x1xf32>
    %322 = arith.fptosi %321 : vector<1x1xf32> to vector<1x1xi32>
    %c1_i32_119 = arith.constant 1 : i32
    %323 = vector.broadcast %c1_i32_119 : i32 to vector<1x1xi32>
    %324 = arith.subi %322, %323 : vector<1x1xi32>
    %325 = tpu.iota {dimensions = array<i32: 1>} : vector<1x4xi32>
    %326 = vector.broadcast %324 : vector<1x1xi32> to vector<1x4xi32>
    %327 = arith.cmpi eq, %325, %326 : vector<1x4xi32>
    %328 = arith.extui %327 : vector<1x4xi1> to vector<1x4xi32>
    %329 = arith.sitofp %328 : vector<1x4xi32> to vector<1x4xf32>
    %330 = arith.mulf %329, %319 : vector<1x4xf32>
    %c0_120 = arith.constant 0 : index
    %c0_121 = arith.constant 0 : index
    %c0_122 = arith.constant 0 : index
    %331 = vector.load %arg15[%c0_120, %c0_121, %c0_122] : memref<1x4x128xf32, #tpu.memory_space<vmem>>, vector<1x4x128xf32>
    %332 = vector.shape_cast %330 : vector<1x4xf32> to vector<1x4x1xf32>
    %333 = vector.broadcast %332 : vector<1x4x1xf32> to vector<1x4x128xf32>
    %334 = arith.mulf %331, %333 : vector<1x4x128xf32>
    %cst_123 = arith.constant dense<0.000000e+00> : vector<1x128xf32>
    %335 = vector.multi_reduction <add>, %334, %cst_123 [1] : vector<1x4x128xf32> to vector<1x128xf32>
    %336 = arith.truncf %335 : vector<1x128xf32> to vector<1x128xbf16>
    %c0_124 = arith.constant 0 : index
    %c0_125 = arith.constant 0 : index
    %337 = vector.load %arg11[%c0_124, %c0_125] : memref<128x2xbf16, #tpu.memory_space<vmem>>, vector<128x2xbf16>
    %cst_126 = arith.constant dense<0.000000e+00> : vector<1x2xf32>
    %338 = tpu.matmul %336, %337, %cst_126 {dimension_numbers = #tpu.dot_dimension_numbers<[1], [0], [0], [1], [0, 0, 1, 1], [], []>} : vector<1x128xbf16>, vector<128x2xbf16>, vector<1x2xf32> -> vector<1x2xf32>
    %c0_127 = arith.constant 0 : index
    %c0_128 = arith.constant 0 : index
    %339 = vector.load %arg12[%c0_127, %c0_128] : memref<1x2xf32, #tpu.memory_space<vmem>>, vector<1x2xf32>
    %340 = arith.addf %338, %339 : vector<1x2xf32>
    %341 = arith.negf %340 : vector<1x2xf32>
    %342 = math.exp %341 : vector<1x2xf32>
    %cst_129 = arith.constant 1.000000e+00 : f32
    %343 = vector.broadcast %cst_129 : f32 to vector<1x2xf32>
    %344 = arith.addf %343, %342 : vector<1x2xf32>
    %345 = arith.divf %343, %344 : vector<1x2xf32>
    %346 = vector.shape_cast %345 : vector<1x2xf32> to vector<1x1x2xf32>
    %c0_130 = arith.constant 0 : index
    %c0_131 = arith.constant 0 : index
    %c0_132 = arith.constant 0 : index
    %347 = vector.load %arg13[%c0_130, %c0_131, %c0_132] : memref<1x1x2xf32, #tpu.memory_space<vmem>>, vector<1x1x2xf32>
    tpu.vector_store %arg13[%c0_130, %c0_131, %c0_132], %346 {strides = array<i32>} : memref<1x1x2xf32, #tpu.memory_space<vmem>>, vector<1x1x2xf32>,
    return
  }
  func.func @transform_0(%arg0: i32) -> (i32, i32, i32) {
    %c0_i32 = arith.constant 0 : i32
    %c0_i32_0 = arith.constant 0 : i32
    %c0_i32_1 = arith.constant 0 : i32
    return %arg0, %c0_i32, %c0_i32_0 : i32, i32, i32
  }
  func.func @transform_1(%arg0: i32) -> (i32, i32, i32) {
    %c0_i32 = arith.constant 0 : i32
    %c0_i32_0 = arith.constant 0 : i32
    %c0_i32_1 = arith.constant 0 : i32
    return %arg0, %c0_i32, %c0_i32_0 : i32, i32, i32
  }
  func.func @transform_2(%arg0: i32) -> (i32, i32) {
    %c0_i32 = arith.constant 0 : i32
    %c0_i32_0 = arith.constant 0 : i32
    %c0_i32_1 = arith.constant 0 : i32
    return %c0_i32, %c0_i32_0 : i32, i32
  }
  func.func @transform_3(%arg0: i32) -> (i32, i32) {
    %c0_i32 = arith.constant 0 : i32
    %c0_i32_0 = arith.constant 0 : i32
    %c0_i32_1 = arith.constant 0 : i32
    return %c0_i32, %c0_i32_0 : i32, i32
  }
  func.func @transform_4(%arg0: i32) -> (i32, i32) {
    %c0_i32 = arith.constant 0 : i32
    %c0_i32_0 = arith.constant 0 : i32
    %c0_i32_1 = arith.constant 0 : i32
    return %c0_i32, %c0_i32_0 : i32, i32
  }
  func.func @transform_5(%arg0: i32) -> (i32, i32) {
    %c0_i32 = arith.constant 0 : i32
    %c0_i32_0 = arith.constant 0 : i32
    %c0_i32_1 = arith.constant 0 : i32
    return %c0_i32, %c0_i32_0 : i32, i32
  }
  func.func @transform_6(%arg0: i32) -> (i32, i32) {
    %c0_i32 = arith.constant 0 : i32
    %c0_i32_0 = arith.constant 0 : i32
    %c0_i32_1 = arith.constant 0 : i32
    return %c0_i32, %c0_i32_0 : i32, i32
  }
  func.func @transform_7(%arg0: i32) -> (i32, i32) {
    %c0_i32 = arith.constant 0 : i32
    %c0_i32_0 = arith.constant 0 : i32
    %c0_i32_1 = arith.constant 0 : i32
    return %c0_i32, %c0_i32_0 : i32, i32
  }
  func.func @transform_8(%arg0: i32) -> (i32, i32) {
    %c0_i32 = arith.constant 0 : i32
    %c0_i32_0 = arith.constant 0 : i32
    %c0_i32_1 = arith.constant 0 : i32
    return %c0_i32, %c0_i32_0 : i32, i32
  }
  func.func @transform_9(%arg0: i32) -> (i32, i32) {
    %c0_i32 = arith.constant 0 : i32
    %c0_i32_0 = arith.constant 0 : i32
    %c0_i32_1 = arith.constant 0 : i32
    return %c0_i32, %c0_i32_0 : i32, i32
  }
  func.func @transform_10(%arg0: i32) -> (i32, i32) {
    %c0_i32 = arith.constant 0 : i32
    %c0_i32_0 = arith.constant 0 : i32
    %c0_i32_1 = arith.constant 0 : i32
    return %c0_i32, %c0_i32_0 : i32, i32
  }
  func.func @transform_11(%arg0: i32) -> (i32, i32) {
    %c0_i32 = arith.constant 0 : i32
    %c0_i32_0 = arith.constant 0 : i32
    %c0_i32_1 = arith.constant 0 : i32
    return %c0_i32, %c0_i32_0 : i32, i32
  }
  func.func @transform_12(%arg0: i32) -> (i32, i32, i32) {
    %c0_i32 = arith.constant 0 : i32
    %c0_i32_0 = arith.constant 0 : i32
    %c0_i32_1 = arith.constant 0 : i32
    return %arg0, %c0_i32, %c0_i32_0 : i32, i32, i32
  }
}

</mosaic_0001>

<llo_original>
// kernel: sentiment_cnn_lstm_forward.1
$region0: #{sentiment_cnn_lstm_forward.1}
  #allocation0 [shape = 'u32[]', space=smem, size = 0x4, offset = 0x4, fixed_abs, tag = 'smem constant byte address 0x4 - core index']
  #allocation1 [shape = 'u32[144,128]{1,0:T(1,128)}', space=vmem, size = 0x12000, scoped, tag = 'internal scratch']
  #allocation2 [shape = 'f32[1,4,512]{2,1,0:T(4,128)}', space=vmem, size = 0x2000, scoped, tag = 'scratch operand']
  #allocation3 [shape = 'f32[1,4,128]{2,1,0:T(4,128)}', space=vmem, size = 0x800, scoped, tag = 'scratch operand']
  %s0 = inlined_call_operand.vmem [shape: bf16[2,8,48], index: 0, kind: input, shape index: {}]
  %s1 = inlined_call_operand.vmem [shape: f32[2,1,4], index: 1, kind: input, shape index: {}]
  %s2 = inlined_call_operand.vmem [shape: bf16[48,128], index: 2, kind: input, shape index: {}]
  %s3 = inlined_call_operand.vmem [shape: f32[1,128], index: 3, kind: input, shape index: {}]
  %s4 = inlined_call_operand.vmem [shape: bf16[128,512], index: 4, kind: input, shape index: {}]
  %s5 = inlined_call_operand.vmem [shape: bf16[128,512], index: 5, kind: input, shape index: {}]
  %s6 = inlined_call_operand.vmem [shape: f32[1,512], index: 6, kind: input, shape index: {}]
  %s7 = inlined_call_operand.vmem [shape: bf16[128,512], index: 7, kind: input, shape index: {}]
  %s8 = inlined_call_operand.vmem [shape: bf16[128,512], index: 8, kind: input, shape index: {}]
  %s9 = inlined_call_operand.vmem [shape: f32[1,512], index: 9, kind: input, shape index: {}]
  %s10 = inlined_call_operand.vmem [shape: bf16[128,2], index: 10, kind: input, shape index: {}]
  %s11 = inlined_call_operand.vmem [shape: f32[1,2], index: 11, kind: input, shape index: {}]
  %s12 = inlined_call_operand.hbm [shape: f32[2,1,2], index: 12, kind: output, shape index: {}]
  %s13 = sld [smem:[#allocation0]]
  $region81: #{sentiment_cnn_lstm_forward.1} parent=0
    _
  %s15 = ssub.s32 1, %s13
  %s16 = scalar_select 0, %s15, %s13
  $region1: #{sentiment_cnn_lstm_forward.1} parent=0
    #allocation4 [shape = 'u8[1024]{0}', space=vmem, size = 0x400, scoped, tag = 'output window, operand 0']
    #allocation5 [shape = 's32[2]{0}', space=sflag, size = 0x8, scoped, tag = 'scoped memory for sentiment_cnn_lstm_forward.1']
    %17 = vsyncpa [#allocation5], 0
    %s18 = scalar_lea.sflag [#allocation5], 1
    %19 = vsyncpa %s18, 0
    loop: start=0, step=1, limit=4
    $region2: #{sentiment_cnn_lstm_forward.1} parent=1 // loop_pre_header
      _
    $region3: #{sentiment_cnn_lstm_forward.1} parent=1 // loop_header
      %s21 = sphi 0, %s25
      %p22 = scmp.ge.s32.totalorder %s21, 4
      %s31 = sphi 0, %s33
      %s34 = sphi 0, %s31
      %s35 = sphi 0, %s34
      %s51 = sphi 0, %s35
      %s57 = sphi 0, %s59
      %s60 = sphi 0, %s57
      %s61 = sphi 0, %s60
      %s77 = sphi 0, %s61
      %s81 = sphi 0, %s81
      %s83 = sphi 0, %s81
      %s84 = sphi 0, %s83
      %s98 = sphi 0, %s84
      %s102 = sphi 0, %s102
      %s104 = sphi 0, %s102
      %s105 = sphi 0, %s104
      %s119 = sphi 0, %s105
      %s123 = sphi 0, %s123
      %s125 = sphi 0, %s123
      %s126 = sphi 0, %s125
      %s140 = sphi 0, %s126
      %s144 = sphi 0, %s144
      %s146 = sphi 0, %s144
      %s147 = sphi 0, %s146
      %s161 = sphi 0, %s147
      %s165 = sphi 0, %s165
      %s167 = sphi 0, %s165
      %s168 = sphi 0, %s167
      %s182 = sphi 0, %s168
      %s186 = sphi 0, %s186
      %s188 = sphi 0, %s186
      %s189 = sphi 0, %s188
      %s203 = sphi 0, %s189
      %s207 = sphi 0, %s207
      %s209 = sphi 0, %s207
      %s210 = sphi 0, %s209
      %s224 = sphi 0, %s210
      %s228 = sphi 0, %s228
      %s230 = sphi 0, %s228
      %s231 = sphi 0, %s230
      %s245 = sphi 0, %s231
      %s249 = sphi 0, %s249
      %s251 = sphi 0, %s249
      %s252 = sphi 0, %s251
      %s266 = sphi 0, %s252
      %s270 = sphi 0, %s270
      %s272 = sphi 0, %s270
      %s273 = sphi 0, %s272
      %s287 = sphi 0, %s273
      %s293 = sphi 0, %s295
      %s296 = sphi 0, %s293
      %s297 = sphi 0, %s296
      %s313 = sphi 0, %s297
    $region4: #{sentiment_cnn_lstm_forward.1} parent=1 // loop_header_branch
      %24 = sbr.rel (%p22) target = $region8
    $region5: #{sentiment_cnn_lstm_forward.1} parent=1 // loop_body
      %s26 = ssub.s32 %s21, 1
      %s27 = ssub.s32 %s21, 2
      %s28 = sadd.s32 %s21, 1
      %s29 = ssub.s32 %s21, %s28
      %p30 = scmp.eq.s32.totalorder %s29, 0
      %s32 = sadd.s32 %s31, 1
      %s33 = scalar_select %p30, %s31, %s32
      %p36 = pneg %p30
      %p37 = scmp.eq.s32.totalorder %s21, 1
      %p38 = por %p36, %p37
      %p39 = scmp.ne.s32.totalorder %s31, %s34
      %p40 = scmp.eq.s32.totalorder %s21, 0
      %p41 = por %p39, %p40
      %p42 = scmp.ne.s32.totalorder %s31, %s34
      %p43 = scmp.eq.s32.totalorder %s26, 1
      %p44 = por %p42, %p43
      %p45 = scmp.ne.s32.totalorder %s34, %s35
      %p46 = scmp.eq.s32.totalorder %s26, 0
      %p47 = por %p45, %p46
      %p48 = scmp.ne.s32.totalorder %s34, %s35
      %p49 = scmp.eq.s32.totalorder %s27, 1
      %p50 = por %p48, %p49
      %p52 = scmp.ne.s32.totalorder %s35, %s51
      %p53 = scmp.eq.s32.totalorder %s27, 0
      %p54 = por %p52, %p53
      %s55 = ssub.s32 %s21, %s28
      %p56 = scmp.eq.s32.totalorder %s55, 0
      %s58 = sadd.s32 %s57, 1
      %s59 = scalar_select %p56, %s57, %s58
      %p62 = pneg %p56
      %p63 = scmp.eq.s32.totalorder %s21, 1
      %p64 = por %p62, %p63
      %p65 = scmp.ne.s32.totalorder %s57, %s60
      %p66 = scmp.eq.s32.totalorder %s21, 0
      %p67 = por %p65, %p66
      %p68 = scmp.ne.s32.totalorder %s57, %s60
      %p69 = scmp.eq.s32.totalorder %s26, 1
      %p70 = por %p68, %p69
      %p71 = scmp.ne.s32.totalorder %s60, %s61
      %p72 = scmp.eq.s32.totalorder %s26, 0
      %p73 = por %p71, %p72
      %p74 = scmp.ne.s32.totalorder %s60, %s61
      %p75 = scmp.eq.s32.totalorder %s27, 1
      %p76 = por %p74, %p75
      %p78 = scmp.ne.s32.totalorder %s61, %s77
      %p79 = scmp.eq.s32.totalorder %s27, 0
      %p80 = por %p78, %p79
      %s82 = sadd.s32 %s81, 1
      %p85 = scmp.eq.s32.totalorder %s21, 1
      %p86 = scmp.ne.s32.totalorder %s81, %s83
      %p87 = scmp.eq.s32.totalorder %s21, 0
      %p88 = por %p86, %p87
      %p89 = scmp.ne.s32.totalorder %s81, %s83
      %p90 = scmp.eq.s32.totalorder %s26, 1
      %p91 = por %p89, %p90
      %p92 = scmp.ne.s32.totalorder %s83, %s84
      %p93 = scmp.eq.s32.totalorder %s26, 0
      %p94 = por %p92, %p93
      %p95 = scmp.ne.s32.totalorder %s83, %s84
      %p96 = scmp.eq.s32.totalorder %s27, 1
      %p97 = por %p95, %p96
      %p99 = scmp.ne.s32.totalorder %s84, %s98
      %p100 = scmp.eq.s32.totalorder %s27, 0
      %p101 = por %p99, %p100
      %s103 = sadd.s32 %s102, 1
      %p106 = scmp.eq.s32.totalorder %s21, 1
      %p107 = scmp.ne.s32.totalorder %s102, %s104
      %p108 = scmp.eq.s32.totalorder %s21, 0
      %p109 = por %p107, %p108
      %p110 = scmp.ne.s32.totalorder %s102, %s104
      %p111 = scmp.eq.s32.totalorder %s26, 1
      %p112 = por %p110, %p111
      %p113 = scmp.ne.s32.totalorder %s104, %s105
      %p114 = scmp.eq.s32.totalorder %s26, 0
      %p115 = por %p113, %p114
      %p116 = scmp.ne.s32.totalorder %s104, %s105
      %p117 = scmp.eq.s32.totalorder %s27, 1
      %p118 = por %p116, %p117
      %p120 = scmp.ne.s32.totalorder %s105, %s119
      %p121 = scmp.eq.s32.totalorder %s27, 0
      %p122 = por %p120, %p121
      %s124 = sadd.s32 %s123, 1
      %p127 = scmp.eq.s32.totalorder %s21, 1
      %p128 = scmp.ne.s32.totalorder %s123, %s125
      %p129 = scmp.eq.s32.totalorder %s21, 0
      %p130 = por %p128, %p129
      %p131 = scmp.ne.s32.totalorder %s123, %s125
      %p132 = scmp.eq.s32.totalorder %s26, 1
      %p133 = por %p131, %p132
      %p134 = scmp.ne.s32.totalorder %s125, %s126
      %p135 = scmp.eq.s32.totalorder %s26, 0
      %p136 = por %p134, %p135
      %p137 = scmp.ne.s32.totalorder %s125, %s126
      %p138 = scmp.eq.s32.totalorder %s27, 1
      %p139 = por %p137, %p138
      %p141 = scmp.ne.s32.totalorder %s126, %s140
      %p142 = scmp.eq.s32.totalorder %s27, 0
      %p143 = por %p141, %p142
      %s145 = sadd.s32 %s144, 1
      %p148 = scmp.eq.s32.totalorder %s21, 1
      %p149 = scmp.ne.s32.totalorder %s144, %s146
      %p150 = scmp.eq.s32.totalorder %s21, 0
      %p151 = por %p149, %p150
      %p152 = scmp.ne.s32.totalorder %s144, %s146
      %p153 = scmp.eq.s32.totalorder %s26, 1
      %p154 = por %p152, %p153
      %p155 = scmp.ne.s32.totalorder %s146, %s147
      %p156 = scmp.eq.s32.totalorder %s26, 0
      %p157 = por %p155, %p156
      %p158 = scmp.ne.s32.totalorder %s146, %s147
      %p159 = scmp.eq.s32.totalorder %s27, 1
      %p160 = por %p158, %p159
      %p162 = scmp.ne.s32.totalorder %s147, %s161
      %p163 = scmp.eq.s32.totalorder %s27, 0
      %p164 = por %p162, %p163
      %s166 = sadd.s32 %s165, 1
      %p169 = scmp.eq.s32.totalorder %s21, 1
      %p170 = scmp.ne.s32.totalorder %s165, %s167
      %p171 = scmp.eq.s32.totalorder %s21, 0
      %p172 = por %p170, %p171
      %p173 = scmp.ne.s32.totalorder %s165, %s167
      %p174 = scmp.eq.s32.totalorder %s26, 1
      %p175 = por %p173, %p174
      %p176 = scmp.ne.s32.totalorder %s167, %s168
      %p177 = scmp.eq.s32.totalorder %s26, 0
      %p178 = por %p176, %p177
      %p179 = scmp.ne.s32.totalorder %s167, %s168
      %p180 = scmp.eq.s32.totalorder %s27, 1
      %p181 = por %p179, %p180
      %p183 = scmp.ne.s32.totalorder %s168, %s182
      %p184 = scmp.eq.s32.totalorder %s27, 0
      %p185 = por %p183, %p184
      %s187 = sadd.s32 %s186, 1
      %p190 = scmp.eq.s32.totalorder %s21, 1
      %p191 = scmp.ne.s32.totalorder %s186, %s188
      %p192 = scmp.eq.s32.totalorder %s21, 0
      %p193 = por %p191, %p192
      %p194 = scmp.ne.s32.totalorder %s186, %s188
      %p195 = scmp.eq.s32.totalorder %s26, 1
      %p196 = por %p194, %p195
      %p197 = scmp.ne.s32.totalorder %s188, %s189
      %p198 = scmp.eq.s32.totalorder %s26, 0
      %p199 = por %p197, %p198
      %p200 = scmp.ne.s32.totalorder %s188, %s189
      %p201 = scmp.eq.s32.totalorder %s27, 1
      %p202 = por %p200, %p201
      %p204 = scmp.ne.s32.totalorder %s189, %s203
      %p205 = scmp.eq.s32.totalorder %s27, 0
      %p206 = por %p204, %p205
      %s208 = sadd.s32 %s207, 1
      %p211 = scmp.eq.s32.totalorder %s21, 1
      %p212 = scmp.ne.s32.totalorder %s207, %s209
      %p213 = scmp.eq.s32.totalorder %s21, 0
      %p214 = por %p212, %p213
      %p215 = scmp.ne.s32.totalorder %s207, %s209
      %p216 = scmp.eq.s32.totalorder %s26, 1
      %p217 = por %p215, %p216
      %p218 = scmp.ne.s32.totalorder %s209, %s210
      %p219 = scmp.eq.s32.totalorder %s26, 0
      %p220 = por %p218, %p219
      %p221 = scmp.ne.s32.totalorder %s209, %s210
      %p222 = scmp.eq.s32.totalorder %s27, 1
      %p223 = por %p221, %p222
      %p225 = scmp.ne.s32.totalorder %s210, %s224
      %p226 = scmp.eq.s32.totalorder %s27, 0
      %p227 = por %p225, %p226
      %s229 = sadd.s32 %s228, 1
      %p232 = scmp.eq.s32.totalorder %s21, 1
      %p233 = scmp.ne.s32.totalorder %s228, %s230
      %p234 = scmp.eq.s32.totalorder %s21, 0
      %p235 = por %p233, %p234
      %p236 = scmp.ne.s32.totalorder %s228, %s230
      %p237 = scmp.eq.s32.totalorder %s26, 1
      %p238 = por %p236, %p237
      %p239 = scmp.ne.s32.totalorder %s230, %s231
      %p240 = scmp.eq.s32.totalorder %s26, 0
      %p241 = por %p239, %p240
      %p242 = scmp.ne.s32.totalorder %s230, %s231
      %p243 = scmp.eq.s32.totalorder %s27, 1
      %p244 = por %p242, %p243
      %p246 = scmp.ne.s32.totalorder %s231, %s245
      %p247 = scmp.eq.s32.totalorder %s27, 0
      %p248 = por %p246, %p247
      %s250 = sadd.s32 %s249, 1
      %p253 = scmp.eq.s32.totalorder %s21, 1
      %p254 = scmp.ne.s32.totalorder %s249, %s251
      %p255 = scmp.eq.s32.totalorder %s21, 0
      %p256 = por %p254, %p255
      %p257 = scmp.ne.s32.totalorder %s249, %s251
      %p258 = scmp.eq.s32.totalorder %s26, 1
      %p259 = por %p257, %p258
      %p260 = scmp.ne.s32.totalorder %s251, %s252
      %p261 = scmp.eq.s32.totalorder %s26, 0
      %p262 = por %p260, %p261
      %p263 = scmp.ne.s32.totalorder %s251, %s252
      %p264 = scmp.eq.s32.totalorder %s27, 1
      %p265 = por %p263, %p264
      %p267 = scmp.ne.s32.totalorder %s252, %s266
      %p268 = scmp.eq.s32.totalorder %s27, 0
      %p269 = por %p267, %p268
      %s271 = sadd.s32 %s270, 1
      %p274 = scmp.eq.s32.totalorder %s21, 1
      %p275 = scmp.ne.s32.totalorder %s270, %s272
      %p276 = scmp.eq.s32.totalorder %s21, 0
      %p277 = por %p275, %p276
      %p278 = scmp.ne.s32.totalorder %s270, %s272
      %p279 = scmp.eq.s32.totalorder %s26, 1
      %p280 = por %p278, %p279
      %p281 = scmp.ne.s32.totalorder %s272, %s273
      %p282 = scmp.eq.s32.totalorder %s26, 0
      %p283 = por %p281, %p282
      %p284 = scmp.ne.s32.totalorder %s272, %s273
      %p285 = scmp.eq.s32.totalorder %s27, 1
      %p286 = por %p284, %p285
      %p288 = scmp.ne.s32.totalorder %s273, %s287
      %p289 = scmp.eq.s32.totalorder %s27, 0
      %p290 = por %p288, %p289
      %s291 = ssub.s32 %s21, %s28
      %p292 = scmp.eq.s32.totalorder %s291, 0
      %s294 = sadd.s32 %s293, 1
      %s295 = scalar_select %p292, %s293, %s294
      %p298 = pneg %p292
      %p299 = scmp.eq.s32.totalorder %s21, 1
      %p300 = por %p298, %p299
      %p301 = scmp.ne.s32.totalorder %s293, %s296
      %p302 = scmp.eq.s32.totalorder %s21, 0
      %p303 = por %p301, %p302
      %p304 = scmp.ne.s32.totalorder %s293, %s296
      %p305 = scmp.eq.s32.totalorder %s26, 1
      %p306 = por %p304, %p305
      %p307 = scmp.ne.s32.totalorder %s296, %s297
      %p308 = scmp.eq.s32.totalorder %s26, 0
      %p309 = por %p307, %p308
      %p310 = scmp.ne.s32.totalorder %s296, %s297
      %p311 = scmp.eq.s32.totalorder %s27, 1
      %p312 = por %p310, %p311
      %p314 = scmp.ne.s32.totalorder %s297, %s313
      %p315 = scmp.eq.s32.totalorder %s27, 0
      %p316 = por %p314, %p315
      %p317 = scmp.le.s32.totalorder 1, %s21
      %p318 = scmp.lt.s32.totalorder %s21, 3
      %p319 = pnand %p317, %p318
      %p320 = pneg %p319
      // Predicated region
      $region9: #{sentiment_cnn_lstm_forward.1} parent=5 // pred_check
        _
      $region10: #{sentiment_cnn_lstm_forward.1} parent=5 // pred_check_branch
        %322 = sbr.rel (%p319) target = $region12
      $region11: #{sentiment_cnn_lstm_forward.1} parent=5 // pred_region
        %s323 = ssub.s32 %s21, 1
        // Predicated region
        $region13: #{sentiment_cnn_lstm_forward.1} parent=11 // pred_check
          %p324 = pneg %p94
        $region14: #{sentiment_cnn_lstm_forward.1} parent=11 // pred_check_branch
          %326 = sbr.rel (%p324) target = $region16
        $region15: #{sentiment_cnn_lstm_forward.1} parent=11 // pred_region
          _
        $region16: #{sentiment_cnn_lstm_forward.1} parent=11 // pred_fallthru
          _
        // Predicated region
        $region17: #{sentiment_cnn_lstm_forward.1} parent=11 // pred_check
          %p327 = pneg %p115
        $region18: #{sentiment_cnn_lstm_forward.1} parent=11 // pred_check_branch
          %329 = sbr.rel (%p327) target = $region20
        $region19: #{sentiment_cnn_lstm_forward.1} parent=11 // pred_region
          _
        $region20: #{sentiment_cnn_lstm_forward.1} parent=11 // pred_fallthru
          _
        // Predicated region
        $region21: #{sentiment_cnn_lstm_forward.1} parent=11 // pred_check
          %p330 = pneg %p136
        $region22: #{sentiment_cnn_lstm_forward.1} parent=11 // pred_check_branch
          %332 = sbr.rel (%p330) target = $region24
        $region23: #{sentiment_cnn_lstm_forward.1} parent=11 // pred_region
          _
        $region24: #{sentiment_cnn_lstm_forward.1} parent=11 // pred_fallthru
          _
        // Predicated region
        $region25: #{sentiment_cnn_lstm_forward.1} parent=11 // pred_check
          %p333 = pneg %p157
        $region26: #{sentiment_cnn_lstm_forward.1} parent=11 // pred_check_branch
          %335 = sbr.rel (%p333) target = $region28
        $region27: #{sentiment_cnn_lstm_forward.1} parent=11 // pred_region
          _
        $region28: #{sentiment_cnn_lstm_forward.1} parent=11 // pred_fallthru
          _
        // Predicated region
        $region29: #{sentiment_cnn_lstm_forward.1} parent=11 // pred_check
          %p336 = pneg %p178
        $region30: #{sentiment_cnn_lstm_forward.1} parent=11 // pred_check_branch
          %338 = sbr.rel (%p336) target = $region32
        $region31: #{sentiment_cnn_lstm_forward.1} parent=11 // pred_region
          _
        $region32: #{sentiment_cnn_lstm_forward.1} parent=11 // pred_fallthru
          _
        // Predicated region
        $region33: #{sentiment_cnn_lstm_forward.1} parent=11 // pred_check
          %p339 = pneg %p199
        $region34: #{sentiment_cnn_lstm_forward.1} parent=11 // pred_check_branch
          %341 = sbr.rel (%p339) target = $region36
        $region35: #{sentiment_cnn_lstm_forward.1} parent=11 // pred_region
          _
        $region36: #{sentiment_cnn_lstm_forward.1} parent=11 // pred_fallthru
          _
        // Predicated region
        $region37: #{sentiment_cnn_lstm_forward.1} parent=11 // pred_check
          %p342 = pneg %p220
        $region38: #{sentiment_cnn_lstm_forward.1} parent=11 // pred_check_branch
          %344 = sbr.rel (%p342) target = $region40
        $region39: #{sentiment_cnn_lstm_forward.1} parent=11 // pred_region
          _
        $region40: #{sentiment_cnn_lstm_forward.1} parent=11 // pred_fallthru
          _
        // Predicated region
        $region41: #{sentiment_cnn_lstm_forward.1} parent=11 // pred_check
          %p345 = pneg %p241
        $region42: #{sentiment_cnn_lstm_forward.1} parent=11 // pred_check_branch
          %347 = sbr.rel (%p345) target = $region44
        $region43: #{sentiment_cnn_lstm_forward.1} parent=11 // pred_region
          _
        $region44: #{sentiment_cnn_lstm_forward.1} parent=11 // pred_fallthru
          _
        // Predicated region
        $region45: #{sentiment_cnn_lstm_forward.1} parent=11 // pred_check
          %p348 = pneg %p262
        $region46: #{sentiment_cnn_lstm_forward.1} parent=11 // pred_check_branch
          %350 = sbr.rel (%p348) target = $region48
        $region47: #{sentiment_cnn_lstm_forward.1} parent=11 // pred_region
          _
        $region48: #{sentiment_cnn_lstm_forward.1} parent=11 // pred_fallthru
          _
        // Predicated region
        $region49: #{sentiment_cnn_lstm_forward.1} parent=11 // pred_check
          %p351 = pneg %p283
        $region50: #{sentiment_cnn_lstm_forward.1} parent=11 // pred_check_branch
          %353 = sbr.rel (%p351) target = $region52
        $region51: #{sentiment_cnn_lstm_forward.1} parent=11 // pred_region
          _
        $region52: #{sentiment_cnn_lstm_forward.1} parent=11 // pred_fallthru
          _
      $region12: #{sentiment_cnn_lstm_forward.1} parent=5 // pred_fallthru
        _
      %p354 = scmp.lt.s32.totalorder %s21, 2
      // Predicated region
      $region53: #{sentiment_cnn_lstm_forward.1} parent=5 // pred_check
        %p355 = pneg %p354
      $region54: #{sentiment_cnn_lstm_forward.1} parent=5 // pred_check_branch
        %357 = sbr.rel (%p355) target = $region56
      $region55: #{sentiment_cnn_lstm_forward.1} parent=5 // pred_region
        // Predicated region
        $region57: #{sentiment_cnn_lstm_forward.1} parent=55 // pred_check
          %p358 = pneg %p41
        $region58: #{sentiment_cnn_lstm_forward.1} parent=55 // pred_check_branch
          %360 = sbr.rel (%p358) target = $region60
        $region59: #{sentiment_cnn_lstm_forward.1} parent=55 // pred_region
          %p361 = scmp.lt.s32.totalorder %s21, 1
          %s362 = scalar_select %p361, %s21, 1
          %s363 = smul.addr %s362, 4
          %s364 = scalar_lea.vmem %s0, %s363
        $region60: #{sentiment_cnn_lstm_forward.1} parent=55 // pred_fallthru
          _
        // Predicated region
        $region61: #{sentiment_cnn_lstm_forward.1} parent=55 // pred_check
          %p365 = pneg %p67
        $region62: #{sentiment_cnn_lstm_forward.1} parent=55 // pred_check_branch
          %367 = sbr.rel (%p365) target = $region64
        $region63: #{sentiment_cnn_lstm_forward.1} parent=55 // pred_region
          %p368 = scmp.lt.s32.totalorder %s21, 1
          %s369 = scalar_select %p368, %s21, 1
          %s370 = scalar_lea.vmem %s1, %s369
        $region64: #{sentiment_cnn_lstm_forward.1} parent=55 // pred_fallthru
          _
      $region56: #{sentiment_cnn_lstm_forward.1} parent=5 // pred_fallthru
        _
      %p371 = scmp.le.s32.totalorder 1, %s21
      %p372 = scmp.lt.s32.totalorder %s21, 3
      %p373 = pnand %p371, %p372
      %p374 = pneg %p373
      // Predicated region
      $region65: #{sentiment_cnn_lstm_forward.1} parent=5 // pred_check
        _
      $region66: #{sentiment_cnn_lstm_forward.1} parent=5 // pred_check_branch
        %376 = sbr.rel (%p373) target = $region68
      $region67: #{sentiment_cnn_lstm_forward.1} parent=5 // pred_region
        %s377 = ssub.s32 %s21, 1
        %p378 = scmp.lt.s32.totalorder %s26, 1
        %s379 = scalar_select %p378, %s26, 1
        %s380 = smul.addr %s379, 4
        %s381 = scalar_lea.vmem %s0, %s380
        %p382 = pneg %p47
        %p383 = pneg %p44
        %p384 = scmp.lt.s32.totalorder %s26, 1
        %s385 = scalar_select %p384, %s26, 1
        %s386 = scalar_lea.vmem %s1, %s385
        %p387 = pneg %p73
        %p388 = pneg %p70
        %p389 = pneg %p94
        %p390 = pneg %p91
        %p391 = pneg %p115
        %p392 = pneg %p112
        %p393 = pneg %p136
        %p394 = pneg %p133
        %p395 = pneg %p157
        %p396 = pneg %p154
        %p397 = pneg %p178
        %p398 = pneg %p175
        %p399 = pneg %p199
        %p400 = pneg %p196
        %p401 = pneg %p220
        %p402 = pneg %p217
        %p403 = pneg %p241
        %p404 = pneg %p238
        %p405 = pneg %p262
        %p406 = pneg %p259
        %p407 = pneg %p283
        %p408 = pneg %p280
        %p409 = pneg %p309
        %p410 = pneg %p306
        %s411 = sand.u32 %s296, 1
        %s412 = scalar_lea.sflag [#allocation5], %s411
        %s413 = sand.u32 %s296, 1
        %s414 = scalar_lea.vmem [#allocation4], %s413
        %p415 = scmp.lt.s32.totalorder %s26, 1
        %s416 = scalar_select %p415, %s26, 1
        %s417 = smul.addr %s416, 4
        %s418 = scalar_lea.vmem %s0, %s417
        %p419 = scmp.lt.s32.totalorder %s26, 1
        %s420 = scalar_select %p419, %s26, 1
        %s421 = scalar_lea.vmem %s1, %s420
        %v423 = vld [vmem:[%s418] sm:$0xf]
        %v424 = vld [vmem:[%s2] sm:$0xf]
        %v425 = vld [vmem:[%s2 + $0x4] sm:$0xf]
        %v426 = vld [vmem:[%s2 + $0x8] sm:$0xf]
        %v427 = vld [vmem:[%s2 + $0xc] sm:$0xf]
        %v428 = vld [vmem:[%s2 + $0x10] sm:$0xf]
        %v429 = vld [vmem:[%s2 + $0x14] sm:$0xf]
        %v430 = vld [vmem:[%s3] sm:$0x1]
        %v432 = vlaneseq
        %v433 = vshrl.u32 %v432, 7
        %v434 = vsub.s32 0, %v433
        %v435 = vrot.slane %v430, %v434
        %v443 = vunpack.c.l.b16 %v424
        %v444 = vunpack.c.l.b16 %v425
        %v445 = vunpack.c.l.b16 %v426
        %v446 = vunpack.c.l.b16 %v427
        %v447 = vunpack.c.l.b16 %v428
        %v448 = vunpack.c.l.b16 %v429
        %v449 = vpack.c.b16 %v444, %v443
        %v450 = vpack.c.b16 %v446, %v445
        %v451 = vpack.c.b16 %v448, %v447
        %vm455 = vcmask 392192
        %v457 = vsel %vm455, %v423, 0
        %459 = vmatprep.subr.bf16.mxu0 0
        %460 = vmatpush1.bf16.msra.mxu0 0
        %461 = vmatprep.subr.bf16.mxu0 0
        %462 = vmatpush1.bf16.msra.mxu0 0
        %463 = vmatprep.subr.bf16.mxu0 0
        %464 = vmatpush1.bf16.msra.mxu0 0
        %465 = vmatprep.subr.bf16.mxu0 0
        %466 = vmatpush1.bf16.msra.mxu0 0
        %467 = vmatprep.subr.bf16.mxu0 0
        %468 = vmatpush1.bf16.msra.mxu0 0
        %469 = vmatprep.subr.bf16.mxu0 0
        %470 = vmatpush1.bf16.msra.mxu0 %v451
        %471 = vmatprep.subr.bf16.mxu0 0
        %472 = vmatpush1.bf16.msra.mxu0 %v450
        %473 = vmatprep.subr.bf16.mxu0 0
        %474 = vmatpush1.bf16.msra.mxu0 %v449
        %475 = vmatprep.subr.bf16.mxu0 0
        %476 = vmatpush2.bf16.msra.mxu0 0
        %477 = vmatprep.subr.bf16.mxu0 0
        %478 = vmatpush2.bf16.msra.mxu0 0
        %479 = vmatprep.subr.bf16.mxu0 0
        %480 = vmatpush2.bf16.msra.mxu0 0
        %481 = vmatprep.subr.bf16.mxu0 0
        %482 = vmatpush2.bf16.msra.mxu0 0
        %483 = vmatprep.subr.bf16.mxu0 0
        %484 = vmatpush2.bf16.msra.mxu0 0
        %485 = vmatprep.subr.bf16.mxu0 0
        %486 = vmatpush2.bf16.msra.mxu0 0
        %487 = vmatprep.subr.bf16.mxu0 0
        %488 = vmatpush2.bf16.msra.mxu0 0
        %489 = vmatprep.subr.bf16.mxu0 0
        %490 = vmatpush2.bf16.msra.mxu0 0
        %491 = vmatprep.mubr.bf16.mxu0 0
        %492 = vmatmul.mubr.bf16.gmra.mxu0 %v457
        %v493 = vpop.f32.mrf.mxu0
        %v494 = vadd.f32 %v435, %v493
        %v495 = vpop.f32.mrf.mxu0
        %v496 = vpop.f32.mrf.mxu0
        %v497 = vpop.f32.mrf.mxu0
        %498 = vdwg.mxu0
        %v499 = vmax.f32 %v494, 0.0
        %v501 = vcombine.high %v499, %v499
        %v503 = vunpack.c.l.s4 1983009808
        %v504 = vunpack.c.0.s8 %v503
        %v505 = vlaneseq
        %v506 = vshrl.u32 %v505, 7
        %v507 = vsub.s32 %v504, %v506
        %v508 = vrot.slane %v499, %v507
        %v510 = vunpack.c.l.s4 1983009808
        %v511 = vunpack.c.0.s8 %v510
        %v512 = vlaneseq
        %v513 = vshrl.u32 %v512, 7
        %v514 = vsub.s32 %v511, %v513
        %v515 = vrot.slane %v501, %v514
        %v516 = vcombine.high %v508, %v508
        %v517 = vcombine.high %v515, %v515
        %v522 = vrot.slane %v508, 7
        %v523 = vrot.slane %v522, 2
        %v524 = vrot.slane %v516, 7
        %v525 = vrot.slane %v524, 2
        %v526 = vrot.slane %v515, 7
        %v527 = vrot.slane %v526, 2
        %v528 = vrot.slane %v517, 7
        %v529 = vrot.slane %v528, 2
        %v534 = vmax.f32 %v508, %v523
        %v535 = vmax.f32 %v516, %v525
        %v536 = vmax.f32 %v515, %v527
        %v537 = vmax.f32 %v517, %v529
        %v538 = vpack.c.bf16 %v534, %v534
        %v539 = vpack.c.bf16 %v535, %v535
        %v540 = vpack.c.bf16 %v536, %v536
        %v541 = vpack.c.bf16 %v537, %v537
        %v542 = vld [vmem:[%s4] sm:$0xff]
        %v543 = vld [vmem:[%s4 + $0x8] sm:$0xff]
        %v544 = vld [vmem:[%s4 + $0x10] sm:$0xff]
        %v545 = vld [vmem:[%s4 + $0x18] sm:$0xff]
        %v546 = vld [vmem:[%s4 + $0x20] sm:$0xff]
        %v547 = vld [vmem:[%s4 + $0x28] sm:$0xff]
        %v548 = vld [vmem:[%s4 + $0x30] sm:$0xff]
        %v549 = vld [vmem:[%s4 + $0x38] sm:$0xff]
        %v550 = vld [vmem:[%s4 + $0x40] sm:$0xff]
        %v551 = vld [vmem:[%s4 + $0x48] sm:$0xff]
        %v552 = vld [vmem:[%s4 + $0x50] sm:$0xff]
        %v553 = vld [vmem:[%s4 + $0x58] sm:$0xff]
        %v554 = vld [vmem:[%s4 + $0x60] sm:$0xff]
        %v555 = vld [vmem:[%s4 + $0x68] sm:$0xff]
        %v556 = vld [vmem:[%s4 + $0x70] sm:$0xff]
        %v557 = vld [vmem:[%s4 + $0x78] sm:$0xff]
        %v558 = vld [vmem:[%s4 + $0x80] sm:$0xff]
        %v559 = vld [vmem:[%s4 + $0x88] sm:$0xff]
        %v560 = vld [vmem:[%s4 + $0x90] sm:$0xff]
        %v561 = vld [vmem:[%s4 + $0x98] sm:$0xff]
        %v562 = vld [vmem:[%s4 + $0xa0] sm:$0xff]
        %v563 = vld [vmem:[%s4 + $0xa8] sm:$0xff]
        %v564 = vld [vmem:[%s4 + $0xb0] sm:$0xff]
        %v565 = vld [vmem:[%s4 + $0xb8] sm:$0xff]
        %v566 = vld [vmem:[%s4 + $0xc0] sm:$0xff]
        %v567 = vld [vmem:[%s4 + $0xc8] sm:$0xff]
        %v568 = vld [vmem:[%s4 + $0xd0] sm:$0xff]
        %v569 = vld [vmem:[%s4 + $0xd8] sm:$0xff]
        %v570 = vld [vmem:[%s4 + $0xe0] sm:$0xff]
        %v571 = vld [vmem:[%s4 + $0xe8] sm:$0xff]
        %v572 = vld [vmem:[%s4 + $0xf0] sm:$0xff]
        %v573 = vld [vmem:[%s4 + $0xf8] sm:$0xff]
        %v574 = vld [vmem:[%s6] sm:$0xf]
        %v576 = vlaneseq
        %v577 = vshrl.u32 %v576, 7
        %v578 = vsub.s32 0, %v577
        %v579 = vrot.slane %v574, %v578
        %v580 = vlaneseq
        %v581 = vshrl.u32 %v580, 7
        %v582 = vsub.s32 1, %v581
        %v583 = vrot.slane %v574, %v582
        %v584 = vlaneseq
        %v585 = vshrl.u32 %v584, 7
        %v586 = vsub.s32 2, %v585
        %v587 = vrot.slane %v574, %v586
        %v588 = vlaneseq
        %v589 = vshrl.u32 %v588, 7
        %v590 = vsub.s32 3, %v589
        %v591 = vrot.slane %v574, %v590
        %v600 = vunpack.c.l.b16 %v538
        %v601 = vunpack.c.l.b16 %v539
        %v602 = vunpack.c.l.b16 %v540
        %v603 = vunpack.c.l.b16 %v541
        %v604 = vrot.slane %v601, 7
        %vm605 = vcmask 1041409
        %v606 = vsel %vm605, %v604, %v600
        %v607 = vrot.slane %v602, 6
        %vm608 = vcmask 1042434
        %v609 = vsel %vm608, %v607, %v606
        %v610 = vrot.slane %v603, 5
        %vm611 = vcmask 1043459
        %v612 = vsel %vm611, %v610, %v609
        %v613 = vpack.c.b16 %v612, %v612
        %v647 = vunpack.c.l.b16 %v542
        %v648 = vunpack.c.h.b16 %v542
        %v649 = vunpack.c.l.b16 %v543
        %v650 = vunpack.c.h.b16 %v543
        %v651 = vunpack.c.l.b16 %v544
        %v652 = vunpack.c.h.b16 %v544
        %v653 = vunpack.c.l.b16 %v545
        %v654 = vunpack.c.h.b16 %v545
        %v655 = vunpack.c.l.b16 %v546
        %v656 = vunpack.c.h.b16 %v546
        %v657 = vunpack.c.l.b16 %v547
        %v658 = vunpack.c.h.b16 %v547
        %v659 = vunpack.c.l.b16 %v548
        %v660 = vunpack.c.h.b16 %v548
        %v661 = vunpack.c.l.b16 %v549
        %v662 = vunpack.c.h.b16 %v549
        %v663 = vunpack.c.l.b16 %v550
        %v664 = vunpack.c.h.b16 %v550
        %v665 = vunpack.c.l.b16 %v551
        %v666 = vunpack.c.h.b16 %v551
        %v667 = vunpack.c.l.b16 %v552
        %v668 = vunpack.c.h.b16 %v552
        %v669 = vunpack.c.l.b16 %v553
        %v670 = vunpack.c.h.b16 %v553
        %v671 = vunpack.c.l.b16 %v554
        %v672 = vunpack.c.h.b16 %v554
        %v673 = vunpack.c.l.b16 %v555
        %v674 = vunpack.c.h.b16 %v555
        %v675 = vunpack.c.l.b16 %v556
        %v676 = vunpack.c.h.b16 %v556
        %v677 = vunpack.c.l.b16 %v557
        %v678 = vunpack.c.h.b16 %v557
        %v679 = vunpack.c.l.b16 %v558
        %v680 = vunpack.c.h.b16 %v558
        %v681 = vunpack.c.l.b16 %v559
        %v682 = vunpack.c.h.b16 %v559
        %v683 = vunpack.c.l.b16 %v560
        %v684 = vunpack.c.h.b16 %v560
        %v685 = vunpack.c.l.b16 %v561
        %v686 = vunpack.c.h.b16 %v561
        %v687 = vunpack.c.l.b16 %v562
        %v688 = vunpack.c.h.b16 %v562
        %v689 = vunpack.c.l.b16 %v563
        %v690 = vunpack.c.h.b16 %v563
        %v691 = vunpack.c.l.b16 %v564
        %v692 = vunpack.c.h.b16 %v564
        %v693 = vunpack.c.l.b16 %v565
        %v694 = vunpack.c.h.b16 %v565
        %v695 = vunpack.c.l.b16 %v566
        %v696 = vunpack.c.h.b16 %v566
        %v697 = vunpack.c.l.b16 %v567
        %v698 = vunpack.c.h.b16 %v567
        %v699 = vunpack.c.l.b16 %v568
        %v700 = vunpack.c.h.b16 %v568
        %v701 = vunpack.c.l.b16 %v569
        %v702 = vunpack.c.h.b16 %v569
        %v703 = vunpack.c.l.b16 %v570
        %v704 = vunpack.c.h.b16 %v570
        %v705 = vunpack.c.l.b16 %v571
        %v706 = vunpack.c.h.b16 %v571
        %v707 = vunpack.c.l.b16 %v572
        %v708 = vunpack.c.h.b16 %v572
        %v709 = vunpack.c.l.b16 %v573
        %v710 = vunpack.c.h.b16 %v573
        %v711 = vpack.c.b16 %v651, %v647
        %v712 = vpack.c.b16 %v652, %v648
        %v713 = vpack.c.b16 %v653, %v649
        %v714 = vpack.c.b16 %v654, %v650
        %v715 = vpack.c.b16 %v659, %v655
        %v716 = vpack.c.b16 %v660, %v656
        %v717 = vpack.c.b16 %v661, %v657
        %v718 = vpack.c.b16 %v662, %v658
        %v719 = vpack.c.b16 %v667, %v663
        %v720 = vpack.c.b16 %v668, %v664
        %v721 = vpack.c.b16 %v669, %v665
        %v722 = vpack.c.b16 %v670, %v666
        %v723 = vpack.c.b16 %v675, %v671
        %v724 = vpack.c.b16 %v676, %v672
        %v725 = vpack.c.b16 %v677, %v673
        %v726 = vpack.c.b16 %v678, %v674
        %v727 = vpack.c.b16 %v683, %v679
        %v728 = vpack.c.b16 %v684, %v680
        %v729 = vpack.c.b16 %v685, %v681
        %v730 = vpack.c.b16 %v686, %v682
        %v731 = vpack.c.b16 %v691, %v687
        %v732 = vpack.c.b16 %v692, %v688
        %v733 = vpack.c.b16 %v693, %v689
        %v734 = vpack.c.b16 %v694, %v690
        %v735 = vpack.c.b16 %v699, %v695
        %v736 = vpack.c.b16 %v700, %v696
        %v737 = vpack.c.b16 %v701, %v697
        %v738 = vpack.c.b16 %v702, %v698
        %v739 = vpack.c.b16 %v707, %v703
        %v740 = vpack.c.b16 %v708, %v704
        %v741 = vpack.c.b16 %v709, %v705
        %v742 = vpack.c.b16 %v710, %v706
        %775 = vmatprep.subr.bf16.mxu0 %v740
        %776 = vmatpush1.bf16.msra.mxu0 %v739
        %777 = vmatprep.subr.bf16.mxu0 %v736
        %778 = vmatpush1.bf16.msra.mxu0 %v735
        %779 = vmatprep.subr.bf16.mxu0 %v732
        %780 = vmatpush1.bf16.msra.mxu0 %v731
        %781 = vmatprep.subr.bf16.mxu0 %v728
        %782 = vmatpush1.bf16.msra.mxu0 %v727
        %783 = vmatprep.subr.bf16.mxu0 %v724
        %784 = vmatpush1.bf16.msra.mxu0 %v723
        %785 = vmatprep.subr.bf16.mxu0 %v720
        %786 = vmatpush1.bf16.msra.mxu0 %v719
        %787 = vmatprep.subr.bf16.mxu0 %v716
        %788 = vmatpush1.bf16.msra.mxu0 %v715
        %789 = vmatprep.subr.bf16.mxu0 %v712
        %790 = vmatpush1.bf16.msra.mxu0 %v711
        %791 = vmatprep.subr.bf16.mxu0 0
        %792 = vmatpush2.bf16.msra.mxu0 0
        %793 = vmatprep.subr.bf16.mxu0 0
        %794 = vmatpush2.bf16.msra.mxu0 0
        %795 = vmatprep.subr.bf16.mxu0 0
        %796 = vmatpush2.bf16.msra.mxu0 0
        %797 = vmatprep.subr.bf16.mxu0 0
        %798 = vmatpush2.bf16.msra.mxu0 0
        %799 = vmatprep.subr.bf16.mxu0 0
        %800 = vmatpush2.bf16.msra.mxu0 0
        %801 = vmatprep.subr.bf16.mxu0 0
        %802 = vmatpush2.bf16.msra.mxu0 0
        %803 = vmatprep.subr.bf16.mxu0 0
        %804 = vmatpush2.bf16.msra.mxu0 0
        %805 = vmatprep.subr.bf16.mxu0 0
        %806 = vmatpush2.bf16.msra.mxu0 0
        %807 = vmatprep.mubr.bf16.mxu0 0
        %808 = vmatmul.mubr.bf16.gmra.mxu0 %v613
        %v809 = vpop.f32.mrf.mxu0
        %v810 = vadd.f32 %v579, %v809
        %v811 = vpop.f32.mrf.mxu0
        %v812 = vadd.f32 %v583, %v811
        %v813 = vpop.f32.mrf.mxu0
        %v814 = vpop.f32.mrf.mxu0
        %815 = vdwg.mxu0
        %816 = vmatprep.subr.bf16.mxu0 %v742
        %817 = vmatpush1.bf16.msra.mxu0 %v741
        %818 = vmatprep.subr.bf16.mxu0 %v738
        %819 = vmatpush1.bf16.msra.mxu0 %v737
        %820 = vmatprep.subr.bf16.mxu0 %v734
        %821 = vmatpush1.bf16.msra.mxu0 %v733
        %822 = vmatprep.subr.bf16.mxu0 %v730
        %823 = vmatpush1.bf16.msra.mxu0 %v729
        %824 = vmatprep.subr.bf16.mxu0 %v726
        %825 = vmatpush1.bf16.msra.mxu0 %v725
        %826 = vmatprep.subr.bf16.mxu0 %v722
        %827 = vmatpush1.bf16.msra.mxu0 %v721
        %828 = vmatprep.subr.bf16.mxu0 %v718
        %829 = vmatpush1.bf16.msra.mxu0 %v717
        %830 = vmatprep.subr.bf16.mxu0 %v714
        %831 = vmatpush1.bf16.msra.mxu0 %v713
        %832 = vmatprep.subr.bf16.mxu0 0
        %833 = vmatpush2.bf16.msra.mxu0 0
        %834 = vmatprep.subr.bf16.mxu0 0
        %835 = vmatpush2.bf16.msra.mxu0 0
        %836 = vmatprep.subr.bf16.mxu0 0
        %837 = vmatpush2.bf16.msra.mxu0 0
        %838 = vmatprep.subr.bf16.mxu0 0
        %839 = vmatpush2.bf16.msra.mxu0 0
        %840 = vmatprep.subr.bf16.mxu0 0
        %841 = vmatpush2.bf16.msra.mxu0 0
        %842 = vmatprep.subr.bf16.mxu0 0
        %843 = vmatpush2.bf16.msra.mxu0 0
        %844 = vmatprep.subr.bf16.mxu0 0
        %845 = vmatpush2.bf16.msra.mxu0 0
        %846 = vmatprep.subr.bf16.mxu0 0
        %847 = vmatpush2.bf16.msra.mxu0 0
        %848 = vmatprep.mubr.bf16.mxu0 0
        %849 = vmatmul.mubr.bf16.gmra.mxu0 %v613
        %v850 = vpop.f32.mrf.mxu0
        %v851 = vadd.f32 %v587, %v850
        %v852 = vpop.f32.mrf.mxu0
        %v853 = vadd.f32 %v591, %v852
        %v854 = vpop.f32.mrf.mxu0
        %v855 = vpop.f32.mrf.mxu0
        %856 = vdwg.mxu0
        %v861 = vcombine.low %v810, %v812
        %v862 = vcombine.low %v851, %v853
        %865 = vst [vmem:[#allocation2] sm:$0xff] %v861
        %866 = vst [vmem:[#allocation2 + $0x8] sm:$0xff] %v862
        %v867 = vld [vmem:[#allocation2] ss:$4 sm:$0xf]
        %v868 = vld [vmem:[%s5] sm:$0xff]
        %v869 = vld [vmem:[%s5 + $0x8] sm:$0xff]
        %v870 = vld [vmem:[%s5 + $0x10] sm:$0xff]
        %v871 = vld [vmem:[%s5 + $0x18] sm:$0xff]
        %v872 = vld [vmem:[%s5 + $0x20] sm:$0xff]
        %v873 = vld [vmem:[%s5 + $0x28] sm:$0xff]
        %v874 = vld [vmem:[%s5 + $0x30] sm:$0xff]
        %v875 = vld [vmem:[%s5 + $0x38] sm:$0xff]
        %v876 = vld [vmem:[%s5 + $0x40] sm:$0xff]
        %v877 = vld [vmem:[%s5 + $0x48] sm:$0xff]
        %v878 = vld [vmem:[%s5 + $0x50] sm:$0xff]
        %v879 = vld [vmem:[%s5 + $0x58] sm:$0xff]
        %v880 = vld [vmem:[%s5 + $0x60] sm:$0xff]
        %v881 = vld [vmem:[%s5 + $0x68] sm:$0xff]
        %v882 = vld [vmem:[%s5 + $0x70] sm:$0xff]
        %v883 = vld [vmem:[%s5 + $0x78] sm:$0xff]
        %v884 = vld [vmem:[%s5 + $0x80] sm:$0xff]
        %v885 = vld [vmem:[%s5 + $0x88] sm:$0xff]
        %v886 = vld [vmem:[%s5 + $0x90] sm:$0xff]
        %v887 = vld [vmem:[%s5 + $0x98] sm:$0xff]
        %v888 = vld [vmem:[%s5 + $0xa0] sm:$0xff]
        %v889 = vld [vmem:[%s5 + $0xa8] sm:$0xff]
        %v890 = vld [vmem:[%s5 + $0xb0] sm:$0xff]
        %v891 = vld [vmem:[%s5 + $0xb8] sm:$0xff]
        %v892 = vld [vmem:[%s5 + $0xc0] sm:$0xff]
        %v893 = vld [vmem:[%s5 + $0xc8] sm:$0xff]
        %v894 = vld [vmem:[%s5 + $0xd0] sm:$0xff]
        %v895 = vld [vmem:[%s5 + $0xd8] sm:$0xff]
        %v896 = vld [vmem:[%s5 + $0xe0] sm:$0xff]
        %v897 = vld [vmem:[%s5 + $0xe8] sm:$0xff]
        %v898 = vld [vmem:[%s5 + $0xf0] sm:$0xff]
        %v899 = vld [vmem:[%s5 + $0xf8] sm:$0xff]
        %v932 = vunpack.c.l.b16 %v868
        %v933 = vunpack.c.h.b16 %v868
        %v934 = vunpack.c.l.b16 %v869
        %v935 = vunpack.c.h.b16 %v869
        %v936 = vunpack.c.l.b16 %v870
        %v937 = vunpack.c.h.b16 %v870
        %v938 = vunpack.c.l.b16 %v871
        %v939 = vunpack.c.h.b16 %v871
        %v940 = vunpack.c.l.b16 %v872
        %v941 = vunpack.c.h.b16 %v872
        %v942 = vunpack.c.l.b16 %v873
        %v943 = vunpack.c.h.b16 %v873
        %v944 = vunpack.c.l.b16 %v874
        %v945 = vunpack.c.h.b16 %v874
        %v946 = vunpack.c.l.b16 %v875
        %v947 = vunpack.c.h.b16 %v875
        %v948 = vunpack.c.l.b16 %v876
        %v949 = vunpack.c.h.b16 %v876
        %v950 = vunpack.c.l.b16 %v877
        %v951 = vunpack.c.h.b16 %v877
        %v952 = vunpack.c.l.b16 %v878
        %v953 = vunpack.c.h.b16 %v878
        %v954 = vunpack.c.l.b16 %v879
        %v955 = vunpack.c.h.b16 %v879
        %v956 = vunpack.c.l.b16 %v880
        %v957 = vunpack.c.h.b16 %v880
        %v958 = vunpack.c.l.b16 %v881
        %v959 = vunpack.c.h.b16 %v881
        %v960 = vunpack.c.l.b16 %v882
        %v961 = vunpack.c.h.b16 %v882
        %v962 = vunpack.c.l.b16 %v883
        %v963 = vunpack.c.h.b16 %v883
        %v964 = vunpack.c.l.b16 %v884
        %v965 = vunpack.c.h.b16 %v884
        %v966 = vunpack.c.l.b16 %v885
        %v967 = vunpack.c.h.b16 %v885
        %v968 = vunpack.c.l.b16 %v886
        %v969 = vunpack.c.h.b16 %v886
        %v970 = vunpack.c.l.b16 %v887
        %v971 = vunpack.c.h.b16 %v887
        %v972 = vunpack.c.l.b16 %v888
        %v973 = vunpack.c.h.b16 %v888
        %v974 = vunpack.c.l.b16 %v889
        %v975 = vunpack.c.h.b16 %v889
        %v976 = vunpack.c.l.b16 %v890
        %v977 = vunpack.c.h.b16 %v890
        %v978 = vunpack.c.l.b16 %v891
        %v979 = vunpack.c.h.b16 %v891
        %v980 = vunpack.c.l.b16 %v892
        %v981 = vunpack.c.h.b16 %v892
        %v982 = vunpack.c.l.b16 %v893
        %v983 = vunpack.c.h.b16 %v893
        %v984 = vunpack.c.l.b16 %v894
        %v985 = vunpack.c.h.b16 %v894
        %v986 = vunpack.c.l.b16 %v895
        %v987 = vunpack.c.h.b16 %v895
        %v988 = vunpack.c.l.b16 %v896
        %v989 = vunpack.c.h.b16 %v896
        %v990 = vunpack.c.l.b16 %v897
        %v991 = vunpack.c.h.b16 %v897
        %v992 = vunpack.c.l.b16 %v898
        %v993 = vunpack.c.h.b16 %v898
        %v994 = vunpack.c.l.b16 %v899
        %v995 = vunpack.c.h.b16 %v899
        %v996 = vpack.c.b16 %v936, %v932
        %v997 = vpack.c.b16 %v937, %v933
        %v998 = vpack.c.b16 %v938, %v934
        %v999 = vpack.c.b16 %v939, %v935
        %v1000 = vpack.c.b16 %v944, %v940
        %v1001 = vpack.c.b16 %v945, %v941
        %v1002 = vpack.c.b16 %v946, %v942
        %v1003 = vpack.c.b16 %v947, %v943
        %v1004 = vpack.c.b16 %v952, %v948
        %v1005 = vpack.c.b16 %v953, %v949
        %v1006 = vpack.c.b16 %v954, %v950
        %v1007 = vpack.c.b16 %v955, %v951
        %v1008 = vpack.c.b16 %v960, %v956
        %v1009 = vpack.c.b16 %v961, %v957
        %v1010 = vpack.c.b16 %v962, %v958
        %v1011 = vpack.c.b16 %v963, %v959
        %v1012 = vpack.c.b16 %v968, %v964
        %v1013 = vpack.c.b16 %v969, %v965
        %v1014 = vpack.c.b16 %v970, %v966
        %v1015 = vpack.c.b16 %v971, %v967
        %v1016 = vpack.c.b16 %v976, %v972
        %v1017 = vpack.c.b16 %v977, %v973
        %v1018 = vpack.c.b16 %v978, %v974
        %v1019 = vpack.c.b16 %v979, %v975
        %v1020 = vpack.c.b16 %v984, %v980
        %v1021 = vpack.c.b16 %v985, %v981
        %v1022 = vpack.c.b16 %v986, %v982
        %v1023 = vpack.c.b16 %v987, %v983
        %v1024 = vpack.c.b16 %v992, %v988
        %v1025 = vpack.c.b16 %v993, %v989
        %v1026 = vpack.c.b16 %v994, %v990
        %v1027 = vpack.c.b16 %v995, %v991
        %1060 = vmatprep.subr.bf16.mxu0 %v1025
        %1061 = vmatpush1.bf16.msra.mxu0 %v1024
        %1062 = vmatprep.subr.bf16.mxu0 %v1021
        %1063 = vmatpush1.bf16.msra.mxu0 %v1020
        %1064 = vmatprep.subr.bf16.mxu0 %v1017
        %1065 = vmatpush1.bf16.msra.mxu0 %v1016
        %1066 = vmatprep.subr.bf16.mxu0 %v1013
        %1067 = vmatpush1.bf16.msra.mxu0 %v1012
        %1068 = vmatprep.subr.bf16.mxu0 %v1009
        %1069 = vmatpush1.bf16.msra.mxu0 %v1008
        %1070 = vmatprep.subr.bf16.mxu0 %v1005
        %1071 = vmatpush1.bf16.msra.mxu0 %v1004
        %1072 = vmatprep.subr.bf16.mxu0 %v1001
        %1073 = vmatpush1.bf16.msra.mxu0 %v1000
        %1074 = vmatprep.subr.bf16.mxu0 %v997
        %1075 = vmatpush1.bf16.msra.mxu0 %v996
        %1076 = vmatprep.subr.bf16.mxu0 0
        %1077 = vmatpush2.bf16.msra.mxu0 0
        %1078 = vmatprep.subr.bf16.mxu0 0
        %1079 = vmatpush2.bf16.msra.mxu0 0
        %1080 = vmatprep.subr.bf16.mxu0 0
        %1081 = vmatpush2.bf16.msra.mxu0 0
        %1082 = vmatprep.subr.bf16.mxu0 0
        %1083 = vmatpush2.bf16.msra.mxu0 0
        %1084 = vmatprep.subr.bf16.mxu0 0
        %1085 = vmatpush2.bf16.msra.mxu0 0
        %1086 = vmatprep.subr.bf16.mxu0 0
        %1087 = vmatpush2.bf16.msra.mxu0 0
        %1088 = vmatprep.subr.bf16.mxu0 0
        %1089 = vmatpush2.bf16.msra.mxu0 0
        %1090 = vmatprep.subr.bf16.mxu0 0
        %1091 = vmatpush2.bf16.msra.mxu0 0
        %1092 = vmatprep.mubr.bf16.mxu0 0
        %1093 = vmatmul.mubr.bf16.gmra.mxu0 0
        %v1094 = vpop.f32.mrf.mxu0
        %v1095 = vadd.f32 0.0, %v1094
        %v1096 = vpop.f32.mrf.mxu0
        %v1097 = vadd.f32 0.0, %v1096
        %v1098 = vpop.f32.mrf.mxu0
        %v1099 = vpop.f32.mrf.mxu0
        %1100 = vdwg.mxu0
        %1101 = vmatprep.subr.bf16.mxu0 %v1027
        %1102 = vmatpush1.bf16.msra.mxu0 %v1026
        %1103 = vmatprep.subr.bf16.mxu0 %v1023
        %1104 = vmatpush1.bf16.msra.mxu0 %v1022
        %1105 = vmatprep.subr.bf16.mxu0 %v1019
        %1106 = vmatpush1.bf16.msra.mxu0 %v1018
        %1107 = vmatprep.subr.bf16.mxu0 %v1015
        %1108 = vmatpush1.bf16.msra.mxu0 %v1014
        %1109 = vmatprep.subr.bf16.mxu0 %v1011
        %1110 = vmatpush1.bf16.msra.mxu0 %v1010
        %1111 = vmatprep.subr.bf16.mxu0 %v1007
        %1112 = vmatpush1.bf16.msra.mxu0 %v1006
        %1113 = vmatprep.subr.bf16.mxu0 %v1003
        %1114 = vmatpush1.bf16.msra.mxu0 %v1002
        %1115 = vmatprep.subr.bf16.mxu0 %v999
        %1116 = vmatpush1.bf16.msra.mxu0 %v998
        %1117 = vmatprep.subr.bf16.mxu0 0
        %1118 = vmatpush2.bf16.msra.mxu0 0
        %1119 = vmatprep.subr.bf16.mxu0 0
        %1120 = vmatpush2.bf16.msra.mxu0 0
        %1121 = vmatprep.subr.bf16.mxu0 0
        %1122 = vmatpush2.bf16.msra.mxu0 0
        %1123 = vmatprep.subr.bf16.mxu0 0
        %1124 = vmatpush2.bf16.msra.mxu0 0
        %1125 = vmatprep.subr.bf16.mxu0 0
        %1126 = vmatpush2.bf16.msra.mxu0 0
        %1127 = vmatprep.subr.bf16.mxu0 0
        %1128 = vmatpush2.bf16.msra.mxu0 0
        %1129 = vmatprep.subr.bf16.mxu0 0
        %1130 = vmatpush2.bf16.msra.mxu0 0
        %1131 = vmatprep.subr.bf16.mxu0 0
        %1132 = vmatpush2.bf16.msra.mxu0 0
        %1133 = vmatprep.mubr.bf16.mxu0 0
        %1134 = vmatmul.mubr.bf16.gmra.mxu0 0
        %v1135 = vpop.f32.mrf.mxu0
        %v1136 = vadd.f32 0.0, %v1135
        %v1137 = vpop.f32.mrf.mxu0
        %v1138 = vadd.f32 0.0, %v1137
        %v1139 = vpop.f32.mrf.mxu0
        %v1140 = vpop.f32.mrf.mxu0
        %1141 = vdwg.mxu0
        %v1146 = vcombine.low %v1095, %v1097
        %v1147 = vcombine.low %v1136, %v1138
        %v1149 = vunpack.c.l.s4 1966171168
        %v1150 = vunpack.c.0.s8 %v1149
        %v1151 = vlaneseq
        %v1152 = vshrl.u32 %v1151, 7
        %v1153 = vsub.s32 %v1150, %v1152
        %v1154 = vrot.slane %v1146, %v1153
        %v1156 = vunpack.c.l.s4 1966171168
        %v1157 = vunpack.c.0.s8 %v1156
        %v1158 = vlaneseq
        %v1159 = vshrl.u32 %v1158, 7
        %v1160 = vsub.s32 %v1157, %v1159
        %v1161 = vrot.slane %v1147, %v1160
        %v1162 = vcombine.low %v1154, %v1161
        %v1164 = vunpack.c.l.s4 1966171168
        %v1165 = vunpack.c.0.s8 %v1164
        %v1166 = vlaneseq
        %v1167 = vshrl.u32 %v1166, 7
        %v1168 = vsub.s32 %v1165, %v1167
        %v1169 = vrot.slane %v1162, %v1168
        %v1171 = vadd.f32 %v867, %v1169
        %v1172 = vxor.u32 %v1171, 2147483648
        %v1173 = vmul.f32 %v1172, 1.442695
        %v1174 = vpow.pop %v1173
        %v1175 = vadd.f32 %v1174, 1.0
        %v1176 = vrcp.pop %v1175
        %v1177 = vmul.f32 1.0, %v1176
        %v1179 = vrot.slane %v1171, 1
        %v1181 = vxor.u32 %v1179, 2147483648
        %v1182 = vmul.f32 %v1181, 1.442695
        %v1183 = vpow.pop %v1182
        %v1184 = vadd.f32 %v1183, 1.0
        %v1185 = vrcp.pop %v1184
        %v1186 = vmul.f32 1.0, %v1185
        %v1187 = vrot.slane %v1171, 2
        %v1189 = vtanh.pop %v1187
        %v1190 = vrot.slane %v1171, 3
        %v1192 = vxor.u32 %v1190, 2147483648
        %v1193 = vmul.f32 %v1192, 1.442695
        %v1194 = vpow.pop %v1193
        %v1195 = vadd.f32 %v1194, 1.0
        %v1196 = vrcp.pop %v1195
        %v1197 = vmul.f32 1.0, %v1196
        %v1198 = vmul.f32 %v1186, 0.0
        %v1199 = vmul.f32 %v1177, %v1189
        %v1200 = vadd.f32 %v1198, %v1199
        %v1201 = vtanh.pop %v1200
        %v1202 = vmul.f32 %v1197, %v1201
        %1203 = vst [vmem:[#allocation3] sm:$0x1] %v1202
        %s1204 = scalar_lea.vmem [#allocation2], 1
        %v1205 = vld [vmem:[%s1204] ss:$4 sm:$0xf]
        %v1206 = vpack.c.bf16 %v1202, %v1202
        %v1207 = vld [vmem:[%s5] sm:$0xff]
        %v1208 = vld [vmem:[%s5 + $0x8] sm:$0xff]
        %v1209 = vld [vmem:[%s5 + $0x10] sm:$0xff]
        %v1210 = vld [vmem:[%s5 + $0x18] sm:$0xff]
        %v1211 = vld [vmem:[%s5 + $0x20] sm:$0xff]
        %v1212 = vld [vmem:[%s5 + $0x28] sm:$0xff]
        %v1213 = vld [vmem:[%s5 + $0x30] sm:$0xff]
        %v1214 = vld [vmem:[%s5 + $0x38] sm:$0xff]
        %v1215 = vld [vmem:[%s5 + $0x40] sm:$0xff]
        %v1216 = vld [vmem:[%s5 + $0x48] sm:$0xff]
        %v1217 = vld [vmem:[%s5 + $0x50] sm:$0xff]
        %v1218 = vld [vmem:[%s5 + $0x58] sm:$0xff]
        %v1219 = vld [vmem:[%s5 + $0x60] sm:$0xff]
        %v1220 = vld [vmem:[%s5 + $0x68] sm:$0xff]
        %v1221 = vld [vmem:[%s5 + $0x70] sm:$0xff]
        %v1222 = vld [vmem:[%s5 + $0x78] sm:$0xff]
        %v1223 = vld [vmem:[%s5 + $0x80] sm:$0xff]
        %v1224 = vld [vmem:[%s5 + $0x88] sm:$0xff]
        %v1225 = vld [vmem:[%s5 + $0x90] sm:$0xff]
        %v1226 = vld [vmem:[%s5 + $0x98] sm:$0xff]
        %v1227 = vld [vmem:[%s5 + $0xa0] sm:$0xff]
        %v1228 = vld [vmem:[%s5 + $0xa8] sm:$0xff]
        %v1229 = vld [vmem:[%s5 + $0xb0] sm:$0xff]
        %v1230 = vld [vmem:[%s5 + $0xb8] sm:$0xff]
        %v1231 = vld [vmem:[%s5 + $0xc0] sm:$0xff]
        %v1232 = vld [vmem:[%s5 + $0xc8] sm:$0xff]
        %v1233 = vld [vmem:[%s5 + $0xd0] sm:$0xff]
        %v1234 = vld [vmem:[%s5 + $0xd8] sm:$0xff]
        %v1235 = vld [vmem:[%s5 + $0xe0] sm:$0xff]
        %v1236 = vld [vmem:[%s5 + $0xe8] sm:$0xff]
        %v1237 = vld [vmem:[%s5 + $0xf0] sm:$0xff]
        %v1238 = vld [vmem:[%s5 + $0xf8] sm:$0xff]
        %v1271 = vunpack.c.l.b16 %v1207
        %v1272 = vunpack.c.h.b16 %v1207
        %v1273 = vunpack.c.l.b16 %v1208
        %v1274 = vunpack.c.h.b16 %v1208
        %v1275 = vunpack.c.l.b16 %v1209
        %v1276 = vunpack.c.h.b16 %v1209
        %v1277 = vunpack.c.l.b16 %v1210
        %v1278 = vunpack.c.h.b16 %v1210
        %v1279 = vunpack.c.l.b16 %v1211
        %v1280 = vunpack.c.h.b16 %v1211
        %v1281 = vunpack.c.l.b16 %v1212
        %v1282 = vunpack.c.h.b16 %v1212
        %v1283 = vunpack.c.l.b16 %v1213
        %v1284 = vunpack.c.h.b16 %v1213
        %v1285 = vunpack.c.l.b16 %v1214
        %v1286 = vunpack.c.h.b16 %v1214
        %v1287 = vunpack.c.l.b16 %v1215
        %v1288 = vunpack.c.h.b16 %v1215
        %v1289 = vunpack.c.l.b16 %v1216
        %v1290 = vunpack.c.h.b16 %v1216
        %v1291 = vunpack.c.l.b16 %v1217
        %v1292 = vunpack.c.h.b16 %v1217
        %v1293 = vunpack.c.l.b16 %v1218
        %v1294 = vunpack.c.h.b16 %v1218
        %v1295 = vunpack.c.l.b16 %v1219
        %v1296 = vunpack.c.h.b16 %v1219
        %v1297 = vunpack.c.l.b16 %v1220
        %v1298 = vunpack.c.h.b16 %v1220
        %v1299 = vunpack.c.l.b16 %v1221
        %v1300 = vunpack.c.h.b16 %v1221
        %v1301 = vunpack.c.l.b16 %v1222
        %v1302 = vunpack.c.h.b16 %v1222
        %v1303 = vunpack.c.l.b16 %v1223
        %v1304 = vunpack.c.h.b16 %v1223
        %v1305 = vunpack.c.l.b16 %v1224
        %v1306 = vunpack.c.h.b16 %v1224
        %v1307 = vunpack.c.l.b16 %v1225
        %v1308 = vunpack.c.h.b16 %v1225
        %v1309 = vunpack.c.l.b16 %v1226
        %v1310 = vunpack.c.h.b16 %v1226
        %v1311 = vunpack.c.l.b16 %v1227
        %v1312 = vunpack.c.h.b16 %v1227
        %v1313 = vunpack.c.l.b16 %v1228
        %v1314 = vunpack.c.h.b16 %v1228
        %v1315 = vunpack.c.l.b16 %v1229
        %v1316 = vunpack.c.h.b16 %v1229
        %v1317 = vunpack.c.l.b16 %v1230
        %v1318 = vunpack.c.h.b16 %v1230
        %v1319 = vunpack.c.l.b16 %v1231
        %v1320 = vunpack.c.h.b16 %v1231
        %v1321 = vunpack.c.l.b16 %v1232
        %v1322 = vunpack.c.h.b16 %v1232
        %v1323 = vunpack.c.l.b16 %v1233
        %v1324 = vunpack.c.h.b16 %v1233
        %v1325 = vunpack.c.l.b16 %v1234
        %v1326 = vunpack.c.h.b16 %v1234
        %v1327 = vunpack.c.l.b16 %v1235
        %v1328 = vunpack.c.h.b16 %v1235
        %v1329 = vunpack.c.l.b16 %v1236
        %v1330 = vunpack.c.h.b16 %v1236
        %v1331 = vunpack.c.l.b16 %v1237
        %v1332 = vunpack.c.h.b16 %v1237
        %v1333 = vunpack.c.l.b16 %v1238
        %v1334 = vunpack.c.h.b16 %v1238
        %v1335 = vpack.c.b16 %v1275, %v1271
        %v1336 = vpack.c.b16 %v1276, %v1272
        %v1337 = vpack.c.b16 %v1277, %v1273
        %v1338 = vpack.c.b16 %v1278, %v1274
        %v1339 = vpack.c.b16 %v1283, %v1279
        %v1340 = vpack.c.b16 %v1284, %v1280
        %v1341 = vpack.c.b16 %v1285, %v1281
        %v1342 = vpack.c.b16 %v1286, %v1282
        %v1343 = vpack.c.b16 %v1291, %v1287
        %v1344 = vpack.c.b16 %v1292, %v1288
        %v1345 = vpack.c.b16 %v1293, %v1289
        %v1346 = vpack.c.b16 %v1294, %v1290
        %v1347 = vpack.c.b16 %v1299, %v1295
        %v1348 = vpack.c.b16 %v1300, %v1296
        %v1349 = vpack.c.b16 %v1301, %v1297
        %v1350 = vpack.c.b16 %v1302, %v1298
        %v1351 = vpack.c.b16 %v1307, %v1303
        %v1352 = vpack.c.b16 %v1308, %v1304
        %v1353 = vpack.c.b16 %v1309, %v1305
        %v1354 = vpack.c.b16 %v1310, %v1306
        %v1355 = vpack.c.b16 %v1315, %v1311
        %v1356 = vpack.c.b16 %v1316, %v1312
        %v1357 = vpack.c.b16 %v1317, %v1313
        %v1358 = vpack.c.b16 %v1318, %v1314
        %v1359 = vpack.c.b16 %v1323, %v1319
        %v1360 = vpack.c.b16 %v1324, %v1320
        %v1361 = vpack.c.b16 %v1325, %v1321
        %v1362 = vpack.c.b16 %v1326, %v1322
        %v1363 = vpack.c.b16 %v1331, %v1327
        %v1364 = vpack.c.b16 %v1332, %v1328
        %v1365 = vpack.c.b16 %v1333, %v1329
        %v1366 = vpack.c.b16 %v1334, %v1330
        %1399 = vmatprep.subr.bf16.mxu0 %v1364
        %1400 = vmatpush1.bf16.msra.mxu0 %v1363
        %1401 = vmatprep.subr.bf16.mxu0 %v1360
        %1402 = vmatpush1.bf16.msra.mxu0 %v1359
        %1403 = vmatprep.subr.bf16.mxu0 %v1356
        %1404 = vmatpush1.bf16.msra.mxu0 %v1355
        %1405 = vmatprep.subr.bf16.mxu0 %v1352
        %1406 = vmatpush1.bf16.msra.mxu0 %v1351
        %1407 = vmatprep.subr.bf16.mxu0 %v1348
        %1408 = vmatpush1.bf16.msra.mxu0 %v1347
        %1409 = vmatprep.subr.bf16.mxu0 %v1344
        %1410 = vmatpush1.bf16.msra.mxu0 %v1343
        %1411 = vmatprep.subr.bf16.mxu0 %v1340
        %1412 = vmatpush1.bf16.msra.mxu0 %v1339
        %1413 = vmatprep.subr.bf16.mxu0 %v1336
        %1414 = vmatpush1.bf16.msra.mxu0 %v1335
        %1415 = vmatprep.subr.bf16.mxu0 0
        %1416 = vmatpush2.bf16.msra.mxu0 0
        %1417 = vmatprep.subr.bf16.mxu0 0
        %1418 = vmatpush2.bf16.msra.mxu0 0
        %1419 = vmatprep.subr.bf16.mxu0 0
        %1420 = vmatpush2.bf16.msra.mxu0 0
        %1421 = vmatprep.subr.bf16.mxu0 0
        %1422 = vmatpush2.bf16.msra.mxu0 0
        %1423 = vmatprep.subr.bf16.mxu0 0
        %1424 = vmatpush2.bf16.msra.mxu0 0
        %1425 = vmatprep.subr.bf16.mxu0 0
        %1426 = vmatpush2.bf16.msra.mxu0 0
        %1427 = vmatprep.subr.bf16.mxu0 0
        %1428 = vmatpush2.bf16.msra.mxu0 0
        %1429 = vmatprep.subr.bf16.mxu0 0
        %1430 = vmatpush2.bf16.msra.mxu0 0
        %1431 = vmatprep.mubr.bf16.mxu0 0
        %1432 = vmatmul.mubr.bf16.gmra.mxu0 %v1206
        %v1433 = vpop.f32.mrf.mxu0
        %v1434 = vadd.f32 0.0, %v1433
        %v1435 = vpop.f32.mrf.mxu0
        %v1436 = vadd.f32 0.0, %v1435
        %v1437 = vpop.f32.mrf.mxu0
        %v1438 = vpop.f32.mrf.mxu0
        %1439 = vdwg.mxu0
        %1440 = vmatprep.subr.bf16.mxu0 %v1366
        %1441 = vmatpush1.bf16.msra.mxu0 %v1365
        %1442 = vmatprep.subr.bf16.mxu0 %v1362
        %1443 = vmatpush1.bf16.msra.mxu0 %v1361
        %1444 = vmatprep.subr.bf16.mxu0 %v1358
        %1445 = vmatpush1.bf16.msra.mxu0 %v1357
        %1446 = vmatprep.subr.bf16.mxu0 %v1354
        %1447 = vmatpush1.bf16.msra.mxu0 %v1353
        %1448 = vmatprep.subr.bf16.mxu0 %v1350
        %1449 = vmatpush1.bf16.msra.mxu0 %v1349
        %1450 = vmatprep.subr.bf16.mxu0 %v1346
        %1451 = vmatpush1.bf16.msra.mxu0 %v1345
        %1452 = vmatprep.subr.bf16.mxu0 %v1342
        %1453 = vmatpush1.bf16.msra.mxu0 %v1341
        %1454 = vmatprep.subr.bf16.mxu0 %v1338
        %1455 = vmatpush1.bf16.msra.mxu0 %v1337
        %1456 = vmatprep.subr.bf16.mxu0 0
        %1457 = vmatpush2.bf16.msra.mxu0 0
        %1458 = vmatprep.subr.bf16.mxu0 0
        %1459 = vmatpush2.bf16.msra.mxu0 0
        %1460 = vmatprep.subr.bf16.mxu0 0
        %1461 = vmatpush2.bf16.msra.mxu0 0
        %1462 = vmatprep.subr.bf16.mxu0 0
        %1463 = vmatpush2.bf16.msra.mxu0 0
        %1464 = vmatprep.subr.bf16.mxu0 0
        %1465 = vmatpush2.bf16.msra.mxu0 0
        %1466 = vmatprep.subr.bf16.mxu0 0
        %1467 = vmatpush2.bf16.msra.mxu0 0
        %1468 = vmatprep.subr.bf16.mxu0 0
        %1469 = vmatpush2.bf16.msra.mxu0 0
        %1470 = vmatprep.subr.bf16.mxu0 0
        %1471 = vmatpush2.bf16.msra.mxu0 0
        %1472 = vmatprep.mubr.bf16.mxu0 0
        %1473 = vmatmul.mubr.bf16.gmra.mxu0 %v1206
        %v1474 = vpop.f32.mrf.mxu0
        %v1475 = vadd.f32 0.0, %v1474
        %v1476 = vpop.f32.mrf.mxu0
        %v1477 = vadd.f32 0.0, %v1476
        %v1478 = vpop.f32.mrf.mxu0
        %v1479 = vpop.f32.mrf.mxu0
        %1480 = vdwg.mxu0
        %v1485 = vcombine.low %v1434, %v1436
        %v1486 = vcombine.low %v1475, %v1477
        %v1488 = vunpack.c.l.s4 1966171168
        %v1489 = vunpack.c.0.s8 %v1488
        %v1490 = vlaneseq
        %v1491 = vshrl.u32 %v1490, 7
        %v1492 = vsub.s32 %v1489, %v1491
        %v1493 = vrot.slane %v1485, %v1492
        %v1495 = vunpack.c.l.s4 1966171168
        %v1496 = vunpack.c.0.s8 %v1495
        %v1497 = vlaneseq
        %v1498 = vshrl.u32 %v1497, 7
        %v1499 = vsub.s32 %v1496, %v1498
        %v1500 = vrot.slane %v1486, %v1499
        %v1501 = vcombine.low %v1493, %v1500
        %v1503 = vunpack.c.l.s4 1966171168
        %v1504 = vunpack.c.0.s8 %v1503
        %v1505 = vlaneseq
        %v1506 = vshrl.u32 %v1505, 7
        %v1507 = vsub.s32 %v1504, %v1506
        %v1508 = vrot.slane %v1501, %v1507
        %v1510 = vadd.f32 %v1205, %v1508
        %v1511 = vxor.u32 %v1510, 2147483648
        %v1512 = vmul.f32 %v1511, 1.442695
        %v1513 = vpow.pop %v1512
        %v1514 = vadd.f32 %v1513, 1.0
        %v1515 = vrcp.pop %v1514
        %v1516 = vmul.f32 1.0, %v1515
        %v1518 = vrot.slane %v1510, 1
        %v1520 = vxor.u32 %v1518, 2147483648
        %v1521 = vmul.f32 %v1520, 1.442695
        %v1522 = vpow.pop %v1521
        %v1523 = vadd.f32 %v1522, 1.0
        %v1524 = vrcp.pop %v1523
        %v1525 = vmul.f32 1.0, %v1524
        %v1526 = vrot.slane %v1510, 2
        %v1528 = vtanh.pop %v1526
        %v1529 = vrot.slane %v1510, 3
        %v1531 = vxor.u32 %v1529, 2147483648
        %v1532 = vmul.f32 %v1531, 1.442695
        %v1533 = vpow.pop %v1532
        %v1534 = vadd.f32 %v1533, 1.0
        %v1535 = vrcp.pop %v1534
        %v1536 = vmul.f32 1.0, %v1535
        %v1537 = vmul.f32 %v1525, %v1200
        %v1538 = vmul.f32 %v1516, %v1528
        %v1539 = vadd.f32 %v1537, %v1538
        %v1540 = vtanh.pop %v1539
        %v1541 = vmul.f32 %v1536, %v1540
        %1542 = vst [vmem:[#allocation3 + $0x1] sm:$0x1] %v1541
        %s1543 = scalar_lea.vmem [#allocation2], 2
        %v1544 = vld [vmem:[%s1543] ss:$4 sm:$0xf]
        %v1545 = vpack.c.bf16 %v1541, %v1541
        %v1546 = vld [vmem:[%s5] sm:$0xff]
        %v1547 = vld [vmem:[%s5 + $0x8] sm:$0xff]
        %v1548 = vld [vmem:[%s5 + $0x10] sm:$0xff]
        %v1549 = vld [vmem:[%s5 + $0x18] sm:$0xff]
        %v1550 = vld [vmem:[%s5 + $0x20] sm:$0xff]
        %v1551 = vld [vmem:[%s5 + $0x28] sm:$0xff]
        %v1552 = vld [vmem:[%s5 + $0x30] sm:$0xff]
        %v1553 = vld [vmem:[%s5 + $0x38] sm:$0xff]
        %v1554 = vld [vmem:[%s5 + $0x40] sm:$0xff]
        %v1555 = vld [vmem:[%s5 + $0x48] sm:$0xff]
        %v1556 = vld [vmem:[%s5 + $0x50] sm:$0xff]
        %v1557 = vld [vmem:[%s5 + $0x58] sm:$0xff]
        %v1558 = vld [vmem:[%s5 + $0x60] sm:$0xff]
        %v1559 = vld [vmem:[%s5 + $0x68] sm:$0xff]
        %v1560 = vld [vmem:[%s5 + $0x70] sm:$0xff]
        %v1561 = vld [vmem:[%s5 + $0x78] sm:$0xff]
        %v1562 = vld [vmem:[%s5 + $0x80] sm:$0xff]
        %v1563 = vld [vmem:[%s5 + $0x88] sm:$0xff]
        %v1564 = vld [vmem:[%s5 + $0x90] sm:$0xff]
        %v1565 = vld [vmem:[%s5 + $0x98] sm:$0xff]
        %v1566 = vld [vmem:[%s5 + $0xa0] sm:$0xff]
        %v1567 = vld [vmem:[%s5 + $0xa8] sm:$0xff]
        %v1568 = vld [vmem:[%s5 + $0xb0] sm:$0xff]
        %v1569 = vld [vmem:[%s5 + $0xb8] sm:$0xff]
        %v1570 = vld [vmem:[%s5 + $0xc0] sm:$0xff]
        %v1571 = vld [vmem:[%s5 + $0xc8] sm:$0xff]
        %v1572 = vld [vmem:[%s5 + $0xd0] sm:$0xff]
        %v1573 = vld [vmem:[%s5 + $0xd8] sm:$0xff]
        %v1574 = vld [vmem:[%s5 + $0xe0] sm:$0xff]
        %v1575 = vld [vmem:[%s5 + $0xe8] sm:$0xff]
        %v1576 = vld [vmem:[%s5 + $0xf0] sm:$0xff]
        %v1577 = vld [vmem:[%s5 + $0xf8] sm:$0xff]
        %v1610 = vunpack.c.l.b16 %v1546
        %v1611 = vunpack.c.h.b16 %v1546
        %v1612 = vunpack.c.l.b16 %v1547
        %v1613 = vunpack.c.h.b16 %v1547
        %v1614 = vunpack.c.l.b16 %v1548
        %v1615 = vunpack.c.h.b16 %v1548
        %v1616 = vunpack.c.l.b16 %v1549
        %v1617 = vunpack.c.h.b16 %v1549
        %v1618 = vunpack.c.l.b16 %v1550
        %v1619 = vunpack.c.h.b16 %v1550
        %v1620 = vunpack.c.l.b16 %v1551
        %v1621 = vunpack.c.h.b16 %v1551
        %v1622 = vunpack.c.l.b16 %v1552
        %v1623 = vunpack.c.h.b16 %v1552
        %v1624 = vunpack.c.l.b16 %v1553
        %v1625 = vunpack.c.h.b16 %v1553
        %v1626 = vunpack.c.l.b16 %v1554
        %v1627 = vunpack.c.h.b16 %v1554
        %v1628 = vunpack.c.l.b16 %v1555
        %v1629 = vunpack.c.h.b16 %v1555
        %v1630 = vunpack.c.l.b16 %v1556
        %v1631 = vunpack.c.h.b16 %v1556
        %v1632 = vunpack.c.l.b16 %v1557
        %v1633 = vunpack.c.h.b16 %v1557
        %v1634 = vunpack.c.l.b16 %v1558
        %v1635 = vunpack.c.h.b16 %v1558
        %v1636 = vunpack.c.l.b16 %v1559
        %v1637 = vunpack.c.h.b16 %v1559
        %v1638 = vunpack.c.l.b16 %v1560
        %v1639 = vunpack.c.h.b16 %v1560
        %v1640 = vunpack.c.l.b16 %v1561
        %v1641 = vunpack.c.h.b16 %v1561
        %v1642 = vunpack.c.l.b16 %v1562
        %v1643 = vunpack.c.h.b16 %v1562
        %v1644 = vunpack.c.l.b16 %v1563
        %v1645 = vunpack.c.h.b16 %v1563
        %v1646 = vunpack.c.l.b16 %v1564
        %v1647 = vunpack.c.h.b16 %v1564
        %v1648 = vunpack.c.l.b16 %v1565
        %v1649 = vunpack.c.h.b16 %v1565
        %v1650 = vunpack.c.l.b16 %v1566
        %v1651 = vunpack.c.h.b16 %v1566
        %v1652 = vunpack.c.l.b16 %v1567
        %v1653 = vunpack.c.h.b16 %v1567
        %v1654 = vunpack.c.l.b16 %v1568
        %v1655 = vunpack.c.h.b16 %v1568
        %v1656 = vunpack.c.l.b16 %v1569
        %v1657 = vunpack.c.h.b16 %v1569
        %v1658 = vunpack.c.l.b16 %v1570
        %v1659 = vunpack.c.h.b16 %v1570
        %v1660 = vunpack.c.l.b16 %v1571
        %v1661 = vunpack.c.h.b16 %v1571
        %v1662 = vunpack.c.l.b16 %v1572
        %v1663 = vunpack.c.h.b16 %v1572
        %v1664 = vunpack.c.l.b16 %v1573
        %v1665 = vunpack.c.h.b16 %v1573
        %v1666 = vunpack.c.l.b16 %v1574
        %v1667 = vunpack.c.h.b16 %v1574
        %v1668 = vunpack.c.l.b16 %v1575
        %v1669 = vunpack.c.h.b16 %v1575
        %v1670 = vunpack.c.l.b16 %v1576
        %v1671 = vunpack.c.h.b16 %v1576
        %v1672 = vunpack.c.l.b16 %v1577
        %v1673 = vunpack.c.h.b16 %v1577
        %v1674 = vpack.c.b16 %v1614, %v1610
        %v1675 = vpack.c.b16 %v1615, %v1611
        %v1676 = vpack.c.b16 %v1616, %v1612
        %v1677 = vpack.c.b16 %v1617, %v1613
        %v1678 = vpack.c.b16 %v1622, %v1618
        %v1679 = vpack.c.b16 %v1623, %v1619
        %v1680 = vpack.c.b16 %v1624, %v1620
        %v1681 = vpack.c.b16 %v1625, %v1621
        %v1682 = vpack.c.b16 %v1630, %v1626
        %v1683 = vpack.c.b16 %v1631, %v1627
        %v1684 = vpack.c.b16 %v1632, %v1628
        %v1685 = vpack.c.b16 %v1633, %v1629
        %v1686 = vpack.c.b16 %v1638, %v1634
        %v1687 = vpack.c.b16 %v1639, %v1635
        %v1688 = vpack.c.b16 %v1640, %v1636
        %v1689 = vpack.c.b16 %v1641, %v1637
        %v1690 = vpack.c.b16 %v1646, %v1642
        %v1691 = vpack.c.b16 %v1647, %v1643
        %v1692 = vpack.c.b16 %v1648, %v1644
        %v1693 = vpack.c.b16 %v1649, %v1645
        %v1694 = vpack.c.b16 %v1654, %v1650
        %v1695 = vpack.c.b16 %v1655, %v1651
        %v1696 = vpack.c.b16 %v1656, %v1652
        %v1697 = vpack.c.b16 %v1657, %v1653
        %v1698 = vpack.c.b16 %v1662, %v1658
        %v1699 = vpack.c.b16 %v1663, %v1659
        %v1700 = vpack.c.b16 %v1664, %v1660
        %v1701 = vpack.c.b16 %v1665, %v1661
        %v1702 = vpack.c.b16 %v1670, %v1666
        %v1703 = vpack.c.b16 %v1671, %v1667
        %v1704 = vpack.c.b16 %v1672, %v1668
        %v1705 = vpack.c.b16 %v1673, %v1669
        %1738 = vmatprep.subr.bf16.mxu0 %v1703
        %1739 = vmatpush1.bf16.msra.mxu0 %v1702
        %1740 = vmatprep.subr.bf16.mxu0 %v1699
        %1741 = vmatpush1.bf16.msra.mxu0 %v1698
        %1742 = vmatprep.subr.bf16.mxu0 %v1695
        %1743 = vmatpush1.bf16.msra.mxu0 %v1694
        %1744 = vmatprep.subr.bf16.mxu0 %v1691
        %1745 = vmatpush1.bf16.msra.mxu0 %v1690
        %1746 = vmatprep.subr.bf16.mxu0 %v1687
        %1747 = vmatpush1.bf16.msra.mxu0 %v1686
        %1748 = vmatprep.subr.bf16.mxu0 %v1683
        %1749 = vmatpush1.bf16.msra.mxu0 %v1682
        %1750 = vmatprep.subr.bf16.mxu0 %v1679
        %1751 = vmatpush1.bf16.msra.mxu0 %v1678
        %1752 = vmatprep.subr.bf16.mxu0 %v1675
        %1753 = vmatpush1.bf16.msra.mxu0 %v1674
        %1754 = vmatprep.subr.bf16.mxu0 0
        %1755 = vmatpush2.bf16.msra.mxu0 0
        %1756 = vmatprep.subr.bf16.mxu0 0
        %1757 = vmatpush2.bf16.msra.mxu0 0
        %1758 = vmatprep.subr.bf16.mxu0 0
        %1759 = vmatpush2.bf16.msra.mxu0 0
        %1760 = vmatprep.subr.bf16.mxu0 0
        %1761 = vmatpush2.bf16.msra.mxu0 0
        %1762 = vmatprep.subr.bf16.mxu0 0
        %1763 = vmatpush2.bf16.msra.mxu0 0
        %1764 = vmatprep.subr.bf16.mxu0 0
        %1765 = vmatpush2.bf16.msra.mxu0 0
        %1766 = vmatprep.subr.bf16.mxu0 0
        %1767 = vmatpush2.bf16.msra.mxu0 0
        %1768 = vmatprep.subr.bf16.mxu0 0
        %1769 = vmatpush2.bf16.msra.mxu0 0
        %1770 = vmatprep.mubr.bf16.mxu0 0
        %1771 = vmatmul.mubr.bf16.gmra.mxu0 %v1545
        %v1772 = vpop.f32.mrf.mxu0
        %v1773 = vadd.f32 0.0, %v1772
        %v1774 = vpop.f32.mrf.mxu0
        %v1775 = vadd.f32 0.0, %v1774
        %v1776 = vpop.f32.mrf.mxu0
        %v1777 = vpop.f32.mrf.mxu0
        %1778 = vdwg.mxu0
        %1779 = vmatprep.subr.bf16.mxu0 %v1705
        %1780 = vmatpush1.bf16.msra.mxu0 %v1704
        %1781 = vmatprep.subr.bf16.mxu0 %v1701
        %1782 = vmatpush1.bf16.msra.mxu0 %v1700
        %1783 = vmatprep.subr.bf16.mxu0 %v1697
        %1784 = vmatpush1.bf16.msra.mxu0 %v1696
        %1785 = vmatprep.subr.bf16.mxu0 %v1693
        %1786 = vmatpush1.bf16.msra.mxu0 %v1692
        %1787 = vmatprep.subr.bf16.mxu0 %v1689
        %1788 = vmatpush1.bf16.msra.mxu0 %v1688
        %1789 = vmatprep.subr.bf16.mxu0 %v1685
        %1790 = vmatpush1.bf16.msra.mxu0 %v1684
        %1791 = vmatprep.subr.bf16.mxu0 %v1681
        %1792 = vmatpush1.bf16.msra.mxu0 %v1680
        %1793 = vmatprep.subr.bf16.mxu0 %v1677
        %1794 = vmatpush1.bf16.msra.mxu0 %v1676
        %1795 = vmatprep.subr.bf16.mxu0 0
        %1796 = vmatpush2.bf16.msra.mxu0 0
        %1797 = vmatprep.subr.bf16.mxu0 0
        %1798 = vmatpush2.bf16.msra.mxu0 0
        %1799 = vmatprep.subr.bf16.mxu0 0
        %1800 = vmatpush2.bf16.msra.mxu0 0
        %1801 = vmatprep.subr.bf16.mxu0 0
        %1802 = vmatpush2.bf16.msra.mxu0 0
        %1803 = vmatprep.subr.bf16.mxu0 0
        %1804 = vmatpush2.bf16.msra.mxu0 0
        %1805 = vmatprep.subr.bf16.mxu0 0
        %1806 = vmatpush2.bf16.msra.mxu0 0
        %1807 = vmatprep.subr.bf16.mxu0 0
        %1808 = vmatpush2.bf16.msra.mxu0 0
        %1809 = vmatprep.subr.bf16.mxu0 0
        %1810 = vmatpush2.bf16.msra.mxu0 0
        %1811 = vmatprep.mubr.bf16.mxu0 0
        %1812 = vmatmul.mubr.bf16.gmra.mxu0 %v1545
        %v1813 = vpop.f32.mrf.mxu0
        %v1814 = vadd.f32 0.0, %v1813
        %v1815 = vpop.f32.mrf.mxu0
        %v1816 = vadd.f32 0.0, %v1815
        %v1817 = vpop.f32.mrf.mxu0
        %v1818 = vpop.f32.mrf.mxu0
        %1819 = vdwg.mxu0
        %v1824 = vcombine.low %v1773, %v1775
        %v1825 = vcombine.low %v1814, %v1816
        %v1827 = vunpack.c.l.s4 1966171168
        %v1828 = vunpack.c.0.s8 %v1827
        %v1829 = vlaneseq
        %v1830 = vshrl.u32 %v1829, 7
        %v1831 = vsub.s32 %v1828, %v1830
        %v1832 = vrot.slane %v1824, %v1831
        %v1834 = vunpack.c.l.s4 1966171168
        %v1835 = vunpack.c.0.s8 %v1834
        %v1836 = vlaneseq
        %v1837 = vshrl.u32 %v1836, 7
        %v1838 = vsub.s32 %v1835, %v1837
        %v1839 = vrot.slane %v1825, %v1838
        %v1840 = vcombine.low %v1832, %v1839
        %v1842 = vunpack.c.l.s4 1966171168
        %v1843 = vunpack.c.0.s8 %v1842
        %v1844 = vlaneseq
        %v1845 = vshrl.u32 %v1844, 7
        %v1846 = vsub.s32 %v1843, %v1845
        %v1847 = vrot.slane %v1840, %v1846
        %v1849 = vadd.f32 %v1544, %v1847
        %v1850 = vxor.u32 %v1849, 2147483648
        %v1851 = vmul.f32 %v1850, 1.442695
        %v1852 = vpow.pop %v1851
        %v1853 = vadd.f32 %v1852, 1.0
        %v1854 = vrcp.pop %v1853
        %v1855 = vmul.f32 1.0, %v1854
        %v1857 = vrot.slane %v1849, 1
        %v1859 = vxor.u32 %v1857, 2147483648
        %v1860 = vmul.f32 %v1859, 1.442695
        %v1861 = vpow.pop %v1860
        %v1862 = vadd.f32 %v1861, 1.0
        %v1863 = vrcp.pop %v1862
        %v1864 = vmul.f32 1.0, %v1863
        %v1865 = vrot.slane %v1849, 2
        %v1867 = vtanh.pop %v1865
        %v1868 = vrot.slane %v1849, 3
        %v1870 = vxor.u32 %v1868, 2147483648
        %v1871 = vmul.f32 %v1870, 1.442695
        %v1872 = vpow.pop %v1871
        %v1873 = vadd.f32 %v1872, 1.0
        %v1874 = vrcp.pop %v1873
        %v1875 = vmul.f32 1.0, %v1874
        %v1876 = vmul.f32 %v1864, %v1539
        %v1877 = vmul.f32 %v1855, %v1867
        %v1878 = vadd.f32 %v1876, %v1877
        %v1879 = vtanh.pop %v1878
        %v1880 = vmul.f32 %v1875, %v1879
        %1881 = vst [vmem:[#allocation3 + $0x2] sm:$0x1] %v1880
        %s1882 = scalar_lea.vmem [#allocation2], 3
        %v1883 = vld [vmem:[%s1882] ss:$4 sm:$0xf]
        %v1884 = vpack.c.bf16 %v1880, %v1880
        %v1885 = vld [vmem:[%s5] sm:$0xff]
        %v1886 = vld [vmem:[%s5 + $0x8] sm:$0xff]
        %v1887 = vld [vmem:[%s5 + $0x10] sm:$0xff]
        %v1888 = vld [vmem:[%s5 + $0x18] sm:$0xff]
        %v1889 = vld [vmem:[%s5 + $0x20] sm:$0xff]
        %v1890 = vld [vmem:[%s5 + $0x28] sm:$0xff]
        %v1891 = vld [vmem:[%s5 + $0x30] sm:$0xff]
        %v1892 = vld [vmem:[%s5 + $0x38] sm:$0xff]
        %v1893 = vld [vmem:[%s5 + $0x40] sm:$0xff]
        %v1894 = vld [vmem:[%s5 + $0x48] sm:$0xff]
        %v1895 = vld [vmem:[%s5 + $0x50] sm:$0xff]
        %v1896 = vld [vmem:[%s5 + $0x58] sm:$0xff]
        %v1897 = vld [vmem:[%s5 + $0x60] sm:$0xff]
        %v1898 = vld [vmem:[%s5 + $0x68] sm:$0xff]
        %v1899 = vld [vmem:[%s5 + $0x70] sm:$0xff]
        %v1900 = vld [vmem:[%s5 + $0x78] sm:$0xff]
        %v1901 = vld [vmem:[%s5 + $0x80] sm:$0xff]
        %v1902 = vld [vmem:[%s5 + $0x88] sm:$0xff]
        %v1903 = vld [vmem:[%s5 + $0x90] sm:$0xff]
        %v1904 = vld [vmem:[%s5 + $0x98] sm:$0xff]
        %v1905 = vld [vmem:[%s5 + $0xa0] sm:$0xff]
        %v1906 = vld [vmem:[%s5 + $0xa8] sm:$0xff]
        %v1907 = vld [vmem:[%s5 + $0xb0] sm:$0xff]
        %v1908 = vld [vmem:[%s5 + $0xb8] sm:$0xff]
        %v1909 = vld [vmem:[%s5 + $0xc0] sm:$0xff]
        %v1910 = vld [vmem:[%s5 + $0xc8] sm:$0xff]
        %v1911 = vld [vmem:[%s5 + $0xd0] sm:$0xff]
        %v1912 = vld [vmem:[%s5 + $0xd8] sm:$0xff]
        %v1913 = vld [vmem:[%s5 + $0xe0] sm:$0xff]
        %v1914 = vld [vmem:[%s5 + $0xe8] sm:$0xff]
        %v1915 = vld [vmem:[%s5 + $0xf0] sm:$0xff]
        %v1916 = vld [vmem:[%s5 + $0xf8] sm:$0xff]
        %v1949 = vunpack.c.l.b16 %v1885
        %v1950 = vunpack.c.h.b16 %v1885
        %v1951 = vunpack.c.l.b16 %v1886
        %v1952 = vunpack.c.h.b16 %v1886
        %v1953 = vunpack.c.l.b16 %v1887
        %v1954 = vunpack.c.h.b16 %v1887
        %v1955 = vunpack.c.l.b16 %v1888
        %v1956 = vunpack.c.h.b16 %v1888
        %v1957 = vunpack.c.l.b16 %v1889
        %v1958 = vunpack.c.h.b16 %v1889
        %v1959 = vunpack.c.l.b16 %v1890
        %v1960 = vunpack.c.h.b16 %v1890
        %v1961 = vunpack.c.l.b16 %v1891
        %v1962 = vunpack.c.h.b16 %v1891
        %v1963 = vunpack.c.l.b16 %v1892
        %v1964 = vunpack.c.h.b16 %v1892
        %v1965 = vunpack.c.l.b16 %v1893
        %v1966 = vunpack.c.h.b16 %v1893
        %v1967 = vunpack.c.l.b16 %v1894
        %v1968 = vunpack.c.h.b16 %v1894
        %v1969 = vunpack.c.l.b16 %v1895
        %v1970 = vunpack.c.h.b16 %v1895
        %v1971 = vunpack.c.l.b16 %v1896
        %v1972 = vunpack.c.h.b16 %v1896
        %v1973 = vunpack.c.l.b16 %v1897
        %v1974 = vunpack.c.h.b16 %v1897
        %v1975 = vunpack.c.l.b16 %v1898
        %v1976 = vunpack.c.h.b16 %v1898
        %v1977 = vunpack.c.l.b16 %v1899
        %v1978 = vunpack.c.h.b16 %v1899
        %v1979 = vunpack.c.l.b16 %v1900
        %v1980 = vunpack.c.h.b16 %v1900
        %v1981 = vunpack.c.l.b16 %v1901
        %v1982 = vunpack.c.h.b16 %v1901
        %v1983 = vunpack.c.l.b16 %v1902
        %v1984 = vunpack.c.h.b16 %v1902
        %v1985 = vunpack.c.l.b16 %v1903
        %v1986 = vunpack.c.h.b16 %v1903
        %v1987 = vunpack.c.l.b16 %v1904
        %v1988 = vunpack.c.h.b16 %v1904
        %v1989 = vunpack.c.l.b16 %v1905
        %v1990 = vunpack.c.h.b16 %v1905
        %v1991 = vunpack.c.l.b16 %v1906
        %v1992 = vunpack.c.h.b16 %v1906
        %v1993 = vunpack.c.l.b16 %v1907
        %v1994 = vunpack.c.h.b16 %v1907
        %v1995 = vunpack.c.l.b16 %v1908
        %v1996 = vunpack.c.h.b16 %v1908
        %v1997 = vunpack.c.l.b16 %v1909
        %v1998 = vunpack.c.h.b16 %v1909
        %v1999 = vunpack.c.l.b16 %v1910
        %v2000 = vunpack.c.h.b16 %v1910
        %v2001 = vunpack.c.l.b16 %v1911
        %v2002 = vunpack.c.h.b16 %v1911
        %v2003 = vunpack.c.l.b16 %v1912
        %v2004 = vunpack.c.h.b16 %v1912
        %v2005 = vunpack.c.l.b16 %v1913
        %v2006 = vunpack.c.h.b16 %v1913
        %v2007 = vunpack.c.l.b16 %v1914
        %v2008 = vunpack.c.h.b16 %v1914
        %v2009 = vunpack.c.l.b16 %v1915
        %v2010 = vunpack.c.h.b16 %v1915
        %v2011 = vunpack.c.l.b16 %v1916
        %v2012 = vunpack.c.h.b16 %v1916
        %v2013 = vpack.c.b16 %v1953, %v1949
        %v2014 = vpack.c.b16 %v1954, %v1950
        %v2015 = vpack.c.b16 %v1955, %v1951
        %v2016 = vpack.c.b16 %v1956, %v1952
        %v2017 = vpack.c.b16 %v1961, %v1957
        %v2018 = vpack.c.b16 %v1962, %v1958
        %v2019 = vpack.c.b16 %v1963, %v1959
        %v2020 = vpack.c.b16 %v1964, %v1960
        %v2021 = vpack.c.b16 %v1969, %v1965
        %v2022 = vpack.c.b16 %v1970, %v1966
        %v2023 = vpack.c.b16 %v1971, %v1967
        %v2024 = vpack.c.b16 %v1972, %v1968
        %v2025 = vpack.c.b16 %v1977, %v1973
        %v2026 = vpack.c.b16 %v1978, %v1974
        %v2027 = vpack.c.b16 %v1979, %v1975
        %v2028 = vpack.c.b16 %v1980, %v1976
        %v2029 = vpack.c.b16 %v1985, %v1981
        %v2030 = vpack.c.b16 %v1986, %v1982
        %v2031 = vpack.c.b16 %v1987, %v1983
        %v2032 = vpack.c.b16 %v1988, %v1984
        %v2033 = vpack.c.b16 %v1993, %v1989
        %v2034 = vpack.c.b16 %v1994, %v1990
        %v2035 = vpack.c.b16 %v1995, %v1991
        %v2036 = vpack.c.b16 %v1996, %v1992
        %v2037 = vpack.c.b16 %v2001, %v1997
        %v2038 = vpack.c.b16 %v2002, %v1998
        %v2039 = vpack.c.b16 %v2003, %v1999
        %v2040 = vpack.c.b16 %v2004, %v2000
        %v2041 = vpack.c.b16 %v2009, %v2005
        %v2042 = vpack.c.b16 %v2010, %v2006
        %v2043 = vpack.c.b16 %v2011, %v2007
        %v2044 = vpack.c.b16 %v2012, %v2008
        %2077 = vmatprep.subr.bf16.mxu0 %v2042
        %2078 = vmatpush1.bf16.msra.mxu0 %v2041
        %2079 = vmatprep.subr.bf16.mxu0 %v2038
        %2080 = vmatpush1.bf16.msra.mxu0 %v2037
        %2081 = vmatprep.subr.bf16.mxu0 %v2034
        %2082 = vmatpush1.bf16.msra.mxu0 %v2033
        %2083 = vmatprep.subr.bf16.mxu0 %v2030
        %2084 = vmatpush1.bf16.msra.mxu0 %v2029
        %2085 = vmatprep.subr.bf16.mxu0 %v2026
        %2086 = vmatpush1.bf16.msra.mxu0 %v2025
        %2087 = vmatprep.subr.bf16.mxu0 %v2022
        %2088 = vmatpush1.bf16.msra.mxu0 %v2021
        %2089 = vmatprep.subr.bf16.mxu0 %v2018
        %2090 = vmatpush1.bf16.msra.mxu0 %v2017
        %2091 = vmatprep.subr.bf16.mxu0 %v2014
        %2092 = vmatpush1.bf16.msra.mxu0 %v2013
        %2093 = vmatprep.subr.bf16.mxu0 0
        %2094 = vmatpush2.bf16.msra.mxu0 0
        %2095 = vmatprep.subr.bf16.mxu0 0
        %2096 = vmatpush2.bf16.msra.mxu0 0
        %2097 = vmatprep.subr.bf16.mxu0 0
        %2098 = vmatpush2.bf16.msra.mxu0 0
        %2099 = vmatprep.subr.bf16.mxu0 0
        %2100 = vmatpush2.bf16.msra.mxu0 0
        %2101 = vmatprep.subr.bf16.mxu0 0
        %2102 = vmatpush2.bf16.msra.mxu0 0
        %2103 = vmatprep.subr.bf16.mxu0 0
        %2104 = vmatpush2.bf16.msra.mxu0 0
        %2105 = vmatprep.subr.bf16.mxu0 0
        %2106 = vmatpush2.bf16.msra.mxu0 0
        %2107 = vmatprep.subr.bf16.mxu0 0
        %2108 = vmatpush2.bf16.msra.mxu0 0
        %2109 = vmatprep.mubr.bf16.mxu0 0
        %2110 = vmatmul.mubr.bf16.gmra.mxu0 %v1884
        %v2111 = vpop.f32.mrf.mxu0
        %v2112 = vadd.f32 0.0, %v2111
        %v2113 = vpop.f32.mrf.mxu0
        %v2114 = vadd.f32 0.0, %v2113
        %v2115 = vpop.f32.mrf.mxu0
        %v2116 = vpop.f32.mrf.mxu0
        %2117 = vdwg.mxu0
        %2118 = vmatprep.subr.bf16.mxu0 %v2044
        %2119 = vmatpush1.bf16.msra.mxu0 %v2043
        %2120 = vmatprep.subr.bf16.mxu0 %v2040
        %2121 = vmatpush1.bf16.msra.mxu0 %v2039
        %2122 = vmatprep.subr.bf16.mxu0 %v2036
        %2123 = vmatpush1.bf16.msra.mxu0 %v2035
        %2124 = vmatprep.subr.bf16.mxu0 %v2032
        %2125 = vmatpush1.bf16.msra.mxu0 %v2031
        %2126 = vmatprep.subr.bf16.mxu0 %v2028
        %2127 = vmatpush1.bf16.msra.mxu0 %v2027
        %2128 = vmatprep.subr.bf16.mxu0 %v2024
        %2129 = vmatpush1.bf16.msra.mxu0 %v2023
        %2130 = vmatprep.subr.bf16.mxu0 %v2020
        %2131 = vmatpush1.bf16.msra.mxu0 %v2019
        %2132 = vmatprep.subr.bf16.mxu0 %v2016
        %2133 = vmatpush1.bf16.msra.mxu0 %v2015
        %2134 = vmatprep.subr.bf16.mxu0 0
        %2135 = vmatpush2.bf16.msra.mxu0 0
        %2136 = vmatprep.subr.bf16.mxu0 0
        %2137 = vmatpush2.bf16.msra.mxu0 0
        %2138 = vmatprep.subr.bf16.mxu0 0
        %2139 = vmatpush2.bf16.msra.mxu0 0
        %2140 = vmatprep.subr.bf16.mxu0 0
        %2141 = vmatpush2.bf16.msra.mxu0 0
        %2142 = vmatprep.subr.bf16.mxu0 0
        %2143 = vmatpush2.bf16.msra.mxu0 0
        %2144 = vmatprep.subr.bf16.mxu0 0
        %2145 = vmatpush2.bf16.msra.mxu0 0
        %2146 = vmatprep.subr.bf16.mxu0 0
        %2147 = vmatpush2.bf16.msra.mxu0 0
        %2148 = vmatprep.subr.bf16.mxu0 0
        %2149 = vmatpush2.bf16.msra.mxu0 0
        %2150 = vmatprep.mubr.bf16.mxu0 0
        %2151 = vmatmul.mubr.bf16.gmra.mxu0 %v1884
        %v2152 = vpop.f32.mrf.mxu0
        %v2153 = vadd.f32 0.0, %v2152
        %v2154 = vpop.f32.mrf.mxu0
        %v2155 = vadd.f32 0.0, %v2154
        %v2156 = vpop.f32.mrf.mxu0
        %v2157 = vpop.f32.mrf.mxu0
        %2158 = vdwg.mxu0
        %v2163 = vcombine.low %v2112, %v2114
        %v2164 = vcombine.low %v2153, %v2155
        %v2166 = vunpack.c.l.s4 1966171168
        %v2167 = vunpack.c.0.s8 %v2166
        %v2168 = vlaneseq
        %v2169 = vshrl.u32 %v2168, 7
        %v2170 = vsub.s32 %v2167, %v2169
        %v2171 = vrot.slane %v2163, %v2170
        %v2173 = vunpack.c.l.s4 1966171168
        %v2174 = vunpack.c.0.s8 %v2173
        %v2175 = vlaneseq
        %v2176 = vshrl.u32 %v2175, 7
        %v2177 = vsub.s32 %v2174, %v2176
        %v2178 = vrot.slane %v2164, %v2177
        %v2179 = vcombine.low %v2171, %v2178
        %v2181 = vunpack.c.l.s4 1966171168
        %v2182 = vunpack.c.0.s8 %v2181
        %v2183 = vlaneseq
        %v2184 = vshrl.u32 %v2183, 7
        %v2185 = vsub.s32 %v2182, %v2184
        %v2186 = vrot.slane %v2179, %v2185
        %v2188 = vadd.f32 %v1883, %v2186
        %v2189 = vxor.u32 %v2188, 2147483648
        %v2190 = vmul.f32 %v2189, 1.442695
        %v2191 = vpow.pop %v2190
        %v2192 = vadd.f32 %v2191, 1.0
        %v2193 = vrcp.pop %v2192
        %v2194 = vmul.f32 1.0, %v2193
        %v2196 = vrot.slane %v2188, 1
        %v2198 = vxor.u32 %v2196, 2147483648
        %v2199 = vmul.f32 %v2198, 1.442695
        %v2200 = vpow.pop %v2199
        %v2201 = vadd.f32 %v2200, 1.0
        %v2202 = vrcp.pop %v2201
        %v2203 = vmul.f32 1.0, %v2202
        %v2204 = vrot.slane %v2188, 2
        %v2206 = vtanh.pop %v2204
        %v2207 = vrot.slane %v2188, 3
        %v2209 = vxor.u32 %v2207, 2147483648
        %v2210 = vmul.f32 %v2209, 1.442695
        %v2211 = vpow.pop %v2210
        %v2212 = vadd.f32 %v2211, 1.0
        %v2213 = vrcp.pop %v2212
        %v2214 = vmul.f32 1.0, %v2213
        %v2215 = vmul.f32 %v2203, %v1878
        %v2216 = vmul.f32 %v2194, %v2206
        %v2217 = vadd.f32 %v2215, %v2216
        %v2218 = vtanh.pop %v2217
        %v2219 = vmul.f32 %v2214, %v2218
        %2220 = vst [vmem:[#allocation3 + $0x3] sm:$0x1] %v2219
        %v2221 = vld [vmem:[#allocation3] sm:$0xf]
        %v2222 = vpack.c.bf16 %v2221, %v2221
        %v2223 = vld [vmem:[%s7] sm:$0xff]
        %v2224 = vld [vmem:[%s7 + $0x8] sm:$0xff]
        %v2225 = vld [vmem:[%s7 + $0x10] sm:$0xff]
        %v2226 = vld [vmem:[%s7 + $0x18] sm:$0xff]
        %v2227 = vld [vmem:[%s7 + $0x20] sm:$0xff]
        %v2228 = vld [vmem:[%s7 + $0x28] sm:$0xff]
        %v2229 = vld [vmem:[%s7 + $0x30] sm:$0xff]
        %v2230 = vld [vmem:[%s7 + $0x38] sm:$0xff]
        %v2231 = vld [vmem:[%s7 + $0x40] sm:$0xff]
        %v2232 = vld [vmem:[%s7 + $0x48] sm:$0xff]
        %v2233 = vld [vmem:[%s7 + $0x50] sm:$0xff]
        %v2234 = vld [vmem:[%s7 + $0x58] sm:$0xff]
        %v2235 = vld [vmem:[%s7 + $0x60] sm:$0xff]
        %v2236 = vld [vmem:[%s7 + $0x68] sm:$0xff]
        %v2237 = vld [vmem:[%s7 + $0x70] sm:$0xff]
        %v2238 = vld [vmem:[%s7 + $0x78] sm:$0xff]
        %v2239 = vld [vmem:[%s7 + $0x80] sm:$0xff]
        %v2240 = vld [vmem:[%s7 + $0x88] sm:$0xff]
        %v2241 = vld [vmem:[%s7 + $0x90] sm:$0xff]
        %v2242 = vld [vmem:[%s7 + $0x98] sm:$0xff]
        %v2243 = vld [vmem:[%s7 + $0xa0] sm:$0xff]
        %v2244 = vld [vmem:[%s7 + $0xa8] sm:$0xff]
        %v2245 = vld [vmem:[%s7 + $0xb0] sm:$0xff]
        %v2246 = vld [vmem:[%s7 + $0xb8] sm:$0xff]
        %v2247 = vld [vmem:[%s7 + $0xc0] sm:$0xff]
        %v2248 = vld [vmem:[%s7 + $0xc8] sm:$0xff]
        %v2249 = vld [vmem:[%s7 + $0xd0] sm:$0xff]
        %v2250 = vld [vmem:[%s7 + $0xd8] sm:$0xff]
        %v2251 = vld [vmem:[%s7 + $0xe0] sm:$0xff]
        %v2252 = vld [vmem:[%s7 + $0xe8] sm:$0xff]
        %v2253 = vld [vmem:[%s7 + $0xf0] sm:$0xff]
        %v2254 = vld [vmem:[%s7 + $0xf8] sm:$0xff]
        %v2255 = vld [vmem:[%s9] sm:$0xf]
        %v2257 = vlaneseq
        %v2258 = vshrl.u32 %v2257, 7
        %v2259 = vsub.s32 0, %v2258
        %v2260 = vrot.slane %v2255, %v2259
        %v2261 = vlaneseq
        %v2262 = vshrl.u32 %v2261, 7
        %v2263 = vsub.s32 1, %v2262
        %v2264 = vrot.slane %v2255, %v2263
        %v2265 = vlaneseq
        %v2266 = vshrl.u32 %v2265, 7
        %v2267 = vsub.s32 2, %v2266
        %v2268 = vrot.slane %v2255, %v2267
        %v2269 = vlaneseq
        %v2270 = vshrl.u32 %v2269, 7
        %v2271 = vsub.s32 3, %v2270
        %v2272 = vrot.slane %v2255, %v2271
        %v2309 = vunpack.c.l.b16 %v2223
        %v2310 = vunpack.c.h.b16 %v2223
        %v2311 = vunpack.c.l.b16 %v2224
        %v2312 = vunpack.c.h.b16 %v2224
        %v2313 = vunpack.c.l.b16 %v2225
        %v2314 = vunpack.c.h.b16 %v2225
        %v2315 = vunpack.c.l.b16 %v2226
        %v2316 = vunpack.c.h.b16 %v2226
        %v2317 = vunpack.c.l.b16 %v2227
        %v2318 = vunpack.c.h.b16 %v2227
        %v2319 = vunpack.c.l.b16 %v2228
        %v2320 = vunpack.c.h.b16 %v2228
        %v2321 = vunpack.c.l.b16 %v2229
        %v2322 = vunpack.c.h.b16 %v2229
        %v2323 = vunpack.c.l.b16 %v2230
        %v2324 = vunpack.c.h.b16 %v2230
        %v2325 = vunpack.c.l.b16 %v2231
        %v2326 = vunpack.c.h.b16 %v2231
        %v2327 = vunpack.c.l.b16 %v2232
        %v2328 = vunpack.c.h.b16 %v2232
        %v2329 = vunpack.c.l.b16 %v2233
        %v2330 = vunpack.c.h.b16 %v2233
        %v2331 = vunpack.c.l.b16 %v2234
        %v2332 = vunpack.c.h.b16 %v2234
        %v2333 = vunpack.c.l.b16 %v2235
        %v2334 = vunpack.c.h.b16 %v2235
        %v2335 = vunpack.c.l.b16 %v2236
        %v2336 = vunpack.c.h.b16 %v2236
        %v2337 = vunpack.c.l.b16 %v2237
        %v2338 = vunpack.c.h.b16 %v2237
        %v2339 = vunpack.c.l.b16 %v2238
        %v2340 = vunpack.c.h.b16 %v2238
        %v2341 = vunpack.c.l.b16 %v2239
        %v2342 = vunpack.c.h.b16 %v2239
        %v2343 = vunpack.c.l.b16 %v2240
        %v2344 = vunpack.c.h.b16 %v2240
        %v2345 = vunpack.c.l.b16 %v2241
        %v2346 = vunpack.c.h.b16 %v2241
        %v2347 = vunpack.c.l.b16 %v2242
        %v2348 = vunpack.c.h.b16 %v2242
        %v2349 = vunpack.c.l.b16 %v2243
        %v2350 = vunpack.c.h.b16 %v2243
        %v2351 = vunpack.c.l.b16 %v2244
        %v2352 = vunpack.c.h.b16 %v2244
        %v2353 = vunpack.c.l.b16 %v2245
        %v2354 = vunpack.c.h.b16 %v2245
        %v2355 = vunpack.c.l.b16 %v2246
        %v2356 = vunpack.c.h.b16 %v2246
        %v2357 = vunpack.c.l.b16 %v2247
        %v2358 = vunpack.c.h.b16 %v2247
        %v2359 = vunpack.c.l.b16 %v2248
        %v2360 = vunpack.c.h.b16 %v2248
        %v2361 = vunpack.c.l.b16 %v2249
        %v2362 = vunpack.c.h.b16 %v2249
        %v2363 = vunpack.c.l.b16 %v2250
        %v2364 = vunpack.c.h.b16 %v2250
        %v2365 = vunpack.c.l.b16 %v2251
        %v2366 = vunpack.c.h.b16 %v2251
        %v2367 = vunpack.c.l.b16 %v2252
        %v2368 = vunpack.c.h.b16 %v2252
        %v2369 = vunpack.c.l.b16 %v2253
        %v2370 = vunpack.c.h.b16 %v2253
        %v2371 = vunpack.c.l.b16 %v2254
        %v2372 = vunpack.c.h.b16 %v2254
        %v2373 = vpack.c.b16 %v2313, %v2309
        %v2374 = vpack.c.b16 %v2314, %v2310
        %v2375 = vpack.c.b16 %v2315, %v2311
        %v2376 = vpack.c.b16 %v2316, %v2312
        %v2377 = vpack.c.b16 %v2321, %v2317
        %v2378 = vpack.c.b16 %v2322, %v2318
        %v2379 = vpack.c.b16 %v2323, %v2319
        %v2380 = vpack.c.b16 %v2324, %v2320
        %v2381 = vpack.c.b16 %v2329, %v2325
        %v2382 = vpack.c.b16 %v2330, %v2326
        %v2383 = vpack.c.b16 %v2331, %v2327
        %v2384 = vpack.c.b16 %v2332, %v2328
        %v2385 = vpack.c.b16 %v2337, %v2333
        %v2386 = vpack.c.b16 %v2338, %v2334
        %v2387 = vpack.c.b16 %v2339, %v2335
        %v2388 = vpack.c.b16 %v2340, %v2336
        %v2389 = vpack.c.b16 %v2345, %v2341
        %v2390 = vpack.c.b16 %v2346, %v2342
        %v2391 = vpack.c.b16 %v2347, %v2343
        %v2392 = vpack.c.b16 %v2348, %v2344
        %v2393 = vpack.c.b16 %v2353, %v2349
        %v2394 = vpack.c.b16 %v2354, %v2350
        %v2395 = vpack.c.b16 %v2355, %v2351
        %v2396 = vpack.c.b16 %v2356, %v2352
        %v2397 = vpack.c.b16 %v2361, %v2357
        %v2398 = vpack.c.b16 %v2362, %v2358
        %v2399 = vpack.c.b16 %v2363, %v2359
        %v2400 = vpack.c.b16 %v2364, %v2360
        %v2401 = vpack.c.b16 %v2369, %v2365
        %v2402 = vpack.c.b16 %v2370, %v2366
        %v2403 = vpack.c.b16 %v2371, %v2367
        %v2404 = vpack.c.b16 %v2372, %v2368
        %2437 = vmatprep.subr.bf16.mxu0 %v2402
        %2438 = vmatpush1.bf16.msra.mxu0 %v2401
        %2439 = vmatprep.subr.bf16.mxu0 %v2398
        %2440 = vmatpush1.bf16.msra.mxu0 %v2397
        %2441 = vmatprep.subr.bf16.mxu0 %v2394
        %2442 = vmatpush1.bf16.msra.mxu0 %v2393
        %2443 = vmatprep.subr.bf16.mxu0 %v2390
        %2444 = vmatpush1.bf16.msra.mxu0 %v2389
        %2445 = vmatprep.subr.bf16.mxu0 %v2386
        %2446 = vmatpush1.bf16.msra.mxu0 %v2385
        %2447 = vmatprep.subr.bf16.mxu0 %v2382
        %2448 = vmatpush1.bf16.msra.mxu0 %v2381
        %2449 = vmatprep.subr.bf16.mxu0 %v2378
        %2450 = vmatpush1.bf16.msra.mxu0 %v2377
        %2451 = vmatprep.subr.bf16.mxu0 %v2374
        %2452 = vmatpush1.bf16.msra.mxu0 %v2373
        %2453 = vmatprep.subr.bf16.mxu0 0
        %2454 = vmatpush2.bf16.msra.mxu0 0
        %2455 = vmatprep.subr.bf16.mxu0 0
        %2456 = vmatpush2.bf16.msra.mxu0 0
        %2457 = vmatprep.subr.bf16.mxu0 0
        %2458 = vmatpush2.bf16.msra.mxu0 0
        %2459 = vmatprep.subr.bf16.mxu0 0
        %2460 = vmatpush2.bf16.msra.mxu0 0
        %2461 = vmatprep.subr.bf16.mxu0 0
        %2462 = vmatpush2.bf16.msra.mxu0 0
        %2463 = vmatprep.subr.bf16.mxu0 0
        %2464 = vmatpush2.bf16.msra.mxu0 0
        %2465 = vmatprep.subr.bf16.mxu0 0
        %2466 = vmatpush2.bf16.msra.mxu0 0
        %2467 = vmatprep.subr.bf16.mxu0 0
        %2468 = vmatpush2.bf16.msra.mxu0 0
        %2469 = vmatprep.mubr.bf16.mxu0 0
        %2470 = vmatmul.mubr.bf16.gmra.mxu0 %v2222
        %v2471 = vpop.f32.mrf.mxu0
        %v2472 = vadd.f32 %v2260, %v2471
        %v2473 = vpop.f32.mrf.mxu0
        %v2474 = vadd.f32 %v2264, %v2473
        %v2475 = vpop.f32.mrf.mxu0
        %v2476 = vpop.f32.mrf.mxu0
        %2477 = vdwg.mxu0
        %2478 = vmatprep.subr.bf16.mxu0 %v2404
        %2479 = vmatpush1.bf16.msra.mxu0 %v2403
        %2480 = vmatprep.subr.bf16.mxu0 %v2400
        %2481 = vmatpush1.bf16.msra.mxu0 %v2399
        %2482 = vmatprep.subr.bf16.mxu0 %v2396
        %2483 = vmatpush1.bf16.msra.mxu0 %v2395
        %2484 = vmatprep.subr.bf16.mxu0 %v2392
        %2485 = vmatpush1.bf16.msra.mxu0 %v2391
        %2486 = vmatprep.subr.bf16.mxu0 %v2388
        %2487 = vmatpush1.bf16.msra.mxu0 %v2387
        %2488 = vmatprep.subr.bf16.mxu0 %v2384
        %2489 = vmatpush1.bf16.msra.mxu0 %v2383
        %2490 = vmatprep.subr.bf16.mxu0 %v2380
        %2491 = vmatpush1.bf16.msra.mxu0 %v2379
        %2492 = vmatprep.subr.bf16.mxu0 %v2376
        %2493 = vmatpush1.bf16.msra.mxu0 %v2375
        %2494 = vmatprep.subr.bf16.mxu0 0
        %2495 = vmatpush2.bf16.msra.mxu0 0
        %2496 = vmatprep.subr.bf16.mxu0 0
        %2497 = vmatpush2.bf16.msra.mxu0 0
        %2498 = vmatprep.subr.bf16.mxu0 0
        %2499 = vmatpush2.bf16.msra.mxu0 0
        %2500 = vmatprep.subr.bf16.mxu0 0
        %2501 = vmatpush2.bf16.msra.mxu0 0
        %2502 = vmatprep.subr.bf16.mxu0 0
        %2503 = vmatpush2.bf16.msra.mxu0 0
        %2504 = vmatprep.subr.bf16.mxu0 0
        %2505 = vmatpush2.bf16.msra.mxu0 0
        %2506 = vmatprep.subr.bf16.mxu0 0
        %2507 = vmatpush2.bf16.msra.mxu0 0
        %2508 = vmatprep.subr.bf16.mxu0 0
        %2509 = vmatpush2.bf16.msra.mxu0 0
        %2510 = vmatprep.mubr.bf16.mxu0 0
        %2511 = vmatmul.mubr.bf16.gmra.mxu0 %v2222
        %v2512 = vpop.f32.mrf.mxu0
        %v2513 = vadd.f32 %v2268, %v2512
        %v2514 = vpop.f32.mrf.mxu0
        %v2515 = vadd.f32 %v2272, %v2514
        %v2516 = vpop.f32.mrf.mxu0
        %v2517 = vpop.f32.mrf.mxu0
        %2518 = vdwg.mxu0
        %v2523 = vcombine.low %v2472, %v2474
        %v2524 = vcombine.low %v2513, %v2515
        %2527 = vst [vmem:[#allocation2] sm:$0xff] %v2523
        %2528 = vst [vmem:[#allocation2 + $0x8] sm:$0xff] %v2524
        %v2529 = vld [vmem:[#allocation2] ss:$4 sm:$0xf]
        %v2530 = vld [vmem:[%s8] sm:$0xff]
        %v2531 = vld [vmem:[%s8 + $0x8] sm:$0xff]
        %v2532 = vld [vmem:[%s8 + $0x10] sm:$0xff]
        %v2533 = vld [vmem:[%s8 + $0x18] sm:$0xff]
        %v2534 = vld [vmem:[%s8 + $0x20] sm:$0xff]
        %v2535 = vld [vmem:[%s8 + $0x28] sm:$0xff]
        %v2536 = vld [vmem:[%s8 + $0x30] sm:$0xff]
        %v2537 = vld [vmem:[%s8 + $0x38] sm:$0xff]
        %v2538 = vld [vmem:[%s8 + $0x40] sm:$0xff]
        %v2539 = vld [vmem:[%s8 + $0x48] sm:$0xff]
        %v2540 = vld [vmem:[%s8 + $0x50] sm:$0xff]
        %v2541 = vld [vmem:[%s8 + $0x58] sm:$0xff]
        %v2542 = vld [vmem:[%s8 + $0x60] sm:$0xff]
        %v2543 = vld [vmem:[%s8 + $0x68] sm:$0xff]
        %v2544 = vld [vmem:[%s8 + $0x70] sm:$0xff]
        %v2545 = vld [vmem:[%s8 + $0x78] sm:$0xff]
        %v2546 = vld [vmem:[%s8 + $0x80] sm:$0xff]
        %v2547 = vld [vmem:[%s8 + $0x88] sm:$0xff]
        %v2548 = vld [vmem:[%s8 + $0x90] sm:$0xff]
        %v2549 = vld [vmem:[%s8 + $0x98] sm:$0xff]
        %v2550 = vld [vmem:[%s8 + $0xa0] sm:$0xff]
        %v2551 = vld [vmem:[%s8 + $0xa8] sm:$0xff]
        %v2552 = vld [vmem:[%s8 + $0xb0] sm:$0xff]
        %v2553 = vld [vmem:[%s8 + $0xb8] sm:$0xff]
        %v2554 = vld [vmem:[%s8 + $0xc0] sm:$0xff]
        %v2555 = vld [vmem:[%s8 + $0xc8] sm:$0xff]
        %v2556 = vld [vmem:[%s8 + $0xd0] sm:$0xff]
        %v2557 = vld [vmem:[%s8 + $0xd8] sm:$0xff]
        %v2558 = vld [vmem:[%s8 + $0xe0] sm:$0xff]
        %v2559 = vld [vmem:[%s8 + $0xe8] sm:$0xff]
        %v2560 = vld [vmem:[%s8 + $0xf0] sm:$0xff]
        %v2561 = vld [vmem:[%s8 + $0xf8] sm:$0xff]
        %v2594 = vunpack.c.l.b16 %v2530
        %v2595 = vunpack.c.h.b16 %v2530
        %v2596 = vunpack.c.l.b16 %v2531
        %v2597 = vunpack.c.h.b16 %v2531
        %v2598 = vunpack.c.l.b16 %v2532
        %v2599 = vunpack.c.h.b16 %v2532
        %v2600 = vunpack.c.l.b16 %v2533
        %v2601 = vunpack.c.h.b16 %v2533
        %v2602 = vunpack.c.l.b16 %v2534
        %v2603 = vunpack.c.h.b16 %v2534
        %v2604 = vunpack.c.l.b16 %v2535
        %v2605 = vunpack.c.h.b16 %v2535
        %v2606 = vunpack.c.l.b16 %v2536
        %v2607 = vunpack.c.h.b16 %v2536
        %v2608 = vunpack.c.l.b16 %v2537
        %v2609 = vunpack.c.h.b16 %v2537
        %v2610 = vunpack.c.l.b16 %v2538
        %v2611 = vunpack.c.h.b16 %v2538
        %v2612 = vunpack.c.l.b16 %v2539
        %v2613 = vunpack.c.h.b16 %v2539
        %v2614 = vunpack.c.l.b16 %v2540
        %v2615 = vunpack.c.h.b16 %v2540
        %v2616 = vunpack.c.l.b16 %v2541
        %v2617 = vunpack.c.h.b16 %v2541
        %v2618 = vunpack.c.l.b16 %v2542
        %v2619 = vunpack.c.h.b16 %v2542
        %v2620 = vunpack.c.l.b16 %v2543
        %v2621 = vunpack.c.h.b16 %v2543
        %v2622 = vunpack.c.l.b16 %v2544
        %v2623 = vunpack.c.h.b16 %v2544
        %v2624 = vunpack.c.l.b16 %v2545
        %v2625 = vunpack.c.h.b16 %v2545
        %v2626 = vunpack.c.l.b16 %v2546
        %v2627 = vunpack.c.h.b16 %v2546
        %v2628 = vunpack.c.l.b16 %v2547
        %v2629 = vunpack.c.h.b16 %v2547
        %v2630 = vunpack.c.l.b16 %v2548
        %v2631 = vunpack.c.h.b16 %v2548
        %v2632 = vunpack.c.l.b16 %v2549
        %v2633 = vunpack.c.h.b16 %v2549
        %v2634 = vunpack.c.l.b16 %v2550
        %v2635 = vunpack.c.h.b16 %v2550
        %v2636 = vunpack.c.l.b16 %v2551
        %v2637 = vunpack.c.h.b16 %v2551
        %v2638 = vunpack.c.l.b16 %v2552
        %v2639 = vunpack.c.h.b16 %v2552
        %v2640 = vunpack.c.l.b16 %v2553
        %v2641 = vunpack.c.h.b16 %v2553
        %v2642 = vunpack.c.l.b16 %v2554
        %v2643 = vunpack.c.h.b16 %v2554
        %v2644 = vunpack.c.l.b16 %v2555
        %v2645 = vunpack.c.h.b16 %v2555
        %v2646 = vunpack.c.l.b16 %v2556
        %v2647 = vunpack.c.h.b16 %v2556
        %v2648 = vunpack.c.l.b16 %v2557
        %v2649 = vunpack.c.h.b16 %v2557
        %v2650 = vunpack.c.l.b16 %v2558
        %v2651 = vunpack.c.h.b16 %v2558
        %v2652 = vunpack.c.l.b16 %v2559
        %v2653 = vunpack.c.h.b16 %v2559
        %v2654 = vunpack.c.l.b16 %v2560
        %v2655 = vunpack.c.h.b16 %v2560
        %v2656 = vunpack.c.l.b16 %v2561
        %v2657 = vunpack.c.h.b16 %v2561
        %v2658 = vpack.c.b16 %v2598, %v2594
        %v2659 = vpack.c.b16 %v2599, %v2595
        %v2660 = vpack.c.b16 %v2600, %v2596
        %v2661 = vpack.c.b16 %v2601, %v2597
        %v2662 = vpack.c.b16 %v2606, %v2602
        %v2663 = vpack.c.b16 %v2607, %v2603
        %v2664 = vpack.c.b16 %v2608, %v2604
        %v2665 = vpack.c.b16 %v2609, %v2605
        %v2666 = vpack.c.b16 %v2614, %v2610
        %v2667 = vpack.c.b16 %v2615, %v2611
        %v2668 = vpack.c.b16 %v2616, %v2612
        %v2669 = vpack.c.b16 %v2617, %v2613
        %v2670 = vpack.c.b16 %v2622, %v2618
        %v2671 = vpack.c.b16 %v2623, %v2619
        %v2672 = vpack.c.b16 %v2624, %v2620
        %v2673 = vpack.c.b16 %v2625, %v2621
        %v2674 = vpack.c.b16 %v2630, %v2626
        %v2675 = vpack.c.b16 %v2631, %v2627
        %v2676 = vpack.c.b16 %v2632, %v2628
        %v2677 = vpack.c.b16 %v2633, %v2629
        %v2678 = vpack.c.b16 %v2638, %v2634
        %v2679 = vpack.c.b16 %v2639, %v2635
        %v2680 = vpack.c.b16 %v2640, %v2636
        %v2681 = vpack.c.b16 %v2641, %v2637
        %v2682 = vpack.c.b16 %v2646, %v2642
        %v2683 = vpack.c.b16 %v2647, %v2643
        %v2684 = vpack.c.b16 %v2648, %v2644
        %v2685 = vpack.c.b16 %v2649, %v2645
        %v2686 = vpack.c.b16 %v2654, %v2650
        %v2687 = vpack.c.b16 %v2655, %v2651
        %v2688 = vpack.c.b16 %v2656, %v2652
        %v2689 = vpack.c.b16 %v2657, %v2653
        %2722 = vmatprep.subr.bf16.mxu0 %v2687
        %2723 = vmatpush1.bf16.msra.mxu0 %v2686
        %2724 = vmatprep.subr.bf16.mxu0 %v2683
        %2725 = vmatpush1.bf16.msra.mxu0 %v2682
        %2726 = vmatprep.subr.bf16.mxu0 %v2679
        %2727 = vmatpush1.bf16.msra.mxu0 %v2678
        %2728 = vmatprep.subr.bf16.mxu0 %v2675
        %2729 = vmatpush1.bf16.msra.mxu0 %v2674
        %2730 = vmatprep.subr.bf16.mxu0 %v2671
        %2731 = vmatpush1.bf16.msra.mxu0 %v2670
        %2732 = vmatprep.subr.bf16.mxu0 %v2667
        %2733 = vmatpush1.bf16.msra.mxu0 %v2666
        %2734 = vmatprep.subr.bf16.mxu0 %v2663
        %2735 = vmatpush1.bf16.msra.mxu0 %v2662
        %2736 = vmatprep.subr.bf16.mxu0 %v2659
        %2737 = vmatpush1.bf16.msra.mxu0 %v2658
        %2738 = vmatprep.subr.bf16.mxu0 0
        %2739 = vmatpush2.bf16.msra.mxu0 0
        %2740 = vmatprep.subr.bf16.mxu0 0
        %2741 = vmatpush2.bf16.msra.mxu0 0
        %2742 = vmatprep.subr.bf16.mxu0 0
        %2743 = vmatpush2.bf16.msra.mxu0 0
        %2744 = vmatprep.subr.bf16.mxu0 0
        %2745 = vmatpush2.bf16.msra.mxu0 0
        %2746 = vmatprep.subr.bf16.mxu0 0
        %2747 = vmatpush2.bf16.msra.mxu0 0
        %2748 = vmatprep.subr.bf16.mxu0 0
        %2749 = vmatpush2.bf16.msra.mxu0 0
        %2750 = vmatprep.subr.bf16.mxu0 0
        %2751 = vmatpush2.bf16.msra.mxu0 0
        %2752 = vmatprep.subr.bf16.mxu0 0
        %2753 = vmatpush2.bf16.msra.mxu0 0
        %2754 = vmatprep.mubr.bf16.mxu0 0
        %2755 = vmatmul.mubr.bf16.gmra.mxu0 0
        %v2756 = vpop.f32.mrf.mxu0
        %v2757 = vadd.f32 0.0, %v2756
        %v2758 = vpop.f32.mrf.mxu0
        %v2759 = vadd.f32 0.0, %v2758
        %v2760 = vpop.f32.mrf.mxu0
        %v2761 = vpop.f32.mrf.mxu0
        %2762 = vdwg.mxu0
        %2763 = vmatprep.subr.bf16.mxu0 %v2689
        %2764 = vmatpush1.bf16.msra.mxu0 %v2688
        %2765 = vmatprep.subr.bf16.mxu0 %v2685
        %2766 = vmatpush1.bf16.msra.mxu0 %v2684
        %2767 = vmatprep.subr.bf16.mxu0 %v2681
        %2768 = vmatpush1.bf16.msra.mxu0 %v2680
        %2769 = vmatprep.subr.bf16.mxu0 %v2677
        %2770 = vmatpush1.bf16.msra.mxu0 %v2676
        %2771 = vmatprep.subr.bf16.mxu0 %v2673
        %2772 = vmatpush1.bf16.msra.mxu0 %v2672
        %2773 = vmatprep.subr.bf16.mxu0 %v2669
        %2774 = vmatpush1.bf16.msra.mxu0 %v2668
        %2775 = vmatprep.subr.bf16.mxu0 %v2665
        %2776 = vmatpush1.bf16.msra.mxu0 %v2664
        %2777 = vmatprep.subr.bf16.mxu0 %v2661
        %2778 = vmatpush1.bf16.msra.mxu0 %v2660
        %2779 = vmatprep.subr.bf16.mxu0 0
        %2780 = vmatpush2.bf16.msra.mxu0 0
        %2781 = vmatprep.subr.bf16.mxu0 0
        %2782 = vmatpush2.bf16.msra.mxu0 0
        %2783 = vmatprep.subr.bf16.mxu0 0
        %2784 = vmatpush2.bf16.msra.mxu0 0
        %2785 = vmatprep.subr.bf16.mxu0 0
        %2786 = vmatpush2.bf16.msra.mxu0 0
        %2787 = vmatprep.subr.bf16.mxu0 0
        %2788 = vmatpush2.bf16.msra.mxu0 0
        %2789 = vmatprep.subr.bf16.mxu0 0
        %2790 = vmatpush2.bf16.msra.mxu0 0
        %2791 = vmatprep.subr.bf16.mxu0 0
        %2792 = vmatpush2.bf16.msra.mxu0 0
        %2793 = vmatprep.subr.bf16.mxu0 0
        %2794 = vmatpush2.bf16.msra.mxu0 0
        %2795 = vmatprep.mubr.bf16.mxu0 0
        %2796 = vmatmul.mubr.bf16.gmra.mxu0 0
        %v2797 = vpop.f32.mrf.mxu0
        %v2798 = vadd.f32 0.0, %v2797
        %v2799 = vpop.f32.mrf.mxu0
        %v2800 = vadd.f32 0.0, %v2799
        %v2801 = vpop.f32.mrf.mxu0
        %v2802 = vpop.f32.mrf.mxu0
        %2803 = vdwg.mxu0
        %v2808 = vcombine.low %v2757, %v2759
        %v2809 = vcombine.low %v2798, %v2800
        %v2811 = vunpack.c.l.s4 1966171168
        %v2812 = vunpack.c.0.s8 %v2811
        %v2813 = vlaneseq
        %v2814 = vshrl.u32 %v2813, 7
        %v2815 = vsub.s32 %v2812, %v2814
        %v2816 = vrot.slane %v2808, %v2815
        %v2818 = vunpack.c.l.s4 1966171168
        %v2819 = vunpack.c.0.s8 %v2818
        %v2820 = vlaneseq
        %v2821 = vshrl.u32 %v2820, 7
        %v2822 = vsub.s32 %v2819, %v2821
        %v2823 = vrot.slane %v2809, %v2822
        %v2824 = vcombine.low %v2816, %v2823
        %v2826 = vunpack.c.l.s4 1966171168
        %v2827 = vunpack.c.0.s8 %v2826
        %v2828 = vlaneseq
        %v2829 = vshrl.u32 %v2828, 7
        %v2830 = vsub.s32 %v2827, %v2829
        %v2831 = vrot.slane %v2824, %v2830
        %v2833 = vadd.f32 %v2529, %v2831
        %v2834 = vxor.u32 %v2833, 2147483648
        %v2835 = vmul.f32 %v2834, 1.442695
        %v2836 = vpow.pop %v2835
        %v2837 = vadd.f32 %v2836, 1.0
        %v2838 = vrcp.pop %v2837
        %v2839 = vmul.f32 1.0, %v2838
        %v2841 = vrot.slane %v2833, 1
        %v2843 = vxor.u32 %v2841, 2147483648
        %v2844 = vmul.f32 %v2843, 1.442695
        %v2845 = vpow.pop %v2844
        %v2846 = vadd.f32 %v2845, 1.0
        %v2847 = vrcp.pop %v2846
        %v2848 = vmul.f32 1.0, %v2847
        %v2849 = vrot.slane %v2833, 2
        %v2851 = vtanh.pop %v2849
        %v2852 = vrot.slane %v2833, 3
        %v2854 = vxor.u32 %v2852, 2147483648
        %v2855 = vmul.f32 %v2854, 1.442695
        %v2856 = vpow.pop %v2855
        %v2857 = vadd.f32 %v2856, 1.0
        %v2858 = vrcp.pop %v2857
        %v2859 = vmul.f32 1.0, %v2858
        %v2860 = vmul.f32 %v2848, 0.0
        %v2861 = vmul.f32 %v2839, %v2851
        %v2862 = vadd.f32 %v2860, %v2861
        %v2863 = vtanh.pop %v2862
        %v2864 = vmul.f32 %v2859, %v2863
        %2865 = vst [vmem:[#allocation3] sm:$0x1] %v2864
        %v2866 = vld [vmem:[%s1204] ss:$4 sm:$0xf]
        %v2867 = vpack.c.bf16 %v2864, %v2864
        %v2868 = vld [vmem:[%s8] sm:$0xff]
        %v2869 = vld [vmem:[%s8 + $0x8] sm:$0xff]
        %v2870 = vld [vmem:[%s8 + $0x10] sm:$0xff]
        %v2871 = vld [vmem:[%s8 + $0x18] sm:$0xff]
        %v2872 = vld [vmem:[%s8 + $0x20] sm:$0xff]
        %v2873 = vld [vmem:[%s8 + $0x28] sm:$0xff]
        %v2874 = vld [vmem:[%s8 + $0x30] sm:$0xff]
        %v2875 = vld [vmem:[%s8 + $0x38] sm:$0xff]
        %v2876 = vld [vmem:[%s8 + $0x40] sm:$0xff]
        %v2877 = vld [vmem:[%s8 + $0x48] sm:$0xff]
        %v2878 = vld [vmem:[%s8 + $0x50] sm:$0xff]
        %v2879 = vld [vmem:[%s8 + $0x58] sm:$0xff]
        %v2880 = vld [vmem:[%s8 + $0x60] sm:$0xff]
        %v2881 = vld [vmem:[%s8 + $0x68] sm:$0xff]
        %v2882 = vld [vmem:[%s8 + $0x70] sm:$0xff]
        %v2883 = vld [vmem:[%s8 + $0x78] sm:$0xff]
        %v2884 = vld [vmem:[%s8 + $0x80] sm:$0xff]
        %v2885 = vld [vmem:[%s8 + $0x88] sm:$0xff]
        %v2886 = vld [vmem:[%s8 + $0x90] sm:$0xff]
        %v2887 = vld [vmem:[%s8 + $0x98] sm:$0xff]
        %v2888 = vld [vmem:[%s8 + $0xa0] sm:$0xff]
        %v2889 = vld [vmem:[%s8 + $0xa8] sm:$0xff]
        %v2890 = vld [vmem:[%s8 + $0xb0] sm:$0xff]
        %v2891 = vld [vmem:[%s8 + $0xb8] sm:$0xff]
        %v2892 = vld [vmem:[%s8 + $0xc0] sm:$0xff]
        %v2893 = vld [vmem:[%s8 + $0xc8] sm:$0xff]
        %v2894 = vld [vmem:[%s8 + $0xd0] sm:$0xff]
        %v2895 = vld [vmem:[%s8 + $0xd8] sm:$0xff]
        %v2896 = vld [vmem:[%s8 + $0xe0] sm:$0xff]
        %v2897 = vld [vmem:[%s8 + $0xe8] sm:$0xff]
        %v2898 = vld [vmem:[%s8 + $0xf0] sm:$0xff]
        %v2899 = vld [vmem:[%s8 + $0xf8] sm:$0xff]
        %v2932 = vunpack.c.l.b16 %v2868
        %v2933 = vunpack.c.h.b16 %v2868
        %v2934 = vunpack.c.l.b16 %v2869
        %v2935 = vunpack.c.h.b16 %v2869
        %v2936 = vunpack.c.l.b16 %v2870
        %v2937 = vunpack.c.h.b16 %v2870
        %v2938 = vunpack.c.l.b16 %v2871
        %v2939 = vunpack.c.h.b16 %v2871
        %v2940 = vunpack.c.l.b16 %v2872
        %v2941 = vunpack.c.h.b16 %v2872
        %v2942 = vunpack.c.l.b16 %v2873
        %v2943 = vunpack.c.h.b16 %v2873
        %v2944 = vunpack.c.l.b16 %v2874
        %v2945 = vunpack.c.h.b16 %v2874
        %v2946 = vunpack.c.l.b16 %v2875
        %v2947 = vunpack.c.h.b16 %v2875
        %v2948 = vunpack.c.l.b16 %v2876
        %v2949 = vunpack.c.h.b16 %v2876
        %v2950 = vunpack.c.l.b16 %v2877
        %v2951 = vunpack.c.h.b16 %v2877
        %v2952 = vunpack.c.l.b16 %v2878
        %v2953 = vunpack.c.h.b16 %v2878
        %v2954 = vunpack.c.l.b16 %v2879
        %v2955 = vunpack.c.h.b16 %v2879
        %v2956 = vunpack.c.l.b16 %v2880
        %v2957 = vunpack.c.h.b16 %v2880
        %v2958 = vunpack.c.l.b16 %v2881
        %v2959 = vunpack.c.h.b16 %v2881
        %v2960 = vunpack.c.l.b16 %v2882
        %v2961 = vunpack.c.h.b16 %v2882
        %v2962 = vunpack.c.l.b16 %v2883
        %v2963 = vunpack.c.h.b16 %v2883
        %v2964 = vunpack.c.l.b16 %v2884
        %v2965 = vunpack.c.h.b16 %v2884
        %v2966 = vunpack.c.l.b16 %v2885
        %v2967 = vunpack.c.h.b16 %v2885
        %v2968 = vunpack.c.l.b16 %v2886
        %v2969 = vunpack.c.h.b16 %v2886
        %v2970 = vunpack.c.l.b16 %v2887
        %v2971 = vunpack.c.h.b16 %v2887
        %v2972 = vunpack.c.l.b16 %v2888
        %v2973 = vunpack.c.h.b16 %v2888
        %v2974 = vunpack.c.l.b16 %v2889
        %v2975 = vunpack.c.h.b16 %v2889
        %v2976 = vunpack.c.l.b16 %v2890
        %v2977 = vunpack.c.h.b16 %v2890
        %v2978 = vunpack.c.l.b16 %v2891
        %v2979 = vunpack.c.h.b16 %v2891
        %v2980 = vunpack.c.l.b16 %v2892
        %v2981 = vunpack.c.h.b16 %v2892
        %v2982 = vunpack.c.l.b16 %v2893
        %v2983 = vunpack.c.h.b16 %v2893
        %v2984 = vunpack.c.l.b16 %v2894
        %v2985 = vunpack.c.h.b16 %v2894
        %v2986 = vunpack.c.l.b16 %v2895
        %v2987 = vunpack.c.h.b16 %v2895
        %v2988 = vunpack.c.l.b16 %v2896
        %v2989 = vunpack.c.h.b16 %v2896
        %v2990 = vunpack.c.l.b16 %v2897
        %v2991 = vunpack.c.h.b16 %v2897
        %v2992 = vunpack.c.l.b16 %v2898
        %v2993 = vunpack.c.h.b16 %v2898
        %v2994 = vunpack.c.l.b16 %v2899
        %v2995 = vunpack.c.h.b16 %v2899
        %v2996 = vpack.c.b16 %v2936, %v2932
        %v2997 = vpack.c.b16 %v2937, %v2933
        %v2998 = vpack.c.b16 %v2938, %v2934
        %v2999 = vpack.c.b16 %v2939, %v2935
        %v3000 = vpack.c.b16 %v2944, %v2940
        %v3001 = vpack.c.b16 %v2945, %v2941
        %v3002 = vpack.c.b16 %v2946, %v2942
        %v3003 = vpack.c.b16 %v2947, %v2943
        %v3004 = vpack.c.b16 %v2952, %v2948
        %v3005 = vpack.c.b16 %v2953, %v2949
        %v3006 = vpack.c.b16 %v2954, %v2950
        %v3007 = vpack.c.b16 %v2955, %v2951
        %v3008 = vpack.c.b16 %v2960, %v2956
        %v3009 = vpack.c.b16 %v2961, %v2957
        %v3010 = vpack.c.b16 %v2962, %v2958
        %v3011 = vpack.c.b16 %v2963, %v2959
        %v3012 = vpack.c.b16 %v2968, %v2964
        %v3013 = vpack.c.b16 %v2969, %v2965
        %v3014 = vpack.c.b16 %v2970, %v2966
        %v3015 = vpack.c.b16 %v2971, %v2967
        %v3016 = vpack.c.b16 %v2976, %v2972
        %v3017 = vpack.c.b16 %v2977, %v2973
        %v3018 = vpack.c.b16 %v2978, %v2974
        %v3019 = vpack.c.b16 %v2979, %v2975
        %v3020 = vpack.c.b16 %v2984, %v2980
        %v3021 = vpack.c.b16 %v2985, %v2981
        %v3022 = vpack.c.b16 %v2986, %v2982
        %v3023 = vpack.c.b16 %v2987, %v2983
        %v3024 = vpack.c.b16 %v2992, %v2988
        %v3025 = vpack.c.b16 %v2993, %v2989
        %v3026 = vpack.c.b16 %v2994, %v2990
        %v3027 = vpack.c.b16 %v2995, %v2991
        %3060 = vmatprep.subr.bf16.mxu0 %v3025
        %3061 = vmatpush1.bf16.msra.mxu0 %v3024
        %3062 = vmatprep.subr.bf16.mxu0 %v3021
        %3063 = vmatpush1.bf16.msra.mxu0 %v3020
        %3064 = vmatprep.subr.bf16.mxu0 %v3017
        %3065 = vmatpush1.bf16.msra.mxu0 %v3016
        %3066 = vmatprep.subr.bf16.mxu0 %v3013
        %3067 = vmatpush1.bf16.msra.mxu0 %v3012
        %3068 = vmatprep.subr.bf16.mxu0 %v3009
        %3069 = vmatpush1.bf16.msra.mxu0 %v3008
        %3070 = vmatprep.subr.bf16.mxu0 %v3005
        %3071 = vmatpush1.bf16.msra.mxu0 %v3004
        %3072 = vmatprep.subr.bf16.mxu0 %v3001
        %3073 = vmatpush1.bf16.msra.mxu0 %v3000
        %3074 = vmatprep.subr.bf16.mxu0 %v2997
        %3075 = vmatpush1.bf16.msra.mxu0 %v2996
        %3076 = vmatprep.subr.bf16.mxu0 0
        %3077 = vmatpush2.bf16.msra.mxu0 0
        %3078 = vmatprep.subr.bf16.mxu0 0
        %3079 = vmatpush2.bf16.msra.mxu0 0
        %3080 = vmatprep.subr.bf16.mxu0 0
        %3081 = vmatpush2.bf16.msra.mxu0 0
        %3082 = vmatprep.subr.bf16.mxu0 0
        %3083 = vmatpush2.bf16.msra.mxu0 0
        %3084 = vmatprep.subr.bf16.mxu0 0
        %3085 = vmatpush2.bf16.msra.mxu0 0
        %3086 = vmatprep.subr.bf16.mxu0 0
        %3087 = vmatpush2.bf16.msra.mxu0 0
        %3088 = vmatprep.subr.bf16.mxu0 0
        %3089 = vmatpush2.bf16.msra.mxu0 0
        %3090 = vmatprep.subr.bf16.mxu0 0
        %3091 = vmatpush2.bf16.msra.mxu0 0
        %3092 = vmatprep.mubr.bf16.mxu0 0
        %3093 = vmatmul.mubr.bf16.gmra.mxu0 %v2867
        %v3094 = vpop.f32.mrf.mxu0
        %v3095 = vadd.f32 0.0, %v3094
        %v3096 = vpop.f32.mrf.mxu0
        %v3097 = vadd.f32 0.0, %v3096
        %v3098 = vpop.f32.mrf.mxu0
        %v3099 = vpop.f32.mrf.mxu0
        %3100 = vdwg.mxu0
        %3101 = vmatprep.subr.bf16.mxu0 %v3027
        %3102 = vmatpush1.bf16.msra.mxu0 %v3026
        %3103 = vmatprep.subr.bf16.mxu0 %v3023
        %3104 = vmatpush1.bf16.msra.mxu0 %v3022
        %3105 = vmatprep.subr.bf16.mxu0 %v3019
        %3106 = vmatpush1.bf16.msra.mxu0 %v3018
        %3107 = vmatprep.subr.bf16.mxu0 %v3015
        %3108 = vmatpush1.bf16.msra.mxu0 %v3014
        %3109 = vmatprep.subr.bf16.mxu0 %v3011
        %3110 = vmatpush1.bf16.msra.mxu0 %v3010
        %3111 = vmatprep.subr.bf16.mxu0 %v3007
        %3112 = vmatpush1.bf16.msra.mxu0 %v3006
        %3113 = vmatprep.subr.bf16.mxu0 %v3003
        %3114 = vmatpush1.bf16.msra.mxu0 %v3002
        %3115 = vmatprep.subr.bf16.mxu0 %v2999
        %3116 = vmatpush1.bf16.msra.mxu0 %v2998
        %3117 = vmatprep.subr.bf16.mxu0 0
        %3118 = vmatpush2.bf16.msra.mxu0 0
        %3119 = vmatprep.subr.bf16.mxu0 0
        %3120 = vmatpush2.bf16.msra.mxu0 0
        %3121 = vmatprep.subr.bf16.mxu0 0
        %3122 = vmatpush2.bf16.msra.mxu0 0
        %3123 = vmatprep.subr.bf16.mxu0 0
        %3124 = vmatpush2.bf16.msra.mxu0 0
        %3125 = vmatprep.subr.bf16.mxu0 0
        %3126 = vmatpush2.bf16.msra.mxu0 0
        %3127 = vmatprep.subr.bf16.mxu0 0
        %3128 = vmatpush2.bf16.msra.mxu0 0
        %3129 = vmatprep.subr.bf16.mxu0 0
        %3130 = vmatpush2.bf16.msra.mxu0 0
        %3131 = vmatprep.subr.bf16.mxu0 0
        %3132 = vmatpush2.bf16.msra.mxu0 0
        %3133 = vmatprep.mubr.bf16.mxu0 0
        %3134 = vmatmul.mubr.bf16.gmra.mxu0 %v2867
        %v3135 = vpop.f32.mrf.mxu0
        %v3136 = vadd.f32 0.0, %v3135
        %v3137 = vpop.f32.mrf.mxu0
        %v3138 = vadd.f32 0.0, %v3137
        %v3139 = vpop.f32.mrf.mxu0
        %v3140 = vpop.f32.mrf.mxu0
        %3141 = vdwg.mxu0
        %v3146 = vcombine.low %v3095, %v3097
        %v3147 = vcombine.low %v3136, %v3138
        %v3149 = vunpack.c.l.s4 1966171168
        %v3150 = vunpack.c.0.s8 %v3149
        %v3151 = vlaneseq
        %v3152 = vshrl.u32 %v3151, 7
        %v3153 = vsub.s32 %v3150, %v3152
        %v3154 = vrot.slane %v3146, %v3153
        %v3156 = vunpack.c.l.s4 1966171168
        %v3157 = vunpack.c.0.s8 %v3156
        %v3158 = vlaneseq
        %v3159 = vshrl.u32 %v3158, 7
        %v3160 = vsub.s32 %v3157, %v3159
        %v3161 = vrot.slane %v3147, %v3160
        %v3162 = vcombine.low %v3154, %v3161
        %v3164 = vunpack.c.l.s4 1966171168
        %v3165 = vunpack.c.0.s8 %v3164
        %v3166 = vlaneseq
        %v3167 = vshrl.u32 %v3166, 7
        %v3168 = vsub.s32 %v3165, %v3167
        %v3169 = vrot.slane %v3162, %v3168
        %v3171 = vadd.f32 %v2866, %v3169
        %v3172 = vxor.u32 %v3171, 2147483648
        %v3173 = vmul.f32 %v3172, 1.442695
        %v3174 = vpow.pop %v3173
        %v3175 = vadd.f32 %v3174, 1.0
        %v3176 = vrcp.pop %v3175
        %v3177 = vmul.f32 1.0, %v3176
        %v3179 = vrot.slane %v3171, 1
        %v3181 = vxor.u32 %v3179, 2147483648
        %v3182 = vmul.f32 %v3181, 1.442695
        %v3183 = vpow.pop %v3182
        %v3184 = vadd.f32 %v3183, 1.0
        %v3185 = vrcp.pop %v3184
        %v3186 = vmul.f32 1.0, %v3185
        %v3187 = vrot.slane %v3171, 2
        %v3189 = vtanh.pop %v3187
        %v3190 = vrot.slane %v3171, 3
        %v3192 = vxor.u32 %v3190, 2147483648
        %v3193 = vmul.f32 %v3192, 1.442695
        %v3194 = vpow.pop %v3193
        %v3195 = vadd.f32 %v3194, 1.0
        %v3196 = vrcp.pop %v3195
        %v3197 = vmul.f32 1.0, %v3196
        %v3198 = vmul.f32 %v3186, %v2862
        %v3199 = vmul.f32 %v3177, %v3189
        %v3200 = vadd.f32 %v3198, %v3199
        %v3201 = vtanh.pop %v3200
        %v3202 = vmul.f32 %v3197, %v3201
        %3203 = vst [vmem:[#allocation3 + $0x1] sm:$0x1] %v3202
        %v3204 = vld [vmem:[%s1543] ss:$4 sm:$0xf]
        %v3205 = vpack.c.bf16 %v3202, %v3202
        %v3206 = vld [vmem:[%s8] sm:$0xff]
        %v3207 = vld [vmem:[%s8 + $0x8] sm:$0xff]
        %v3208 = vld [vmem:[%s8 + $0x10] sm:$0xff]
        %v3209 = vld [vmem:[%s8 + $0x18] sm:$0xff]
        %v3210 = vld [vmem:[%s8 + $0x20] sm:$0xff]
        %v3211 = vld [vmem:[%s8 + $0x28] sm:$0xff]
        %v3212 = vld [vmem:[%s8 + $0x30] sm:$0xff]
        %v3213 = vld [vmem:[%s8 + $0x38] sm:$0xff]
        %v3214 = vld [vmem:[%s8 + $0x40] sm:$0xff]
        %v3215 = vld [vmem:[%s8 + $0x48] sm:$0xff]
        %v3216 = vld [vmem:[%s8 + $0x50] sm:$0xff]
        %v3217 = vld [vmem:[%s8 + $0x58] sm:$0xff]
        %v3218 = vld [vmem:[%s8 + $0x60] sm:$0xff]
        %v3219 = vld [vmem:[%s8 + $0x68] sm:$0xff]
        %v3220 = vld [vmem:[%s8 + $0x70] sm:$0xff]
        %v3221 = vld [vmem:[%s8 + $0x78] sm:$0xff]
        %v3222 = vld [vmem:[%s8 + $0x80] sm:$0xff]
        %v3223 = vld [vmem:[%s8 + $0x88] sm:$0xff]
        %v3224 = vld [vmem:[%s8 + $0x90] sm:$0xff]
        %v3225 = vld [vmem:[%s8 + $0x98] sm:$0xff]
        %v3226 = vld [vmem:[%s8 + $0xa0] sm:$0xff]
        %v3227 = vld [vmem:[%s8 + $0xa8] sm:$0xff]
        %v3228 = vld [vmem:[%s8 + $0xb0] sm:$0xff]
        %v3229 = vld [vmem:[%s8 + $0xb8] sm:$0xff]
        %v3230 = vld [vmem:[%s8 + $0xc0] sm:$0xff]
        %v3231 = vld [vmem:[%s8 + $0xc8] sm:$0xff]
        %v3232 = vld [vmem:[%s8 + $0xd0] sm:$0xff]
        %v3233 = vld [vmem:[%s8 + $0xd8] sm:$0xff]
        %v3234 = vld [vmem:[%s8 + $0xe0] sm:$0xff]
        %v3235 = vld [vmem:[%s8 + $0xe8] sm:$0xff]
        %v3236 = vld [vmem:[%s8 + $0xf0] sm:$0xff]
        %v3237 = vld [vmem:[%s8 + $0xf8] sm:$0xff]
        %v3270 = vunpack.c.l.b16 %v3206
        %v3271 = vunpack.c.h.b16 %v3206
        %v3272 = vunpack.c.l.b16 %v3207
        %v3273 = vunpack.c.h.b16 %v3207
        %v3274 = vunpack.c.l.b16 %v3208
        %v3275 = vunpack.c.h.b16 %v3208
        %v3276 = vunpack.c.l.b16 %v3209
        %v3277 = vunpack.c.h.b16 %v3209
        %v3278 = vunpack.c.l.b16 %v3210
        %v3279 = vunpack.c.h.b16 %v3210
        %v3280 = vunpack.c.l.b16 %v3211
        %v3281 = vunpack.c.h.b16 %v3211
        %v3282 = vunpack.c.l.b16 %v3212
        %v3283 = vunpack.c.h.b16 %v3212
        %v3284 = vunpack.c.l.b16 %v3213
        %v3285 = vunpack.c.h.b16 %v3213
        %v3286 = vunpack.c.l.b16 %v3214
        %v3287 = vunpack.c.h.b16 %v3214
        %v3288 = vunpack.c.l.b16 %v3215
        %v3289 = vunpack.c.h.b16 %v3215
        %v3290 = vunpack.c.l.b16 %v3216
        %v3291 = vunpack.c.h.b16 %v3216
        %v3292 = vunpack.c.l.b16 %v3217
        %v3293 = vunpack.c.h.b16 %v3217
        %v3294 = vunpack.c.l.b16 %v3218
        %v3295 = vunpack.c.h.b16 %v3218
        %v3296 = vunpack.c.l.b16 %v3219
        %v3297 = vunpack.c.h.b16 %v3219
        %v3298 = vunpack.c.l.b16 %v3220
        %v3299 = vunpack.c.h.b16 %v3220
        %v3300 = vunpack.c.l.b16 %v3221
        %v3301 = vunpack.c.h.b16 %v3221
        %v3302 = vunpack.c.l.b16 %v3222
        %v3303 = vunpack.c.h.b16 %v3222
        %v3304 = vunpack.c.l.b16 %v3223
        %v3305 = vunpack.c.h.b16 %v3223
        %v3306 = vunpack.c.l.b16 %v3224
        %v3307 = vunpack.c.h.b16 %v3224
        %v3308 = vunpack.c.l.b16 %v3225
        %v3309 = vunpack.c.h.b16 %v3225
        %v3310 = vunpack.c.l.b16 %v3226
        %v3311 = vunpack.c.h.b16 %v3226
        %v3312 = vunpack.c.l.b16 %v3227
        %v3313 = vunpack.c.h.b16 %v3227
        %v3314 = vunpack.c.l.b16 %v3228
        %v3315 = vunpack.c.h.b16 %v3228
        %v3316 = vunpack.c.l.b16 %v3229
        %v3317 = vunpack.c.h.b16 %v3229
        %v3318 = vunpack.c.l.b16 %v3230
        %v3319 = vunpack.c.h.b16 %v3230
        %v3320 = vunpack.c.l.b16 %v3231
        %v3321 = vunpack.c.h.b16 %v3231
        %v3322 = vunpack.c.l.b16 %v3232
        %v3323 = vunpack.c.h.b16 %v3232
        %v3324 = vunpack.c.l.b16 %v3233
        %v3325 = vunpack.c.h.b16 %v3233
        %v3326 = vunpack.c.l.b16 %v3234
        %v3327 = vunpack.c.h.b16 %v3234
        %v3328 = vunpack.c.l.b16 %v3235
        %v3329 = vunpack.c.h.b16 %v3235
        %v3330 = vunpack.c.l.b16 %v3236
        %v3331 = vunpack.c.h.b16 %v3236
        %v3332 = vunpack.c.l.b16 %v3237
        %v3333 = vunpack.c.h.b16 %v3237
        %v3334 = vpack.c.b16 %v3274, %v3270
        %v3335 = vpack.c.b16 %v3275, %v3271
        %v3336 = vpack.c.b16 %v3276, %v3272
        %v3337 = vpack.c.b16 %v3277, %v3273
        %v3338 = vpack.c.b16 %v3282, %v3278
        %v3339 = vpack.c.b16 %v3283, %v3279
        %v3340 = vpack.c.b16 %v3284, %v3280
        %v3341 = vpack.c.b16 %v3285, %v3281
        %v3342 = vpack.c.b16 %v3290, %v3286
        %v3343 = vpack.c.b16 %v3291, %v3287
        %v3344 = vpack.c.b16 %v3292, %v3288
        %v3345 = vpack.c.b16 %v3293, %v3289
        %v3346 = vpack.c.b16 %v3298, %v3294
        %v3347 = vpack.c.b16 %v3299, %v3295
        %v3348 = vpack.c.b16 %v3300, %v3296
        %v3349 = vpack.c.b16 %v3301, %v3297
        %v3350 = vpack.c.b16 %v3306, %v3302
        %v3351 = vpack.c.b16 %v3307, %v3303
        %v3352 = vpack.c.b16 %v3308, %v3304
        %v3353 = vpack.c.b16 %v3309, %v3305
        %v3354 = vpack.c.b16 %v3314, %v3310
        %v3355 = vpack.c.b16 %v3315, %v3311
        %v3356 = vpack.c.b16 %v3316, %v3312
        %v3357 = vpack.c.b16 %v3317, %v3313
        %v3358 = vpack.c.b16 %v3322, %v3318
        %v3359 = vpack.c.b16 %v3323, %v3319
        %v3360 = vpack.c.b16 %v3324, %v3320
        %v3361 = vpack.c.b16 %v3325, %v3321
        %v3362 = vpack.c.b16 %v3330, %v3326
        %v3363 = vpack.c.b16 %v3331, %v3327
        %v3364 = vpack.c.b16 %v3332, %v3328
        %v3365 = vpack.c.b16 %v3333, %v3329
        %3398 = vmatprep.subr.bf16.mxu0 %v3363
        %3399 = vmatpush1.bf16.msra.mxu0 %v3362
        %3400 = vmatprep.subr.bf16.mxu0 %v3359
        %3401 = vmatpush1.bf16.msra.mxu0 %v3358
        %3402 = vmatprep.subr.bf16.mxu0 %v3355
        %3403 = vmatpush1.bf16.msra.mxu0 %v3354
        %3404 = vmatprep.subr.bf16.mxu0 %v3351
        %3405 = vmatpush1.bf16.msra.mxu0 %v3350
        %3406 = vmatprep.subr.bf16.mxu0 %v3347
        %3407 = vmatpush1.bf16.msra.mxu0 %v3346
        %3408 = vmatprep.subr.bf16.mxu0 %v3343
        %3409 = vmatpush1.bf16.msra.mxu0 %v3342
        %3410 = vmatprep.subr.bf16.mxu0 %v3339
        %3411 = vmatpush1.bf16.msra.mxu0 %v3338
        %3412 = vmatprep.subr.bf16.mxu0 %v3335
        %3413 = vmatpush1.bf16.msra.mxu0 %v3334
        %3414 = vmatprep.subr.bf16.mxu0 0
        %3415 = vmatpush2.bf16.msra.mxu0 0
        %3416 = vmatprep.subr.bf16.mxu0 0
        %3417 = vmatpush2.bf16.msra.mxu0 0
        %3418 = vmatprep.subr.bf16.mxu0 0
        %3419 = vmatpush2.bf16.msra.mxu0 0
        %3420 = vmatprep.subr.bf16.mxu0 0
        %3421 = vmatpush2.bf16.msra.mxu0 0
        %3422 = vmatprep.subr.bf16.mxu0 0
        %3423 = vmatpush2.bf16.msra.mxu0 0
        %3424 = vmatprep.subr.bf16.mxu0 0
        %3425 = vmatpush2.bf16.msra.mxu0 0
        %3426 = vmatprep.subr.bf16.mxu0 0
        %3427 = vmatpush2.bf16.msra.mxu0 0
        %3428 = vmatprep.subr.bf16.mxu0 0
        %3429 = vmatpush2.bf16.msra.mxu0 0
        %3430 = vmatprep.mubr.bf16.mxu0 0
        %3431 = vmatmul.mubr.bf16.gmra.mxu0 %v3205
        %v3432 = vpop.f32.mrf.mxu0
        %v3433 = vadd.f32 0.0, %v3432
        %v3434 = vpop.f32.mrf.mxu0
        %v3435 = vadd.f32 0.0, %v3434
        %v3436 = vpop.f32.mrf.mxu0
        %v3437 = vpop.f32.mrf.mxu0
        %3438 = vdwg.mxu0
        %3439 = vmatprep.subr.bf16.mxu0 %v3365
        %3440 = vmatpush1.bf16.msra.mxu0 %v3364
        %3441 = vmatprep.subr.bf16.mxu0 %v3361
        %3442 = vmatpush1.bf16.msra.mxu0 %v3360
        %3443 = vmatprep.subr.bf16.mxu0 %v3357
        %3444 = vmatpush1.bf16.msra.mxu0 %v3356
        %3445 = vmatprep.subr.bf16.mxu0 %v3353
        %3446 = vmatpush1.bf16.msra.mxu0 %v3352
        %3447 = vmatprep.subr.bf16.mxu0 %v3349
        %3448 = vmatpush1.bf16.msra.mxu0 %v3348
        %3449 = vmatprep.subr.bf16.mxu0 %v3345
        %3450 = vmatpush1.bf16.msra.mxu0 %v3344
        %3451 = vmatprep.subr.bf16.mxu0 %v3341
        %3452 = vmatpush1.bf16.msra.mxu0 %v3340
        %3453 = vmatprep.subr.bf16.mxu0 %v3337
        %3454 = vmatpush1.bf16.msra.mxu0 %v3336
        %3455 = vmatprep.subr.bf16.mxu0 0
        %3456 = vmatpush2.bf16.msra.mxu0 0
        %3457 = vmatprep.subr.bf16.mxu0 0
        %3458 = vmatpush2.bf16.msra.mxu0 0
        %3459 = vmatprep.subr.bf16.mxu0 0
        %3460 = vmatpush2.bf16.msra.mxu0 0
        %3461 = vmatprep.subr.bf16.mxu0 0
        %3462 = vmatpush2.bf16.msra.mxu0 0
        %3463 = vmatprep.subr.bf16.mxu0 0
        %3464 = vmatpush2.bf16.msra.mxu0 0
        %3465 = vmatprep.subr.bf16.mxu0 0
        %3466 = vmatpush2.bf16.msra.mxu0 0
        %3467 = vmatprep.subr.bf16.mxu0 0
        %3468 = vmatpush2.bf16.msra.mxu0 0
        %3469 = vmatprep.subr.bf16.mxu0 0
        %3470 = vmatpush2.bf16.msra.mxu0 0
        %3471 = vmatprep.mubr.bf16.mxu0 0
        %3472 = vmatmul.mubr.bf16.gmra.mxu0 %v3205
        %v3473 = vpop.f32.mrf.mxu0
        %v3474 = vadd.f32 0.0, %v3473
        %v3475 = vpop.f32.mrf.mxu0
        %v3476 = vadd.f32 0.0, %v3475
        %v3477 = vpop.f32.mrf.mxu0
        %v3478 = vpop.f32.mrf.mxu0
        %3479 = vdwg.mxu0
        %v3484 = vcombine.low %v3433, %v3435
        %v3485 = vcombine.low %v3474, %v3476
        %v3487 = vunpack.c.l.s4 1966171168
        %v3488 = vunpack.c.0.s8 %v3487
        %v3489 = vlaneseq
        %v3490 = vshrl.u32 %v3489, 7
        %v3491 = vsub.s32 %v3488, %v3490
        %v3492 = vrot.slane %v3484, %v3491
        %v3494 = vunpack.c.l.s4 1966171168
        %v3495 = vunpack.c.0.s8 %v3494
        %v3496 = vlaneseq
        %v3497 = vshrl.u32 %v3496, 7
        %v3498 = vsub.s32 %v3495, %v3497
        %v3499 = vrot.slane %v3485, %v3498
        %v3500 = vcombine.low %v3492, %v3499
        %v3502 = vunpack.c.l.s4 1966171168
        %v3503 = vunpack.c.0.s8 %v3502
        %v3504 = vlaneseq
        %v3505 = vshrl.u32 %v3504, 7
        %v3506 = vsub.s32 %v3503, %v3505
        %v3507 = vrot.slane %v3500, %v3506
        %v3509 = vadd.f32 %v3204, %v3507
        %v3510 = vxor.u32 %v3509, 2147483648
        %v3511 = vmul.f32 %v3510, 1.442695
        %v3512 = vpow.pop %v3511
        %v3513 = vadd.f32 %v3512, 1.0
        %v3514 = vrcp.pop %v3513
        %v3515 = vmul.f32 1.0, %v3514
        %v3517 = vrot.slane %v3509, 1
        %v3519 = vxor.u32 %v3517, 2147483648
        %v3520 = vmul.f32 %v3519, 1.442695
        %v3521 = vpow.pop %v3520
        %v3522 = vadd.f32 %v3521, 1.0
        %v3523 = vrcp.pop %v3522
        %v3524 = vmul.f32 1.0, %v3523
        %v3525 = vrot.slane %v3509, 2
        %v3527 = vtanh.pop %v3525
        %v3528 = vrot.slane %v3509, 3
        %v3530 = vxor.u32 %v3528, 2147483648
        %v3531 = vmul.f32 %v3530, 1.442695
        %v3532 = vpow.pop %v3531
        %v3533 = vadd.f32 %v3532, 1.0
        %v3534 = vrcp.pop %v3533
        %v3535 = vmul.f32 1.0, %v3534
        %v3536 = vmul.f32 %v3524, %v3200
        %v3537 = vmul.f32 %v3515, %v3527
        %v3538 = vadd.f32 %v3536, %v3537
        %v3539 = vtanh.pop %v3538
        %v3540 = vmul.f32 %v3535, %v3539
        %3541 = vst [vmem:[#allocation3 + $0x2] sm:$0x1] %v3540
        %v3542 = vld [vmem:[%s1882] ss:$4 sm:$0xf]
        %v3543 = vpack.c.bf16 %v3540, %v3540
        %v3544 = vld [vmem:[%s8] sm:$0xff]
        %v3545 = vld [vmem:[%s8 + $0x8] sm:$0xff]
        %v3546 = vld [vmem:[%s8 + $0x10] sm:$0xff]
        %v3547 = vld [vmem:[%s8 + $0x18] sm:$0xff]
        %v3548 = vld [vmem:[%s8 + $0x20] sm:$0xff]
        %v3549 = vld [vmem:[%s8 + $0x28] sm:$0xff]
        %v3550 = vld [vmem:[%s8 + $0x30] sm:$0xff]
        %v3551 = vld [vmem:[%s8 + $0x38] sm:$0xff]
        %v3552 = vld [vmem:[%s8 + $0x40] sm:$0xff]
        %v3553 = vld [vmem:[%s8 + $0x48] sm:$0xff]
        %v3554 = vld [vmem:[%s8 + $0x50] sm:$0xff]
        %v3555 = vld [vmem:[%s8 + $0x58] sm:$0xff]
        %v3556 = vld [vmem:[%s8 + $0x60] sm:$0xff]
        %v3557 = vld [vmem:[%s8 + $0x68] sm:$0xff]
        %v3558 = vld [vmem:[%s8 + $0x70] sm:$0xff]
        %v3559 = vld [vmem:[%s8 + $0x78] sm:$0xff]
        %v3560 = vld [vmem:[%s8 + $0x80] sm:$0xff]
        %v3561 = vld [vmem:[%s8 + $0x88] sm:$0xff]
        %v3562 = vld [vmem:[%s8 + $0x90] sm:$0xff]
        %v3563 = vld [vmem:[%s8 + $0x98] sm:$0xff]
        %v3564 = vld [vmem:[%s8 + $0xa0] sm:$0xff]
        %v3565 = vld [vmem:[%s8 + $0xa8] sm:$0xff]
        %v3566 = vld [vmem:[%s8 + $0xb0] sm:$0xff]
        %v3567 = vld [vmem:[%s8 + $0xb8] sm:$0xff]
        %v3568 = vld [vmem:[%s8 + $0xc0] sm:$0xff]
        %v3569 = vld [vmem:[%s8 + $0xc8] sm:$0xff]
        %v3570 = vld [vmem:[%s8 + $0xd0] sm:$0xff]
        %v3571 = vld [vmem:[%s8 + $0xd8] sm:$0xff]
        %v3572 = vld [vmem:[%s8 + $0xe0] sm:$0xff]
        %v3573 = vld [vmem:[%s8 + $0xe8] sm:$0xff]
        %v3574 = vld [vmem:[%s8 + $0xf0] sm:$0xff]
        %v3575 = vld [vmem:[%s8 + $0xf8] sm:$0xff]
        %v3608 = vunpack.c.l.b16 %v3544
        %v3609 = vunpack.c.h.b16 %v3544
        %v3610 = vunpack.c.l.b16 %v3545
        %v3611 = vunpack.c.h.b16 %v3545
        %v3612 = vunpack.c.l.b16 %v3546
        %v3613 = vunpack.c.h.b16 %v3546
        %v3614 = vunpack.c.l.b16 %v3547
        %v3615 = vunpack.c.h.b16 %v3547
        %v3616 = vunpack.c.l.b16 %v3548
        %v3617 = vunpack.c.h.b16 %v3548
        %v3618 = vunpack.c.l.b16 %v3549
        %v3619 = vunpack.c.h.b16 %v3549
        %v3620 = vunpack.c.l.b16 %v3550
        %v3621 = vunpack.c.h.b16 %v3550
        %v3622 = vunpack.c.l.b16 %v3551
        %v3623 = vunpack.c.h.b16 %v3551
        %v3624 = vunpack.c.l.b16 %v3552
        %v3625 = vunpack.c.h.b16 %v3552
        %v3626 = vunpack.c.l.b16 %v3553
        %v3627 = vunpack.c.h.b16 %v3553
        %v3628 = vunpack.c.l.b16 %v3554
        %v3629 = vunpack.c.h.b16 %v3554
        %v3630 = vunpack.c.l.b16 %v3555
        %v3631 = vunpack.c.h.b16 %v3555
        %v3632 = vunpack.c.l.b16 %v3556
        %v3633 = vunpack.c.h.b16 %v3556
        %v3634 = vunpack.c.l.b16 %v3557
        %v3635 = vunpack.c.h.b16 %v3557
        %v3636 = vunpack.c.l.b16 %v3558
        %v3637 = vunpack.c.h.b16 %v3558
        %v3638 = vunpack.c.l.b16 %v3559
        %v3639 = vunpack.c.h.b16 %v3559
        %v3640 = vunpack.c.l.b16 %v3560
        %v3641 = vunpack.c.h.b16 %v3560
        %v3642 = vunpack.c.l.b16 %v3561
        %v3643 = vunpack.c.h.b16 %v3561
        %v3644 = vunpack.c.l.b16 %v3562
        %v3645 = vunpack.c.h.b16 %v3562
        %v3646 = vunpack.c.l.b16 %v3563
        %v3647 = vunpack.c.h.b16 %v3563
        %v3648 = vunpack.c.l.b16 %v3564
        %v3649 = vunpack.c.h.b16 %v3564
        %v3650 = vunpack.c.l.b16 %v3565
        %v3651 = vunpack.c.h.b16 %v3565
        %v3652 = vunpack.c.l.b16 %v3566
        %v3653 = vunpack.c.h.b16 %v3566
        %v3654 = vunpack.c.l.b16 %v3567
        %v3655 = vunpack.c.h.b16 %v3567
        %v3656 = vunpack.c.l.b16 %v3568
        %v3657 = vunpack.c.h.b16 %v3568
        %v3658 = vunpack.c.l.b16 %v3569
        %v3659 = vunpack.c.h.b16 %v3569
        %v3660 = vunpack.c.l.b16 %v3570
        %v3661 = vunpack.c.h.b16 %v3570
        %v3662 = vunpack.c.l.b16 %v3571
        %v3663 = vunpack.c.h.b16 %v3571
        %v3664 = vunpack.c.l.b16 %v3572
        %v3665 = vunpack.c.h.b16 %v3572
        %v3666 = vunpack.c.l.b16 %v3573
        %v3667 = vunpack.c.h.b16 %v3573
        %v3668 = vunpack.c.l.b16 %v3574
        %v3669 = vunpack.c.h.b16 %v3574
        %v3670 = vunpack.c.l.b16 %v3575
        %v3671 = vunpack.c.h.b16 %v3575
        %v3672 = vpack.c.b16 %v3612, %v3608
        %v3673 = vpack.c.b16 %v3613, %v3609
        %v3674 = vpack.c.b16 %v3614, %v3610
        %v3675 = vpack.c.b16 %v3615, %v3611
        %v3676 = vpack.c.b16 %v3620, %v3616
        %v3677 = vpack.c.b16 %v3621, %v3617
        %v3678 = vpack.c.b16 %v3622, %v3618
        %v3679 = vpack.c.b16 %v3623, %v3619
        %v3680 = vpack.c.b16 %v3628, %v3624
        %v3681 = vpack.c.b16 %v3629, %v3625
        %v3682 = vpack.c.b16 %v3630, %v3626
        %v3683 = vpack.c.b16 %v3631, %v3627
        %v3684 = vpack.c.b16 %v3636, %v3632
        %v3685 = vpack.c.b16 %v3637, %v3633
        %v3686 = vpack.c.b16 %v3638, %v3634
        %v3687 = vpack.c.b16 %v3639, %v3635
        %v3688 = vpack.c.b16 %v3644, %v3640
        %v3689 = vpack.c.b16 %v3645, %v3641
        %v3690 = vpack.c.b16 %v3646, %v3642
        %v3691 = vpack.c.b16 %v3647, %v3643
        %v3692 = vpack.c.b16 %v3652, %v3648
        %v3693 = vpack.c.b16 %v3653, %v3649
        %v3694 = vpack.c.b16 %v3654, %v3650
        %v3695 = vpack.c.b16 %v3655, %v3651
        %v3696 = vpack.c.b16 %v3660, %v3656
        %v3697 = vpack.c.b16 %v3661, %v3657
        %v3698 = vpack.c.b16 %v3662, %v3658
        %v3699 = vpack.c.b16 %v3663, %v3659
        %v3700 = vpack.c.b16 %v3668, %v3664
        %v3701 = vpack.c.b16 %v3669, %v3665
        %v3702 = vpack.c.b16 %v3670, %v3666
        %v3703 = vpack.c.b16 %v3671, %v3667
        %3736 = vmatprep.subr.bf16.mxu0 %v3701
        %3737 = vmatpush1.bf16.msra.mxu0 %v3700
        %3738 = vmatprep.subr.bf16.mxu0 %v3697
        %3739 = vmatpush1.bf16.msra.mxu0 %v3696
        %3740 = vmatprep.subr.bf16.mxu0 %v3693
        %3741 = vmatpush1.bf16.msra.mxu0 %v3692
        %3742 = vmatprep.subr.bf16.mxu0 %v3689
        %3743 = vmatpush1.bf16.msra.mxu0 %v3688
        %3744 = vmatprep.subr.bf16.mxu0 %v3685
        %3745 = vmatpush1.bf16.msra.mxu0 %v3684
        %3746 = vmatprep.subr.bf16.mxu0 %v3681
        %3747 = vmatpush1.bf16.msra.mxu0 %v3680
        %3748 = vmatprep.subr.bf16.mxu0 %v3677
        %3749 = vmatpush1.bf16.msra.mxu0 %v3676
        %3750 = vmatprep.subr.bf16.mxu0 %v3673
        %3751 = vmatpush1.bf16.msra.mxu0 %v3672
        %3752 = vmatprep.subr.bf16.mxu0 0
        %3753 = vmatpush2.bf16.msra.mxu0 0
        %3754 = vmatprep.subr.bf16.mxu0 0
        %3755 = vmatpush2.bf16.msra.mxu0 0
        %3756 = vmatprep.subr.bf16.mxu0 0
        %3757 = vmatpush2.bf16.msra.mxu0 0
        %3758 = vmatprep.subr.bf16.mxu0 0
        %3759 = vmatpush2.bf16.msra.mxu0 0
        %3760 = vmatprep.subr.bf16.mxu0 0
        %3761 = vmatpush2.bf16.msra.mxu0 0
        %3762 = vmatprep.subr.bf16.mxu0 0
        %3763 = vmatpush2.bf16.msra.mxu0 0
        %3764 = vmatprep.subr.bf16.mxu0 0
        %3765 = vmatpush2.bf16.msra.mxu0 0
        %3766 = vmatprep.subr.bf16.mxu0 0
        %3767 = vmatpush2.bf16.msra.mxu0 0
        %3768 = vmatprep.mubr.bf16.mxu0 0
        %3769 = vmatmul.mubr.bf16.gmra.mxu0 %v3543
        %v3770 = vpop.f32.mrf.mxu0
        %v3771 = vadd.f32 0.0, %v3770
        %v3772 = vpop.f32.mrf.mxu0
        %v3773 = vadd.f32 0.0, %v3772
        %v3774 = vpop.f32.mrf.mxu0
        %v3775 = vpop.f32.mrf.mxu0
        %3776 = vdwg.mxu0
        %3777 = vmatprep.subr.bf16.mxu0 %v3703
        %3778 = vmatpush1.bf16.msra.mxu0 %v3702
        %3779 = vmatprep.subr.bf16.mxu0 %v3699
        %3780 = vmatpush1.bf16.msra.mxu0 %v3698
        %3781 = vmatprep.subr.bf16.mxu0 %v3695
        %3782 = vmatpush1.bf16.msra.mxu0 %v3694
        %3783 = vmatprep.subr.bf16.mxu0 %v3691
        %3784 = vmatpush1.bf16.msra.mxu0 %v3690
        %3785 = vmatprep.subr.bf16.mxu0 %v3687
        %3786 = vmatpush1.bf16.msra.mxu0 %v3686
        %3787 = vmatprep.subr.bf16.mxu0 %v3683
        %3788 = vmatpush1.bf16.msra.mxu0 %v3682
        %3789 = vmatprep.subr.bf16.mxu0 %v3679
        %3790 = vmatpush1.bf16.msra.mxu0 %v3678
        %3791 = vmatprep.subr.bf16.mxu0 %v3675
        %3792 = vmatpush1.bf16.msra.mxu0 %v3674
        %3793 = vmatprep.subr.bf16.mxu0 0
        %3794 = vmatpush2.bf16.msra.mxu0 0
        %3795 = vmatprep.subr.bf16.mxu0 0
        %3796 = vmatpush2.bf16.msra.mxu0 0
        %3797 = vmatprep.subr.bf16.mxu0 0
        %3798 = vmatpush2.bf16.msra.mxu0 0
        %3799 = vmatprep.subr.bf16.mxu0 0
        %3800 = vmatpush2.bf16.msra.mxu0 0
        %3801 = vmatprep.subr.bf16.mxu0 0
        %3802 = vmatpush2.bf16.msra.mxu0 0
        %3803 = vmatprep.subr.bf16.mxu0 0
        %3804 = vmatpush2.bf16.msra.mxu0 0
        %3805 = vmatprep.subr.bf16.mxu0 0
        %3806 = vmatpush2.bf16.msra.mxu0 0
        %3807 = vmatprep.subr.bf16.mxu0 0
        %3808 = vmatpush2.bf16.msra.mxu0 0
        %3809 = vmatprep.mubr.bf16.mxu0 0
        %3810 = vmatmul.mubr.bf16.gmra.mxu0 %v3543
        %v3811 = vpop.f32.mrf.mxu0
        %v3812 = vadd.f32 0.0, %v3811
        %v3813 = vpop.f32.mrf.mxu0
        %v3814 = vadd.f32 0.0, %v3813
        %v3815 = vpop.f32.mrf.mxu0
        %v3816 = vpop.f32.mrf.mxu0
        %3817 = vdwg.mxu0
        %v3822 = vcombine.low %v3771, %v3773
        %v3823 = vcombine.low %v3812, %v3814
        %v3825 = vunpack.c.l.s4 1966171168
        %v3826 = vunpack.c.0.s8 %v3825
        %v3827 = vlaneseq
        %v3828 = vshrl.u32 %v3827, 7
        %v3829 = vsub.s32 %v3826, %v3828
        %v3830 = vrot.slane %v3822, %v3829
        %v3832 = vunpack.c.l.s4 1966171168
        %v3833 = vunpack.c.0.s8 %v3832
        %v3834 = vlaneseq
        %v3835 = vshrl.u32 %v3834, 7
        %v3836 = vsub.s32 %v3833, %v3835
        %v3837 = vrot.slane %v3823, %v3836
        %v3838 = vcombine.low %v3830, %v3837
        %v3840 = vunpack.c.l.s4 1966171168
        %v3841 = vunpack.c.0.s8 %v3840
        %v3842 = vlaneseq
        %v3843 = vshrl.u32 %v3842, 7
        %v3844 = vsub.s32 %v3841, %v3843
        %v3845 = vrot.slane %v3838, %v3844
        %v3847 = vadd.f32 %v3542, %v3845
        %v3848 = vxor.u32 %v3847, 2147483648
        %v3849 = vmul.f32 %v3848, 1.442695
        %v3850 = vpow.pop %v3849
        %v3851 = vadd.f32 %v3850, 1.0
        %v3852 = vrcp.pop %v3851
        %v3853 = vmul.f32 1.0, %v3852
        %v3855 = vrot.slane %v3847, 1
        %v3857 = vxor.u32 %v3855, 2147483648
        %v3858 = vmul.f32 %v3857, 1.442695
        %v3859 = vpow.pop %v3858
        %v3860 = vadd.f32 %v3859, 1.0
        %v3861 = vrcp.pop %v3860
        %v3862 = vmul.f32 1.0, %v3861
        %v3863 = vrot.slane %v3847, 2
        %v3865 = vtanh.pop %v3863
        %v3866 = vrot.slane %v3847, 3
        %v3868 = vxor.u32 %v3866, 2147483648
        %v3869 = vmul.f32 %v3868, 1.442695
        %v3870 = vpow.pop %v3869
        %v3871 = vadd.f32 %v3870, 1.0
        %v3872 = vrcp.pop %v3871
        %v3873 = vmul.f32 1.0, %v3872
        %v3874 = vmul.f32 %v3862, %v3538
        %v3875 = vmul.f32 %v3853, %v3865
        %v3876 = vadd.f32 %v3874, %v3875
        %v3877 = vtanh.pop %v3876
        %v3878 = vmul.f32 %v3873, %v3877
        %3879 = vst [vmem:[#allocation3 + $0x3] sm:$0x1] %v3878
        %v3880 = vld [vmem:[%s421] sm:$0x1]
        %vm3881 = vcmask 24576
        %v3882 = vsel %vm3881, %v3880, 0.0
        %3883 = vadd.xlane.f32.xlu0 %v3882
        %v3884 = vpop.xlane.xlu0 %3883
        %v3885 = vcvt.f32.s32.to.zero.pseudo %v3884
        %v3886 = vsub.s32 %v3885, 1
        %v3887 = vlaneseq
        %v3888 = vand.u32 %v3887, 127
        %vm3889 = vcmp.eq.s32.totalorder %v3888, %v3886
        %v3890 = vsel %vm3889, 1, 0
        %v3891 = vcvt.s32.f32 %v3890
        %v3892 = vmul.f32 %v3891, %v3880
        %v3893 = vld [vmem:[#allocation3] sm:$0xf]
        %v3894 = vlaneseq
        %v3895 = vshrl.u32 %v3894, 7
        %v3896 = vsub.s32 0, %v3895
        %v3897 = vrot.slane %v3892, %v3896
        %3899 = vbcast.lane.b32.xlu0 %v3897, 256
        %v3900 = vpop.permute.xlu0 %3899
        %v3901 = vmul.f32 %v3893, %v3900
        %vm3902 = vcmask 1043456
        %v3903 = vsel %vm3902, %v3901, 0.0
        %v3904 = vrot.slane %v3903, 4
        %v3905 = vadd.f32 %v3903, %v3904
        %v3906 = vrot.slane %v3905, 2
        %v3907 = vadd.f32 %v3905, %v3906
        %v3908 = vrot.slane %v3907, 1
        %v3909 = vadd.f32 %v3907, %v3908
        %v3910 = vpack.c.bf16 %v3909, %v3909
        %v3911 = vld [vmem:[%s10] sm:$0xf]
        %v3912 = vld [vmem:[%s10 + $0x4] sm:$0xf]
        %v3913 = vld [vmem:[%s10 + $0x8] sm:$0xf]
        %v3914 = vld [vmem:[%s10 + $0xc] sm:$0xf]
        %v3915 = vld [vmem:[%s10 + $0x10] sm:$0xf]
        %v3916 = vld [vmem:[%s10 + $0x14] sm:$0xf]
        %v3917 = vld [vmem:[%s10 + $0x18] sm:$0xf]
        %v3918 = vld [vmem:[%s10 + $0x1c] sm:$0xf]
        %v3919 = vld [vmem:[%s10 + $0x20] sm:$0xf]
        %v3920 = vld [vmem:[%s10 + $0x24] sm:$0xf]
        %v3921 = vld [vmem:[%s10 + $0x28] sm:$0xf]
        %v3922 = vld [vmem:[%s10 + $0x2c] sm:$0xf]
        %v3923 = vld [vmem:[%s10 + $0x30] sm:$0xf]
        %v3924 = vld [vmem:[%s10 + $0x34] sm:$0xf]
        %v3925 = vld [vmem:[%s10 + $0x38] sm:$0xf]
        %v3926 = vld [vmem:[%s10 + $0x3c] sm:$0xf]
        %v3927 = vld [vmem:[%s11] sm:$0x1]
        %v3944 = vunpack.c.l.b16 %v3911
        %v3945 = vunpack.c.l.b16 %v3912
        %v3946 = vunpack.c.l.b16 %v3913
        %v3947 = vunpack.c.l.b16 %v3914
        %v3948 = vunpack.c.l.b16 %v3915
        %v3949 = vunpack.c.l.b16 %v3916
        %v3950 = vunpack.c.l.b16 %v3917
        %v3951 = vunpack.c.l.b16 %v3918
        %v3952 = vunpack.c.l.b16 %v3919
        %v3953 = vunpack.c.l.b16 %v3920
        %v3954 = vunpack.c.l.b16 %v3921
        %v3955 = vunpack.c.l.b16 %v3922
        %v3956 = vunpack.c.l.b16 %v3923
        %v3957 = vunpack.c.l.b16 %v3924
        %v3958 = vunpack.c.l.b16 %v3925
        %v3959 = vunpack.c.l.b16 %v3926
        %v3960 = vpack.c.b16 %v3945, %v3944
        %v3961 = vpack.c.b16 %v3947, %v3946
        %v3962 = vpack.c.b16 %v3949, %v3948
        %v3963 = vpack.c.b16 %v3951, %v3950
        %v3964 = vpack.c.b16 %v3953, %v3952
        %v3965 = vpack.c.b16 %v3955, %v3954
        %v3966 = vpack.c.b16 %v3957, %v3956
        %v3967 = vpack.c.b16 %v3959, %v3958
        %3976 = vmatprep.subr.bf16.mxu0 0
        %3977 = vmatpush1.bf16.msra.mxu0 %v3967
        %3978 = vmatprep.subr.bf16.mxu0 0
        %3979 = vmatpush1.bf16.msra.mxu0 %v3966
        %3980 = vmatprep.subr.bf16.mxu0 0
        %3981 = vmatpush1.bf16.msra.mxu0 %v3965
        %3982 = vmatprep.subr.bf16.mxu0 0
        %3983 = vmatpush1.bf16.msra.mxu0 %v3964
        %3984 = vmatprep.subr.bf16.mxu0 0
        %3985 = vmatpush1.bf16.msra.mxu0 %v3963
        %3986 = vmatprep.subr.bf16.mxu0 0
        %3987 = vmatpush1.bf16.msra.mxu0 %v3962
        %3988 = vmatprep.subr.bf16.mxu0 0
        %3989 = vmatpush1.bf16.msra.mxu0 %v3961
        %3990 = vmatprep.subr.bf16.mxu0 0
        %3991 = vmatpush1.bf16.msra.mxu0 %v3960
        %3992 = vmatprep.subr.bf16.mxu0 0
        %3993 = vmatpush2.bf16.msra.mxu0 0
        %3994 = vmatprep.subr.bf16.mxu0 0
        %3995 = vmatpush2.bf16.msra.mxu0 0
        %3996 = vmatprep.subr.bf16.mxu0 0
        %3997 = vmatpush2.bf16.msra.mxu0 0
        %3998 = vmatprep.subr.bf16.mxu0 0
        %3999 = vmatpush2.bf16.msra.mxu0 0
        %4000 = vmatprep.subr.bf16.mxu0 0
        %4001 = vmatpush2.bf16.msra.mxu0 0
        %4002 = vmatprep.subr.bf16.mxu0 0
        %4003 = vmatpush2.bf16.msra.mxu0 0
        %4004 = vmatprep.subr.bf16.mxu0 0
        %4005 = vmatpush2.bf16.msra.mxu0 0
        %4006 = vmatprep.subr.bf16.mxu0 0
        %4007 = vmatpush2.bf16.msra.mxu0 0
        %4008 = vmatprep.mubr.bf16.mxu0 0
        %4009 = vmatmul.mubr.bf16.gmra.mxu0 %v3910
        %v4010 = vpop.f32.mrf.mxu0
        %v4011 = vadd.f32 %v3927, %v4010
        %v4012 = vpop.f32.mrf.mxu0
        %v4013 = vpop.f32.mrf.mxu0
        %v4014 = vpop.f32.mrf.mxu0
        %4015 = vdwg.mxu0
        %v4016 = vxor.u32 %v4011, 2147483648
        %v4017 = vmul.f32 %v4016, 1.442695
        %v4018 = vpow.pop %v4017
        %v4019 = vadd.f32 %v4018, 1.0
        %v4020 = vrcp.pop %v4019
        %v4021 = vmul.f32 1.0, %v4020
        %vm4022 = vcmask 8192
        %4023 = vst.msk [vmem:[%s414] sm:$0x1] %vm4022, %v4021
        %s4024 = sand.u32 %s296, 1
        %s4025 = scalar_lea.sflag [#allocation5], %s4024
        %s4026 = sand.u32 %s296, 1
        %s4027 = scalar_lea.vmem [#allocation4], %s4026
        // Predicated region
        $region69: #{sentiment_cnn_lstm_forward.1} parent=67 // pred_check
          %p4028 = pneg %p306
        $region70: #{sentiment_cnn_lstm_forward.1} parent=67 // pred_check_branch
          %4030 = sbr.rel (%p4028) target = $region72
        $region71: #{sentiment_cnn_lstm_forward.1} parent=67 // pred_region
          %s4032 = ssub.s32 16, 16
          %4033 = vsyncadd %s4025, %s4032
          %s4034 = smul.addr %s26, 16
          %s4035 = scalar_lea.hbm %s12, %s4034
          %s4037 = sshll.u32 %s4027, 4
          %s4038 = int_to_ptr.vmem [resolvable:$true] %s4037
          %4040 = dma.vmem_to_hbm [thread:$0]  %s4038, 16, %s4035, %s4025
        $region72: #{sentiment_cnn_lstm_forward.1} parent=67 // pred_fallthru
          _
      $region68: #{sentiment_cnn_lstm_forward.1} parent=5 // pred_fallthru
        _
      %p4041 = scmp.le.s32.totalorder 2, %s21
      // Predicated region
      $region73: #{sentiment_cnn_lstm_forward.1} parent=5 // pred_check
        %p4042 = pneg %p4041
      $region74: #{sentiment_cnn_lstm_forward.1} parent=5 // pred_check_branch
        %4044 = sbr.rel (%p4042) target = $region76
      $region75: #{sentiment_cnn_lstm_forward.1} parent=5 // pred_region
        %s4045 = ssub.s32 %s21, 2
        // Predicated region
        $region77: #{sentiment_cnn_lstm_forward.1} parent=75 // pred_check
          %p4046 = pneg %p312
        $region78: #{sentiment_cnn_lstm_forward.1} parent=75 // pred_check_branch
          %4048 = sbr.rel (%p4046) target = $region80
        $region79: #{sentiment_cnn_lstm_forward.1} parent=75 // pred_region
          %s4049 = sand.u32 %s297, 1
          %s4050 = scalar_lea.sflag [#allocation5], %s4049
          %s4051 = sand.u32 %s297, 1
          %s4052 = scalar_lea.vmem [#allocation4], %s4051
          %4053 = dma.done %s4050, 16
        $region80: #{sentiment_cnn_lstm_forward.1} parent=75 // pred_fallthru
          _
      $region76: #{sentiment_cnn_lstm_forward.1} parent=5 // pred_fallthru
        _
    $region6: #{sentiment_cnn_lstm_forward.1} parent=1 // loop_footer
      %s25 = sadd.s32 1, %s21
    $region7: #{sentiment_cnn_lstm_forward.1} parent=1 // loop_footer_branch
      %20 = sbr.rel target = $region3
    $region8: #{sentiment_cnn_lstm_forward.1} parent=1 // loop_exit
      _
    %4054 = vsyncpa [#allocation5], 1
    %s4055 = scalar_lea.sflag [#allocation5], 1
    %4056 = vsyncpa %s4055, 1

</llo_original>
